<compile_context>
chip_gen: v6e
topology: v6e:2x2x1
jax: 0.10.0
libtpu: 0.0.40
codegen_flags: <defaults>
</compile_context>

<pallas_src>
import functools

import jax
import jax.numpy as jnp
from jax.experimental import pallas as pl
from jax.experimental.pallas import tpu as pltpu

EPS = 1e-5          # nn.GroupNorm default
EXPANSION = 4
_PAD_COL0 = 8       # column offset of the conv2 interior inside the VMEM pad scratch
                    # (multiple of 8 -> sublane-aligned stores; tap reads may be unaligned)


# ---------------------------------------------------------------------------
# In-kernel helpers (operate on VMEM-resident values)
# ---------------------------------------------------------------------------

def _instance_norm(y, gamma, beta, relu):
    """GroupNorm(C, C) == per-(sample, channel) norm over the spatial axis.

    y: (rows, C) f32 value; gamma/beta: (1, C) f32. Single-pass statistics.
    """
    inv_n = 1.0 / y.shape[0]
    s1 = jnp.sum(y, axis=0, keepdims=True)
    s2 = jnp.sum(y * y, axis=0, keepdims=True)
    mean = s1 * inv_n
    var = s2 * inv_n - mean * mean
    out = (y - mean) * jax.lax.rsqrt(var + EPS) * gamma + beta
    return jnp.maximum(out, 0.0) if relu else out


def _subsample_matrix(Ho, Wo, H, W, stride):
    """(Ho*Wo, H*W) 0/1 matrix picking strided spatial positions (exact pick)."""
    o = jax.lax.broadcasted_iota(jnp.int32, (Ho * Wo, H * W), 0)
    r = jax.lax.broadcasted_iota(jnp.int32, (Ho * Wo, H * W), 1)
    target = (o // Wo) * (stride * W) + (o % Wo) * stride
    return (r == target).astype(jnp.float32)


# ---------------------------------------------------------------------------
# Fused bottleneck kernel: one grid step == one sample, everything in VMEM
# ---------------------------------------------------------------------------

def _bottleneck_kernel(*refs, stride, has_shortcut, mxu_dtype):
    if has_shortcut:
        (x_ref, w1_ref, g1_ref, b1_ref, w2_ref, g2_ref, b2_ref,
         w3_ref, g3_ref, b3_ref, ws_ref, gs_ref, bs_ref,
         o_ref, pad_ref, col_ref) = refs
    else:
        (x_ref, w1_ref, g1_ref, b1_ref, w2_ref, g2_ref, b2_ref,
         w3_ref, g3_ref, b3_ref, o_ref, pad_ref, col_ref) = refs
        ws_ref = gs_ref = bs_ref = None

    _, H, W, Cin = x_ref.shape
    P = w1_ref.shape[1]
    C3 = w3_ref.shape[1]
    _, Ho, Wo, _ = o_ref.shape
    f32 = jnp.float32

    x2d = x_ref[0].reshape(H * W, Cin)                                   # (H*W, Cin) f32

    # ---- conv1 (1x1) + IN + ReLU (epilogue-fused) -------------------------
    y1 = jnp.dot(x2d.astype(mxu_dtype), w1_ref[...],
                 preferred_element_type=f32)                             # (H*W, P)
    y1 = _instance_norm(y1, g1_ref[...], b1_ref[...], relu=True)

    # ---- conv2 (3x3, padding=1) + IN + ReLU --------------------------------
    # Zero padding lives in a VMEM scratch; interior written at a sublane-aligned
    # column offset so the store is unmasked, tap reads are cheap unaligned loads.
    # The 9 taps are packed into an im2col slab (H*W, 9*P) so the whole 3x3 conv
    # is ONE MXU dot with contraction K = 9*P.
    pad_ref[...] = jnp.zeros_like(pad_ref)
    pad_ref[1:H + 1, _PAD_COL0:_PAD_COL0 + W, :] = (
        y1.reshape(H, W, P).astype(pad_ref.dtype))

    for kh in range(3):
        for kw in range(3):
            j = kh * 3 + kw
            c0 = _PAD_COL0 - 1 + kw
            patch = pad_ref[kh:kh + H, c0:c0 + W, :]                     # (H, W, P)
            col_ref[:, j * P:(j + 1) * P] = patch.reshape(H * W, P)

    acc2 = jnp.dot(col_ref[...], w2_ref[...],
                   preferred_element_type=f32)                           # (H*W, P)

    if stride == 1:
        acc2_s, x_s = acc2, x2d
    else:
        # Strided conv == stride-1 conv subsampled at the output. The subsample is
        # one exact 0/1-matrix matmul on the VMEM-resident accumulator (no HBM
        # writeback of discarded positions, no strided HBM gather).
        # TODO(synk): for large spatial sizes, switch to strided reads of pad_ref
        # to also avoid the extra stride-1 conv FLOPs.
        sel = _subsample_matrix(Ho, Wo, H, W, stride)                    # (Ho*Wo, H*W)
        acc2_s = jnp.dot(sel, acc2, preferred_element_type=f32)
        x_s = jnp.dot(sel, x2d, preferred_element_type=f32)
    y2 = _instance_norm(acc2_s, g2_ref[...], b2_ref[...], relu=True)     # (Ho*Wo, P)

    # ---- conv3 (1x1) + IN ---------------------------------------------------
    y3 = jnp.dot(y2.astype(mxu_dtype), w3_ref[...],
                 preferred_element_type=f32)                             # (Ho*Wo, C3)
    y3 = _instance_norm(y3, g3_ref[...], b3_ref[...], relu=False)

    # ---- shortcut + residual add + ReLU (all fused) --------------------------
    if has_shortcut:
        sc = jnp.dot(x_s.astype(mxu_dtype), ws_ref[...],
                     preferred_element_type=f32)                         # (Ho*Wo, C3)
        sc = _instance_norm(sc, gs_ref[...], bs_ref[...], relu=False)
    else:
        sc = x_s                                   # identity (Cin == C3, stride == 1)

    out = jnp.maximum(y3 + sc, 0.0)
    o_ref[0] = out.reshape(Ho, Wo, C3).astype(o_ref.dtype)


# ---------------------------------------------------------------------------
# Wrappers
# ---------------------------------------------------------------------------

def _vec2(v):
    return jnp.asarray(v, jnp.float32).reshape(1, -1)


def bottleneck_forward_nhwc(x_nhwc, params, stride=1, mxu_dtype=jnp.float32):
    """Fused bottleneck forward on NHWC input: one pallas_call, grid over batch."""
    N, H, W, Cin = x_nhwc.shape
    P = params["w1"].shape[1]
    C3 = params["w3"].shape[1]
    Ho = (H - 1) // stride + 1                    # conv3x3 k=3 pad=1 / 1x1 stride conv
    Wo = (W - 1) // stride + 1
    has_shortcut = "ws" in params

    x_nhwc = x_nhwc.astype(jnp.float32)

    # conv2 weight passed as a 2D (9*P, P) matrix matching the im2col channel order.
    w2_2d = jnp.asarray(params["w2"], mxu_dtype).reshape(9 * P, P)

    inputs = [
        x_nhwc,
        jnp.asarray(params["w1"], mxu_dtype), _vec2(params["g1"]), _vec2(params["b1"]),
        w2_2d, _vec2(params["g2"]), _vec2(params["b2"]),
        jnp.asarray(params["w3"], mxu_dtype), _vec2(params["g3"]), _vec2(params["b3"]),
    ]
    in_specs = [
        pl.BlockSpec((1, H, W, Cin), lambda n: (n, 0, 0, 0)),
        pl.BlockSpec((Cin, P), lambda n: (0, 0)),
        pl.BlockSpec((1, P), lambda n: (0, 0)),
        pl.BlockSpec((1, P), lambda n: (0, 0)),
        pl.BlockSpec((9 * P, P), lambda n: (0, 0)),
        pl.BlockSpec((1, P), lambda n: (0, 0)),
        pl.BlockSpec((1, P), lambda n: (0, 0)),
        pl.BlockSpec((P, C3), lambda n: (0, 0)),
        pl.BlockSpec((1, C3), lambda n: (0, 0)),
        pl.BlockSpec((1, C3), lambda n: (0, 0)),
    ]
    if has_shortcut:
        inputs += [jnp.asarray(params["ws"], mxu_dtype),
                   _vec2(params["gs"]), _vec2(params["bs"])]
        in_specs += [pl.BlockSpec((Cin, C3), lambda n: (0, 0)),
                     pl.BlockSpec((1, C3), lambda n: (0, 0)),
                     pl.BlockSpec((1, C3), lambda n: (0, 0))]

    # Explicit VMEM budget: double-buffered in/out blocks + weights + scratches
    # + slack, clamped below v7x's 64 MiB physical VMEM.
    itemsize = jnp.dtype(mxu_dtype).itemsize
    block_bytes = 4 * (H * W * Cin + Ho * Wo * C3) * 2
    weight_bytes = sum(int(a.size) * 4 for a in inputs[1:]) * 2
    scratch_bytes = itemsize * ((H + 2) * (W + 16) * P + H * W * 9 * P)
    vmem_limit = int(min(max(4 * (block_bytes + weight_bytes + scratch_bytes)
                             + (8 << 20), 16 << 20), 48 << 20))

    kernel = functools.partial(_bottleneck_kernel, stride=stride,
                               has_shortcut=has_shortcut, mxu_dtype=mxu_dtype)
    return pl.pallas_call(
        kernel,
        out_shape=jax.ShapeDtypeStruct((N, Ho, Wo, C3), jnp.float32),
        grid=(N,),
        in_specs=in_specs,
        out_specs=pl.BlockSpec((1, Ho, Wo, C3), lambda n: (n, 0, 0, 0)),
        scratch_shapes=[pltpu.VMEM((H + 2, W + 16, P), mxu_dtype),     # zero-pad slab
                        pltpu.VMEM((H * W, 9 * P), mxu_dtype)],        # im2col slab
        compiler_params=pltpu.CompilerParams(
            dimension_semantics=("parallel",),        # batch axis -> both TCs on v7x
            vmem_limit_bytes=vmem_limit),
    )(*inputs)


def bottleneck_forward(x_nchw, params, stride=1, mxu_dtype=jnp.float32):
    # Thin NCHW adapter for parity with the PyTorch module. In a full network keep
    # activations NHWC end-to-end (bottleneck_forward_nhwc) to avoid per-block
    # relayout passes.
    x = jnp.transpose(x_nchw, (0, 2, 3, 1))
    out = bottleneck_forward_nhwc(x, params, stride, mxu_dtype)
    return jnp.transpose(out, (0, 3, 1, 2))


# ---------------------------------------------------------------------------
# Parameters + pure-JAX reference (verification only)
# ---------------------------------------------------------------------------

def init_bottleneck_params(key, in_planes, planes, stride=1):
    out_planes = EXPANSION * planes
    ks = jax.random.split(key, 8)
    p = {
        "w1": 0.1 * jax.random.normal(ks[0], (in_planes, planes), jnp.float32),
        "g1": 1.0 + 0.1 * jax.random.normal(ks[4], (planes,), jnp.float32),
        "b1": 0.1 * jax.random.normal(ks[5], (planes,), jnp.float32),
        # conv2 weight stored as (kh*3+kw, Cin, Cout)
        "w2": 0.1 * jax.random.normal(ks[1], (9, planes, planes), jnp.float32),
        "g2": jnp.ones((planes,), jnp.float32),
        "b2": jnp.zeros((planes,), jnp.float32),
        "w3": 0.1 * jax.random.normal(ks[2], (planes, out_planes), jnp.float32),
        "g3": jnp.ones((out_planes,), jnp.float32),
        "b3": jnp.zeros((out_planes,), jnp.float32),
    }
    if stride != 1 or in_planes != out_planes:
        p["ws"] = 0.1 * jax.random.normal(ks[3], (in_planes, out_planes), jnp.float32)
        p["gs"] = 1.0 + 0.1 * jax.random.normal(ks[6], (out_planes,), jnp.float32)
        p["bs"] = 0.1 * jax.random.normal(ks[7], (out_planes,), jnp.float32)
    return p


_HI = jax.lax.Precision.HIGHEST


def _ref_inorm(x, g, b, relu=False):
    mean = x.mean(axis=(1, 2), keepdims=True)
    var = ((x - mean) ** 2).mean(axis=(1, 2), keepdims=True)
    y = (x - mean) * jax.lax.rsqrt(var + EPS) * g + b
    return jnp.maximum(y, 0.0) if relu else y


def _ref_conv3x3(x, w9, stride):
    N, H, W, C = x.shape
    xp = jnp.pad(x, ((0, 0), (1, 1), (1, 1), (0, 0)))
    out = 0.0
    for kh in range(3):
        for kw in range(3):
            out = out + jnp.einsum("nhwc,co->nhwo",
                                   xp[:, kh:kh + H, kw:kw + W, :], w9[kh * 3 + kw],
                                   precision=_HI)
    return out[:, ::stride, ::stride, :]


def bottleneck_reference(x_nchw, p, stride=1):
    x = jnp.transpose(x_nchw, (0, 2, 3, 1))
    o = _ref_inorm(jnp.einsum("nhwc,co->nhwo", x, p["w1"], precision=_HI),
                   p["g1"], p["b1"], relu=True)
    o = _ref_inorm(_ref_conv3x3(o, p["w2"], stride), p["g2"], p["b2"], relu=True)
    o = _ref_inorm(jnp.einsum("nhwc,co->nhwo", o, p["w3"], precision=_HI),
                   p["g3"], p["b3"], relu=False)
    if "ws" in p:
        xs = x[:, ::stride, ::stride, :]
        s = _ref_inorm(jnp.einsum("nhwc,co->nhwo", xs, p["ws"], precision=_HI),
                       p["gs"], p["bs"], relu=False)
    else:
        s = x[:, ::stride, ::stride, :]
    return jnp.transpose(jnp.maximum(o + s, 0.0), (0, 3, 1, 2))


# ---------------------------------------------------------------------------

if __name__ == "__main__":
    key = jax.random.PRNGKey(0)
    k_x1, k_p1, k_x2, k_p2, k_p3 = jax.random.split(key, 5)

    # --- Config A: spec shapes (N=2, in=4, planes=4, 16x16, stride=1), conv shortcut.
    N, in_planes, planes, H, W, stride = 2, 4, 4, 16, 16, 1
    x = jax.random.normal(k_x1, (N, in_planes, H, W), jnp.float32)   # NCHW like PyTorch
    params = init_bottleneck_params(k_p1, in_planes, planes, stride)

    out = jax.block_until_ready(bottleneck_forward(x, params, stride))
    ref = jax.block_until_ready(bottleneck_reference(x, params, stride))
    assert out.shape == (N, EXPANSION * planes, H, W), out.shape
    err = float(jnp.max(jnp.abs(out - ref)))
    assert err < 5e-4, err

    # --- Config A, bf16 MXU operands (v6e/v7x path), f32 accumulate + f32 norm math.
    out_bf16 = jax.block_until_ready(
        bottleneck_forward(x, params, stride, mxu_dtype=jnp.bfloat16))
    err_bf16 = float(jnp.max(jnp.abs(out_bf16 - ref)))
    assert err_bf16 < 0.25, err_bf16

    # --- Config B: stride=2 downsampling block (conv shortcut), stride handled in-kernel.
    x2 = jax.random.normal(k_x2, (2, 16, H, W), jnp.float32)
    params2 = init_bottleneck_params(k_p2, 16, 4, stride=2)
    out2 = jax.block_until_ready(bottleneck_forward(x2, params2, stride=2))
    ref2 = jax.block_until_ready(bottleneck_reference(x2, params2, stride=2))
    assert out2.shape == (2, 16, H // 2, W // 2), out2.shape
    err2 = float(jnp.max(jnp.abs(out2 - ref2)))
    assert err2 < 5e-4, err2

    # --- Config C: identity shortcut (stride=1, in_planes == expansion * planes).
    params3 = init_bottleneck_params(k_p3, 16, 4, stride=1)
    assert "ws" not in params3
    out3 = jax.block_until_ready(bottleneck_forward(x2, params3, stride=1))
    ref3 = jax.block_until_ready(bottleneck_reference(x2, params3, stride=1))
    err3 = float(jnp.max(jnp.abs(out3 - ref3)))
    assert err3 < 5e-4, err3

    print("KERNEL_OK")
</pallas_src>

<mosaic_0001>
module attributes {stable_mosaic.version = 11 : i64} {
  func.func @_bottleneck_kernel(%arg0: i32, %arg1: memref<1x16x16x4xf32, #tpu.memory_space<vmem>>, %arg2: memref<4x4xf32, #tpu.memory_space<vmem>>, %arg3: memref<1x4xf32, #tpu.memory_space<vmem>>, %arg4: memref<1x4xf32, #tpu.memory_space<vmem>>, %arg5: memref<36x4xf32, #tpu.memory_space<vmem>>, %arg6: memref<1x4xf32, #tpu.memory_space<vmem>>, %arg7: memref<1x4xf32, #tpu.memory_space<vmem>>, %arg8: memref<4x16xf32, #tpu.memory_space<vmem>>, %arg9: memref<1x16xf32, #tpu.memory_space<vmem>>, %arg10: memref<1x16xf32, #tpu.memory_space<vmem>>, %arg11: memref<4x16xf32, #tpu.memory_space<vmem>>, %arg12: memref<1x16xf32, #tpu.memory_space<vmem>>, %arg13: memref<1x16xf32, #tpu.memory_space<vmem>>, %arg14: memref<1x16x16x16xf32, #tpu.memory_space<vmem>>, %arg15: memref<18x32x4xf32, #tpu.memory_space<vmem>>, %arg16: memref<256x36xf32, #tpu.memory_space<vmem>>) attributes {dimension_semantics = [#tpu.dimension_semantics<parallel>], iteration_bounds = array<i64: 2>, scalar_prefetch = 0 : i64, scratch_operands = 2 : i64, tpu.core_type = #tpu.core_type<tc>, window_params = [{transform_indices = @transform_0, window_bounds = array<i64: 1, 16, 16, 4>}, {pipeline_mode = #tpu.pipeline_mode<synchronous>, transform_indices = @transform_1, window_bounds = array<i64: 4, 4>}, {pipeline_mode = #tpu.pipeline_mode<synchronous>, transform_indices = @transform_2, window_bounds = array<i64: 1, 4>}, {pipeline_mode = #tpu.pipeline_mode<synchronous>, transform_indices = @transform_3, window_bounds = array<i64: 1, 4>}, {pipeline_mode = #tpu.pipeline_mode<synchronous>, transform_indices = @transform_4, window_bounds = array<i64: 36, 4>}, {pipeline_mode = #tpu.pipeline_mode<synchronous>, transform_indices = @transform_5, window_bounds = array<i64: 1, 4>}, {pipeline_mode = #tpu.pipeline_mode<synchronous>, transform_indices = @transform_6, window_bounds = array<i64: 1, 4>}, {pipeline_mode = #tpu.pipeline_mode<synchronous>, transform_indices = @transform_7, window_bounds = array<i64: 4, 16>}, {pipeline_mode = #tpu.pipeline_mode<synchronous>, transform_indices = @transform_8, window_bounds = array<i64: 1, 16>}, {pipeline_mode = #tpu.pipeline_mode<synchronous>, transform_indices = @transform_9, window_bounds = array<i64: 1, 16>}, {pipeline_mode = #tpu.pipeline_mode<synchronous>, transform_indices = @transform_10, window_bounds = array<i64: 4, 16>}, {pipeline_mode = #tpu.pipeline_mode<synchronous>, transform_indices = @transform_11, window_bounds = array<i64: 1, 16>}, {pipeline_mode = #tpu.pipeline_mode<synchronous>, transform_indices = @transform_12, window_bounds = array<i64: 1, 16>}, {transform_indices = @transform_13, window_bounds = array<i64: 1, 16, 16, 16>}]} {
    %c0 = arith.constant 0 : index
    %c0_0 = arith.constant 0 : index
    %c0_1 = arith.constant 0 : index
    %c0_2 = arith.constant 0 : index
    %0 = vector.load %arg1[%c0, %c0_0, %c0_1, %c0_2] : memref<1x16x16x4xf32, #tpu.memory_space<vmem>>, vector<1x16x16x4xf32>
    %1 = vector.shape_cast %0 : vector<1x16x16x4xf32> to vector<16x16x4xf32>
    %2 = vector.shape_cast %1 : vector<16x16x4xf32> to vector<256x4xf32>
    %c0_3 = arith.constant 0 : index
    %c0_4 = arith.constant 0 : index
    %3 = vector.load %arg2[%c0_3, %c0_4] : memref<4x4xf32, #tpu.memory_space<vmem>>, vector<4x4xf32>
    %cst = arith.constant dense<0.000000e+00> : vector<256x4xf32>
    %4 = tpu.matmul %2, %3, %cst {dimension_numbers = #tpu.dot_dimension_numbers<[1], [0], [0], [1], [0, 0, 1, 1], [], []>} : vector<256x4xf32>, vector<4x4xf32>, vector<256x4xf32> -> vector<256x4xf32>
    %c0_5 = arith.constant 0 : index
    %c0_6 = arith.constant 0 : index
    %5 = vector.load %arg3[%c0_5, %c0_6] : memref<1x4xf32, #tpu.memory_space<vmem>>, vector<1x4xf32>
    %c0_7 = arith.constant 0 : index
    %c0_8 = arith.constant 0 : index
    %6 = vector.load %arg4[%c0_7, %c0_8] : memref<1x4xf32, #tpu.memory_space<vmem>>, vector<1x4xf32>
    %cst_9 = arith.constant dense<0.000000e+00> : vector<4xf32>
    %7 = vector.multi_reduction <add>, %4, %cst_9 [0] : vector<256x4xf32> to vector<4xf32>
    %8 = vector.shape_cast %7 : vector<4xf32> to vector<1x4xf32>
    %9 = arith.mulf %4, %4 : vector<256x4xf32>
    %cst_10 = arith.constant dense<0.000000e+00> : vector<4xf32>
    %10 = vector.multi_reduction <add>, %9, %cst_10 [0] : vector<256x4xf32> to vector<4xf32>
    %11 = vector.shape_cast %10 : vector<4xf32> to vector<1x4xf32>
    %cst_11 = arith.constant 3.906250e-03 : f32
    %12 = vector.broadcast %cst_11 : f32 to vector<1x4xf32>
    %13 = arith.mulf %8, %12 : vector<1x4xf32>
    %cst_12 = arith.constant 3.906250e-03 : f32
    %14 = vector.broadcast %cst_12 : f32 to vector<1x4xf32>
    %15 = arith.mulf %11, %14 : vector<1x4xf32>
    %16 = arith.mulf %13, %13 : vector<1x4xf32>
    %17 = arith.subf %15, %16 : vector<1x4xf32>
    %18 = vector.broadcast %13 : vector<1x4xf32> to vector<256x4xf32>
    %19 = arith.subf %4, %18 : vector<256x4xf32>
    %cst_13 = arith.constant 9.99999974E-6 : f32
    %20 = vector.broadcast %cst_13 : f32 to vector<1x4xf32>
    %21 = arith.addf %17, %20 : vector<1x4xf32>
    %22 = math.rsqrt %21 : vector<1x4xf32>
    %23 = vector.broadcast %22 : vector<1x4xf32> to vector<256x4xf32>
    %24 = arith.mulf %19, %23 : vector<256x4xf32>
    %25 = vector.broadcast %5 : vector<1x4xf32> to vector<256x4xf32>
    %26 = arith.mulf %24, %25 : vector<256x4xf32>
    %27 = vector.broadcast %6 : vector<1x4xf32> to vector<256x4xf32>
    %28 = arith.addf %26, %27 : vector<256x4xf32>
    %cst_14 = arith.constant 0.000000e+00 : f32
    %29 = vector.broadcast %cst_14 : f32 to vector<256x4xf32>
    %30 = arith.maximumf %28, %29 : vector<256x4xf32>
    %cst_15 = arith.constant 0.000000e+00 : f32
    %31 = vector.broadcast %cst_15 : f32 to vector<18x32x4xf32>
    %c0_16 = arith.constant 0 : index
    %c0_17 = arith.constant 0 : index
    %c0_18 = arith.constant 0 : index
    %32 = vector.load %arg15[%c0_16, %c0_17, %c0_18] : memref<18x32x4xf32, #tpu.memory_space<vmem>>, vector<18x32x4xf32>
    tpu.vector_store %arg15[%c0_16, %c0_17, %c0_18], %31 {strides = array<i32>} : memref<18x32x4xf32, #tpu.memory_space<vmem>>, vector<18x32x4xf32>,
    %33 = vector.shape_cast %30 : vector<256x4xf32> to vector<16x16x4xf32>
    %c1 = arith.constant 1 : index
    %c8 = arith.constant 8 : index
    %c0_19 = arith.constant 0 : index
    %34 = vector.load %arg15[%c1, %c8, %c0_19] : memref<18x32x4xf32, #tpu.memory_space<vmem>>, vector<16x16x4xf32>
    tpu.vector_store %arg15[%c1, %c8, %c0_19], %33 {strides = array<i32>} : memref<18x32x4xf32, #tpu.memory_space<vmem>>, vector<16x16x4xf32>,
    %c0_20 = arith.constant 0 : index
    %c7 = arith.constant 7 : index
    %c0_21 = arith.constant 0 : index
    %35 = vector.load %arg15[%c0_20, %c7, %c0_21] : memref<18x32x4xf32, #tpu.memory_space<vmem>>, vector<16x16x4xf32>
    %36 = vector.shape_cast %35 : vector<16x16x4xf32> to vector<256x4xf32>
    %c0_22 = arith.constant 0 : index
    %c0_23 = arith.constant 0 : index
    %37 = vector.load %arg16[%c0_22, %c0_23] : memref<256x36xf32, #tpu.memory_space<vmem>>, vector<256x4xf32>
    tpu.vector_store %arg16[%c0_22, %c0_23], %36 {strides = array<i32>} : memref<256x36xf32, #tpu.memory_space<vmem>>, vector<256x4xf32>,
    %c0_24 = arith.constant 0 : index
    %c8_25 = arith.constant 8 : index
    %c0_26 = arith.constant 0 : index
    %38 = vector.load %arg15[%c0_24, %c8_25, %c0_26] : memref<18x32x4xf32, #tpu.memory_space<vmem>>, vector<16x16x4xf32>
    %39 = vector.shape_cast %38 : vector<16x16x4xf32> to vector<256x4xf32>
    %c0_27 = arith.constant 0 : index
    %c4 = arith.constant 4 : index
    %40 = vector.load %arg16[%c0_27, %c4] : memref<256x36xf32, #tpu.memory_space<vmem>>, vector<256x4xf32>
    tpu.vector_store %arg16[%c0_27, %c4], %39 {strides = array<i32>} : memref<256x36xf32, #tpu.memory_space<vmem>>, vector<256x4xf32>,
    %c0_28 = arith.constant 0 : index
    %c9 = arith.constant 9 : index
    %c0_29 = arith.constant 0 : index
    %41 = vector.load %arg15[%c0_28, %c9, %c0_29] : memref<18x32x4xf32, #tpu.memory_space<vmem>>, vector<16x16x4xf32>
    %42 = vector.shape_cast %41 : vector<16x16x4xf32> to vector<256x4xf32>
    %c0_30 = arith.constant 0 : index
    %c8_31 = arith.constant 8 : index
    %43 = vector.load %arg16[%c0_30, %c8_31] : memref<256x36xf32, #tpu.memory_space<vmem>>, vector<256x4xf32>
    tpu.vector_store %arg16[%c0_30, %c8_31], %42 {strides = array<i32>} : memref<256x36xf32, #tpu.memory_space<vmem>>, vector<256x4xf32>,
    %c1_32 = arith.constant 1 : index
    %c7_33 = arith.constant 7 : index
    %c0_34 = arith.constant 0 : index
    %44 = vector.load %arg15[%c1_32, %c7_33, %c0_34] : memref<18x32x4xf32, #tpu.memory_space<vmem>>, vector<16x16x4xf32>
    %45 = vector.shape_cast %44 : vector<16x16x4xf32> to vector<256x4xf32>
    %c0_35 = arith.constant 0 : index
    %c12 = arith.constant 12 : index
    %46 = vector.load %arg16[%c0_35, %c12] : memref<256x36xf32, #tpu.memory_space<vmem>>, vector<256x4xf32>
    tpu.vector_store %arg16[%c0_35, %c12], %45 {strides = array<i32>} : memref<256x36xf32, #tpu.memory_space<vmem>>, vector<256x4xf32>,
    %c1_36 = arith.constant 1 : index
    %c8_37 = arith.constant 8 : index
    %c0_38 = arith.constant 0 : index
    %47 = vector.load %arg15[%c1_36, %c8_37, %c0_38] : memref<18x32x4xf32, #tpu.memory_space<vmem>>, vector<16x16x4xf32>
    %48 = vector.shape_cast %47 : vector<16x16x4xf32> to vector<256x4xf32>
    %c0_39 = arith.constant 0 : index
    %c16 = arith.constant 16 : index
    %49 = vector.load %arg16[%c0_39, %c16] : memref<256x36xf32, #tpu.memory_space<vmem>>, vector<256x4xf32>
    tpu.vector_store %arg16[%c0_39, %c16], %48 {strides = array<i32>} : memref<256x36xf32, #tpu.memory_space<vmem>>, vector<256x4xf32>,
    %c1_40 = arith.constant 1 : index
    %c9_41 = arith.constant 9 : index
    %c0_42 = arith.constant 0 : index
    %50 = vector.load %arg15[%c1_40, %c9_41, %c0_42] : memref<18x32x4xf32, #tpu.memory_space<vmem>>, vector<16x16x4xf32>
    %51 = vector.shape_cast %50 : vector<16x16x4xf32> to vector<256x4xf32>
    %c0_43 = arith.constant 0 : index
    %c20 = arith.constant 20 : index
    %52 = vector.load %arg16[%c0_43, %c20] : memref<256x36xf32, #tpu.memory_space<vmem>>, vector<256x4xf32>
    tpu.vector_store %arg16[%c0_43, %c20], %51 {strides = array<i32>} : memref<256x36xf32, #tpu.memory_space<vmem>>, vector<256x4xf32>,
    %c2 = arith.constant 2 : index
    %c7_44 = arith.constant 7 : index
    %c0_45 = arith.constant 0 : index
    %53 = vector.load %arg15[%c2, %c7_44, %c0_45] : memref<18x32x4xf32, #tpu.memory_space<vmem>>, vector<16x16x4xf32>
    %54 = vector.shape_cast %53 : vector<16x16x4xf32> to vector<256x4xf32>
    %c0_46 = arith.constant 0 : index
    %c24 = arith.constant 24 : index
    %55 = vector.load %arg16[%c0_46, %c24] : memref<256x36xf32, #tpu.memory_space<vmem>>, vector<256x4xf32>
    tpu.vector_store %arg16[%c0_46, %c24], %54 {strides = array<i32>} : memref<256x36xf32, #tpu.memory_space<vmem>>, vector<256x4xf32>,
    %c2_47 = arith.constant 2 : index
    %c8_48 = arith.constant 8 : index
    %c0_49 = arith.constant 0 : index
    %56 = vector.load %arg15[%c2_47, %c8_48, %c0_49] : memref<18x32x4xf32, #tpu.memory_space<vmem>>, vector<16x16x4xf32>
    %57 = vector.shape_cast %56 : vector<16x16x4xf32> to vector<256x4xf32>
    %c0_50 = arith.constant 0 : index
    %c28 = arith.constant 28 : index
    %58 = vector.load %arg16[%c0_50, %c28] : memref<256x36xf32, #tpu.memory_space<vmem>>, vector<256x4xf32>
    tpu.vector_store %arg16[%c0_50, %c28], %57 {strides = array<i32>} : memref<256x36xf32, #tpu.memory_space<vmem>>, vector<256x4xf32>,
    %c2_51 = arith.constant 2 : index
    %c9_52 = arith.constant 9 : index
    %c0_53 = arith.constant 0 : index
    %59 = vector.load %arg15[%c2_51, %c9_52, %c0_53] : memref<18x32x4xf32, #tpu.memory_space<vmem>>, vector<16x16x4xf32>
    %60 = vector.shape_cast %59 : vector<16x16x4xf32> to vector<256x4xf32>
    %c0_54 = arith.constant 0 : index
    %c32 = arith.constant 32 : index
    %61 = vector.load %arg16[%c0_54, %c32] : memref<256x36xf32, #tpu.memory_space<vmem>>, vector<256x4xf32>
    tpu.vector_store %arg16[%c0_54, %c32], %60 {strides = array<i32>} : memref<256x36xf32, #tpu.memory_space<vmem>>, vector<256x4xf32>,
    %c0_55 = arith.constant 0 : index
    %c0_56 = arith.constant 0 : index
    %62 = vector.load %arg16[%c0_55, %c0_56] : memref<256x36xf32, #tpu.memory_space<vmem>>, vector<256x36xf32>
    %c0_57 = arith.constant 0 : index
    %c0_58 = arith.constant 0 : index
    %63 = vector.load %arg5[%c0_57, %c0_58] : memref<36x4xf32, #tpu.memory_space<vmem>>, vector<36x4xf32>
    %cst_59 = arith.constant dense<0.000000e+00> : vector<256x4xf32>
    %64 = tpu.matmul %62, %63, %cst_59 {dimension_numbers = #tpu.dot_dimension_numbers<[1], [0], [0], [1], [0, 0, 1, 1], [], []>} : vector<256x36xf32>, vector<36x4xf32>, vector<256x4xf32> -> vector<256x4xf32>
    %c0_60 = arith.constant 0 : index
    %c0_61 = arith.constant 0 : index
    %65 = vector.load %arg6[%c0_60, %c0_61] : memref<1x4xf32, #tpu.memory_space<vmem>>, vector<1x4xf32>
    %c0_62 = arith.constant 0 : index
    %c0_63 = arith.constant 0 : index
    %66 = vector.load %arg7[%c0_62, %c0_63] : memref<1x4xf32, #tpu.memory_space<vmem>>, vector<1x4xf32>
    %cst_64 = arith.constant dense<0.000000e+00> : vector<4xf32>
    %67 = vector.multi_reduction <add>, %64, %cst_64 [0] : vector<256x4xf32> to vector<4xf32>
    %68 = vector.shape_cast %67 : vector<4xf32> to vector<1x4xf32>
    %69 = arith.mulf %64, %64 : vector<256x4xf32>
    %cst_65 = arith.constant dense<0.000000e+00> : vector<4xf32>
    %70 = vector.multi_reduction <add>, %69, %cst_65 [0] : vector<256x4xf32> to vector<4xf32>
    %71 = vector.shape_cast %70 : vector<4xf32> to vector<1x4xf32>
    %cst_66 = arith.constant 3.906250e-03 : f32
    %72 = vector.broadcast %cst_66 : f32 to vector<1x4xf32>
    %73 = arith.mulf %68, %72 : vector<1x4xf32>
    %cst_67 = arith.constant 3.906250e-03 : f32
    %74 = vector.broadcast %cst_67 : f32 to vector<1x4xf32>
    %75 = arith.mulf %71, %74 : vector<1x4xf32>
    %76 = arith.mulf %73, %73 : vector<1x4xf32>
    %77 = arith.subf %75, %76 : vector<1x4xf32>
    %78 = vector.broadcast %73 : vector<1x4xf32> to vector<256x4xf32>
    %79 = arith.subf %64, %78 : vector<256x4xf32>
    %cst_68 = arith.constant 9.99999974E-6 : f32
    %80 = vector.broadcast %cst_68 : f32 to vector<1x4xf32>
    %81 = arith.addf %77, %80 : vector<1x4xf32>
    %82 = math.rsqrt %81 : vector<1x4xf32>
    %83 = vector.broadcast %82 : vector<1x4xf32> to vector<256x4xf32>
    %84 = arith.mulf %79, %83 : vector<256x4xf32>
    %85 = vector.broadcast %65 : vector<1x4xf32> to vector<256x4xf32>
    %86 = arith.mulf %84, %85 : vector<256x4xf32>
    %87 = vector.broadcast %66 : vector<1x4xf32> to vector<256x4xf32>
    %88 = arith.addf %86, %87 : vector<256x4xf32>
    %cst_69 = arith.constant 0.000000e+00 : f32
    %89 = vector.broadcast %cst_69 : f32 to vector<256x4xf32>
    %90 = arith.maximumf %88, %89 : vector<256x4xf32>
    %c0_70 = arith.constant 0 : index
    %c0_71 = arith.constant 0 : index
    %91 = vector.load %arg8[%c0_70, %c0_71] : memref<4x16xf32, #tpu.memory_space<vmem>>, vector<4x16xf32>
    %cst_72 = arith.constant dense<0.000000e+00> : vector<256x16xf32>
    %92 = tpu.matmul %90, %91, %cst_72 {dimension_numbers = #tpu.dot_dimension_numbers<[1], [0], [0], [1], [0, 0, 1, 1], [], []>} : vector<256x4xf32>, vector<4x16xf32>, vector<256x16xf32> -> vector<256x16xf32>
    %c0_73 = arith.constant 0 : index
    %c0_74 = arith.constant 0 : index
    %93 = vector.load %arg9[%c0_73, %c0_74] : memref<1x16xf32, #tpu.memory_space<vmem>>, vector<1x16xf32>
    %c0_75 = arith.constant 0 : index
    %c0_76 = arith.constant 0 : index
    %94 = vector.load %arg10[%c0_75, %c0_76] : memref<1x16xf32, #tpu.memory_space<vmem>>, vector<1x16xf32>
    %cst_77 = arith.constant dense<0.000000e+00> : vector<16xf32>
    %95 = vector.multi_reduction <add>, %92, %cst_77 [0] : vector<256x16xf32> to vector<16xf32>
    %96 = vector.shape_cast %95 : vector<16xf32> to vector<1x16xf32>
    %97 = arith.mulf %92, %92 : vector<256x16xf32>
    %cst_78 = arith.constant dense<0.000000e+00> : vector<16xf32>
    %98 = vector.multi_reduction <add>, %97, %cst_78 [0] : vector<256x16xf32> to vector<16xf32>
    %99 = vector.shape_cast %98 : vector<16xf32> to vector<1x16xf32>
    %cst_79 = arith.constant 3.906250e-03 : f32
    %100 = vector.broadcast %cst_79 : f32 to vector<1x16xf32>
    %101 = arith.mulf %96, %100 : vector<1x16xf32>
    %cst_80 = arith.constant 3.906250e-03 : f32
    %102 = vector.broadcast %cst_80 : f32 to vector<1x16xf32>
    %103 = arith.mulf %99, %102 : vector<1x16xf32>
    %104 = arith.mulf %101, %101 : vector<1x16xf32>
    %105 = arith.subf %103, %104 : vector<1x16xf32>
    %106 = vector.broadcast %101 : vector<1x16xf32> to vector<256x16xf32>
    %107 = arith.subf %92, %106 : vector<256x16xf32>
    %cst_81 = arith.constant 9.99999974E-6 : f32
    %108 = vector.broadcast %cst_81 : f32 to vector<1x16xf32>
    %109 = arith.addf %105, %108 : vector<1x16xf32>
    %110 = math.rsqrt %109 : vector<1x16xf32>
    %111 = vector.broadcast %110 : vector<1x16xf32> to vector<256x16xf32>
    %112 = arith.mulf %107, %111 : vector<256x16xf32>
    %113 = vector.broadcast %93 : vector<1x16xf32> to vector<256x16xf32>
    %114 = arith.mulf %112, %113 : vector<256x16xf32>
    %115 = vector.broadcast %94 : vector<1x16xf32> to vector<256x16xf32>
    %116 = arith.addf %114, %115 : vector<256x16xf32>
    %c0_82 = arith.constant 0 : index
    %c0_83 = arith.constant 0 : index
    %117 = vector.load %arg11[%c0_82, %c0_83] : memref<4x16xf32, #tpu.memory_space<vmem>>, vector<4x16xf32>
    %cst_84 = arith.constant dense<0.000000e+00> : vector<256x16xf32>
    %118 = tpu.matmul %2, %117, %cst_84 {dimension_numbers = #tpu.dot_dimension_numbers<[1], [0], [0], [1], [0, 0, 1, 1], [], []>} : vector<256x4xf32>, vector<4x16xf32>, vector<256x16xf32> -> vector<256x16xf32>
    %c0_85 = arith.constant 0 : index
    %c0_86 = arith.constant 0 : index
    %119 = vector.load %arg12[%c0_85, %c0_86] : memref<1x16xf32, #tpu.memory_space<vmem>>, vector<1x16xf32>
    %c0_87 = arith.constant 0 : index
    %c0_88 = arith.constant 0 : index
    %120 = vector.load %arg13[%c0_87, %c0_88] : memref<1x16xf32, #tpu.memory_space<vmem>>, vector<1x16xf32>
    %cst_89 = arith.constant dense<0.000000e+00> : vector<16xf32>
    %121 = vector.multi_reduction <add>, %118, %cst_89 [0] : vector<256x16xf32> to vector<16xf32>
    %122 = vector.shape_cast %121 : vector<16xf32> to vector<1x16xf32>
    %123 = arith.mulf %118, %118 : vector<256x16xf32>
    %cst_90 = arith.constant dense<0.000000e+00> : vector<16xf32>
    %124 = vector.multi_reduction <add>, %123, %cst_90 [0] : vector<256x16xf32> to vector<16xf32>
    %125 = vector.shape_cast %124 : vector<16xf32> to vector<1x16xf32>
    %cst_91 = arith.constant 3.906250e-03 : f32
    %126 = vector.broadcast %cst_91 : f32 to vector<1x16xf32>
    %127 = arith.mulf %122, %126 : vector<1x16xf32>
    %cst_92 = arith.constant 3.906250e-03 : f32
    %128 = vector.broadcast %cst_92 : f32 to vector<1x16xf32>
    %129 = arith.mulf %125, %128 : vector<1x16xf32>
    %130 = arith.mulf %127, %127 : vector<1x16xf32>
    %131 = arith.subf %129, %130 : vector<1x16xf32>
    %132 = vector.broadcast %127 : vector<1x16xf32> to vector<256x16xf32>
    %133 = arith.subf %118, %132 : vector<256x16xf32>
    %cst_93 = arith.constant 9.99999974E-6 : f32
    %134 = vector.broadcast %cst_93 : f32 to vector<1x16xf32>
    %135 = arith.addf %131, %134 : vector<1x16xf32>
    %136 = math.rsqrt %135 : vector<1x16xf32>
    %137 = vector.broadcast %136 : vector<1x16xf32> to vector<256x16xf32>
    %138 = arith.mulf %133, %137 : vector<256x16xf32>
    %139 = vector.broadcast %119 : vector<1x16xf32> to vector<256x16xf32>
    %140 = arith.mulf %138, %139 : vector<256x16xf32>
    %141 = vector.broadcast %120 : vector<1x16xf32> to vector<256x16xf32>
    %142 = arith.addf %140, %141 : vector<256x16xf32>
    %143 = arith.addf %116, %142 : vector<256x16xf32>
    %cst_94 = arith.constant 0.000000e+00 : f32
    %144 = vector.broadcast %cst_94 : f32 to vector<256x16xf32>
    %145 = arith.maximumf %143, %144 : vector<256x16xf32>
    %146 = vector.shape_cast %145 : vector<256x16xf32> to vector<16x16x16xf32>
    %c0_95 = arith.constant 0 : index
    %c0_96 = arith.constant 0 : index
    %c0_97 = arith.constant 0 : index
    %c0_98 = arith.constant 0 : index
    %147 = vector.load %arg14[%c0_95, %c0_96, %c0_97, %c0_98] : memref<1x16x16x16xf32, #tpu.memory_space<vmem>>, vector<1x16x16x16xf32>
    %148 = vector.shape_cast %147 : vector<1x16x16x16xf32> to vector<16x16x16xf32>
    %149 = vector.shape_cast %146 : vector<16x16x16xf32> to vector<1x16x16x16xf32>
    tpu.vector_store %arg14[%c0_95, %c0_96, %c0_97, %c0_98], %149 {strides = array<i32>} : memref<1x16x16x16xf32, #tpu.memory_space<vmem>>, vector<1x16x16x16xf32>,
    return
  }
  func.func @transform_0(%arg0: i32) -> (i32, i32, i32, i32) {
    %c0_i32 = arith.constant 0 : i32
    %c0_i32_0 = arith.constant 0 : i32
    %c0_i32_1 = arith.constant 0 : i32
    %c0_i32_2 = arith.constant 0 : i32
    return %arg0, %c0_i32, %c0_i32_0, %c0_i32_1 : i32, i32, i32, i32
  }
  func.func @transform_1(%arg0: i32) -> (i32, i32) {
    %c0_i32 = arith.constant 0 : i32
    %c0_i32_0 = arith.constant 0 : i32
    %c0_i32_1 = arith.constant 0 : i32
    return %c0_i32, %c0_i32_0 : i32, i32
  }
  func.func @transform_2(%arg0: i32) -> (i32, i32) {
    %c0_i32 = arith.constant 0 : i32
    %c0_i32_0 = arith.constant 0 : i32
    %c0_i32_1 = arith.constant 0 : i32
    return %c0_i32, %c0_i32_0 : i32, i32
  }
  func.func @transform_3(%arg0: i32) -> (i32, i32) {
    %c0_i32 = arith.constant 0 : i32
    %c0_i32_0 = arith.constant 0 : i32
    %c0_i32_1 = arith.constant 0 : i32
    return %c0_i32, %c0_i32_0 : i32, i32
  }
  func.func @transform_4(%arg0: i32) -> (i32, i32) {
    %c0_i32 = arith.constant 0 : i32
    %c0_i32_0 = arith.constant 0 : i32
    %c0_i32_1 = arith.constant 0 : i32
    return %c0_i32, %c0_i32_0 : i32, i32
  }
  func.func @transform_5(%arg0: i32) -> (i32, i32) {
    %c0_i32 = arith.constant 0 : i32
    %c0_i32_0 = arith.constant 0 : i32
    %c0_i32_1 = arith.constant 0 : i32
    return %c0_i32, %c0_i32_0 : i32, i32
  }
  func.func @transform_6(%arg0: i32) -> (i32, i32) {
    %c0_i32 = arith.constant 0 : i32
    %c0_i32_0 = arith.constant 0 : i32
    %c0_i32_1 = arith.constant 0 : i32
    return %c0_i32, %c0_i32_0 : i32, i32
  }
  func.func @transform_7(%arg0: i32) -> (i32, i32) {
    %c0_i32 = arith.constant 0 : i32
    %c0_i32_0 = arith.constant 0 : i32
    %c0_i32_1 = arith.constant 0 : i32
    return %c0_i32, %c0_i32_0 : i32, i32
  }
  func.func @transform_8(%arg0: i32) -> (i32, i32) {
    %c0_i32 = arith.constant 0 : i32
    %c0_i32_0 = arith.constant 0 : i32
    %c0_i32_1 = arith.constant 0 : i32
    return %c0_i32, %c0_i32_0 : i32, i32
  }
  func.func @transform_9(%arg0: i32) -> (i32, i32) {
    %c0_i32 = arith.constant 0 : i32
    %c0_i32_0 = arith.constant 0 : i32
    %c0_i32_1 = arith.constant 0 : i32
    return %c0_i32, %c0_i32_0 : i32, i32
  }
  func.func @transform_10(%arg0: i32) -> (i32, i32) {
    %c0_i32 = arith.constant 0 : i32
    %c0_i32_0 = arith.constant 0 : i32
    %c0_i32_1 = arith.constant 0 : i32
    return %c0_i32, %c0_i32_0 : i32, i32
  }
  func.func @transform_11(%arg0: i32) -> (i32, i32) {
    %c0_i32 = arith.constant 0 : i32
    %c0_i32_0 = arith.constant 0 : i32
    %c0_i32_1 = arith.constant 0 : i32
    return %c0_i32, %c0_i32_0 : i32, i32
  }
  func.func @transform_12(%arg0: i32) -> (i32, i32) {
    %c0_i32 = arith.constant 0 : i32
    %c0_i32_0 = arith.constant 0 : i32
    %c0_i32_1 = arith.constant 0 : i32
    return %c0_i32, %c0_i32_0 : i32, i32
  }
  func.func @transform_13(%arg0: i32) -> (i32, i32, i32, i32) {
    %c0_i32 = arith.constant 0 : i32
    %c0_i32_0 = arith.constant 0 : i32
    %c0_i32_1 = arith.constant 0 : i32
    %c0_i32_2 = arith.constant 0 : i32
    return %arg0, %c0_i32, %c0_i32_0, %c0_i32_1 : i32, i32, i32, i32
  }
}

</mosaic_0001>

<llo_original>
// kernel: tpu_custom_call.1
$region0: #{tpu_custom_call.1}
  #allocation0 [shape = 'u32[]', space=smem, size = 0x4, offset = 0x4, fixed_abs, tag = 'smem constant byte address 0x4 - core index']
  #allocation1 [shape = 'u32[144,128]{1,0:T(1,128)}', space=vmem, size = 0x12000, scoped, tag = 'internal scratch']
  #allocation2 [shape = 'f32[18,32,4]{2,1,0:T(8,128)}', space=vmem, size = 0x48000, scoped, tag = 'scratch operand']
  #allocation3 [shape = 'f32[256,36]{1,0:T(8,128)}', space=vmem, size = 0x20000, scoped, tag = 'scratch operand']
  %s0 = inlined_call_operand.vmem [shape: f32[2,16,16,4], index: 0, kind: input, shape index: {}]
  %s1 = inlined_call_operand.vmem [shape: f32[4,4], index: 1, kind: input, shape index: {}]
  %s2 = inlined_call_operand.vmem [shape: f32[1,4], index: 2, kind: input, shape index: {}]
  %s3 = inlined_call_operand.vmem [shape: f32[1,4], index: 3, kind: input, shape index: {}]
  %s4 = inlined_call_operand.vmem [shape: f32[36,4], index: 4, kind: input, shape index: {}]
  %s5 = inlined_call_operand.vmem [shape: f32[1,4], index: 5, kind: input, shape index: {}]
  %s6 = inlined_call_operand.vmem [shape: f32[1,4], index: 6, kind: input, shape index: {}]
  %s7 = inlined_call_operand.vmem [shape: f32[4,16], index: 7, kind: input, shape index: {}]
  %s8 = inlined_call_operand.vmem [shape: f32[1,16], index: 8, kind: input, shape index: {}]
  %s9 = inlined_call_operand.vmem [shape: f32[1,16], index: 9, kind: input, shape index: {}]
  %s10 = inlined_call_operand.vmem [shape: f32[4,16], index: 10, kind: input, shape index: {}]
  %s11 = inlined_call_operand.vmem [shape: f32[1,16], index: 11, kind: input, shape index: {}]
  %s12 = inlined_call_operand.vmem [shape: f32[1,16], index: 12, kind: input, shape index: {}]
  %s13 = inlined_call_operand.hbm [shape: f32[2,16,16,16], index: 13, kind: output, shape index: {}]
  %s14 = sld [smem:[#allocation0]]
  $region85: #{tpu_custom_call.1} parent=0
    _
  %s16 = ssub.s32 1, %s14
  %s17 = scalar_select 0, %s16, %s14
  $region1: #{tpu_custom_call.1} parent=0
    #allocation4 [shape = 'u8[262144]{0}', space=vmem, size = 0x40000, scoped, tag = 'output window, operand 0']
    #allocation5 [shape = 's32[2]{0}', space=sflag, size = 0x8, scoped, tag = 'scoped memory for tpu_custom_call.1']
    %18 = vsyncpa [#allocation5], 0
    %s19 = scalar_lea.sflag [#allocation5], 1
    %20 = vsyncpa %s19, 0
    loop: start=0, step=1, limit=4
    $region2: #{tpu_custom_call.1} parent=1 // loop_pre_header
      _
    $region3: #{tpu_custom_call.1} parent=1 // loop_header
      %s22 = sphi 0, %s26
      %p23 = scmp.ge.s32.totalorder %s22, 4
      %s32 = sphi 0, %s34
      %s35 = sphi 0, %s32
      %s36 = sphi 0, %s35
      %s52 = sphi 0, %s36
      %s56 = sphi 0, %s56
      %s58 = sphi 0, %s56
      %s59 = sphi 0, %s58
      %s73 = sphi 0, %s59
      %s77 = sphi 0, %s77
      %s79 = sphi 0, %s77
      %s80 = sphi 0, %s79
      %s94 = sphi 0, %s80
      %s98 = sphi 0, %s98
      %s100 = sphi 0, %s98
      %s101 = sphi 0, %s100
      %s115 = sphi 0, %s101
      %s119 = sphi 0, %s119
      %s121 = sphi 0, %s119
      %s122 = sphi 0, %s121
      %s136 = sphi 0, %s122
      %s140 = sphi 0, %s140
      %s142 = sphi 0, %s140
      %s143 = sphi 0, %s142
      %s157 = sphi 0, %s143
      %s161 = sphi 0, %s161
      %s163 = sphi 0, %s161
      %s164 = sphi 0, %s163
      %s178 = sphi 0, %s164
      %s182 = sphi 0, %s182
      %s184 = sphi 0, %s182
      %s185 = sphi 0, %s184
      %s199 = sphi 0, %s185
      %s203 = sphi 0, %s203
      %s205 = sphi 0, %s203
      %s206 = sphi 0, %s205
      %s220 = sphi 0, %s206
      %s224 = sphi 0, %s224
      %s226 = sphi 0, %s224
      %s227 = sphi 0, %s226
      %s241 = sphi 0, %s227
      %s245 = sphi 0, %s245
      %s247 = sphi 0, %s245
      %s248 = sphi 0, %s247
      %s262 = sphi 0, %s248
      %s266 = sphi 0, %s266
      %s268 = sphi 0, %s266
      %s269 = sphi 0, %s268
      %s283 = sphi 0, %s269
      %s287 = sphi 0, %s287
      %s289 = sphi 0, %s287
      %s290 = sphi 0, %s289
      %s304 = sphi 0, %s290
      %s310 = sphi 0, %s312
      %s313 = sphi 0, %s310
      %s314 = sphi 0, %s313
      %s330 = sphi 0, %s314
    $region4: #{tpu_custom_call.1} parent=1 // loop_header_branch
      %25 = sbr.rel (%p23) target = $region8
    $region5: #{tpu_custom_call.1} parent=1 // loop_body
      %s27 = ssub.s32 %s22, 1
      %s28 = ssub.s32 %s22, 2
      %s29 = sadd.s32 %s22, 1
      %s30 = ssub.s32 %s22, %s29
      %p31 = scmp.eq.s32.totalorder %s30, 0
      %s33 = sadd.s32 %s32, 1
      %s34 = scalar_select %p31, %s32, %s33
      %p37 = pneg %p31
      %p38 = scmp.eq.s32.totalorder %s22, 1
      %p39 = por %p37, %p38
      %p40 = scmp.ne.s32.totalorder %s32, %s35
      %p41 = scmp.eq.s32.totalorder %s22, 0
      %p42 = por %p40, %p41
      %p43 = scmp.ne.s32.totalorder %s32, %s35
      %p44 = scmp.eq.s32.totalorder %s27, 1
      %p45 = por %p43, %p44
      %p46 = scmp.ne.s32.totalorder %s35, %s36
      %p47 = scmp.eq.s32.totalorder %s27, 0
      %p48 = por %p46, %p47
      %p49 = scmp.ne.s32.totalorder %s35, %s36
      %p50 = scmp.eq.s32.totalorder %s28, 1
      %p51 = por %p49, %p50
      %p53 = scmp.ne.s32.totalorder %s36, %s52
      %p54 = scmp.eq.s32.totalorder %s28, 0
      %p55 = por %p53, %p54
      %s57 = sadd.s32 %s56, 1
      %p60 = scmp.eq.s32.totalorder %s22, 1
      %p61 = scmp.ne.s32.totalorder %s56, %s58
      %p62 = scmp.eq.s32.totalorder %s22, 0
      %p63 = por %p61, %p62
      %p64 = scmp.ne.s32.totalorder %s56, %s58
      %p65 = scmp.eq.s32.totalorder %s27, 1
      %p66 = por %p64, %p65
      %p67 = scmp.ne.s32.totalorder %s58, %s59
      %p68 = scmp.eq.s32.totalorder %s27, 0
      %p69 = por %p67, %p68
      %p70 = scmp.ne.s32.totalorder %s58, %s59
      %p71 = scmp.eq.s32.totalorder %s28, 1
      %p72 = por %p70, %p71
      %p74 = scmp.ne.s32.totalorder %s59, %s73
      %p75 = scmp.eq.s32.totalorder %s28, 0
      %p76 = por %p74, %p75
      %s78 = sadd.s32 %s77, 1
      %p81 = scmp.eq.s32.totalorder %s22, 1
      %p82 = scmp.ne.s32.totalorder %s77, %s79
      %p83 = scmp.eq.s32.totalorder %s22, 0
      %p84 = por %p82, %p83
      %p85 = scmp.ne.s32.totalorder %s77, %s79
      %p86 = scmp.eq.s32.totalorder %s27, 1
      %p87 = por %p85, %p86
      %p88 = scmp.ne.s32.totalorder %s79, %s80
      %p89 = scmp.eq.s32.totalorder %s27, 0
      %p90 = por %p88, %p89
      %p91 = scmp.ne.s32.totalorder %s79, %s80
      %p92 = scmp.eq.s32.totalorder %s28, 1
      %p93 = por %p91, %p92
      %p95 = scmp.ne.s32.totalorder %s80, %s94
      %p96 = scmp.eq.s32.totalorder %s28, 0
      %p97 = por %p95, %p96
      %s99 = sadd.s32 %s98, 1
      %p102 = scmp.eq.s32.totalorder %s22, 1
      %p103 = scmp.ne.s32.totalorder %s98, %s100
      %p104 = scmp.eq.s32.totalorder %s22, 0
      %p105 = por %p103, %p104
      %p106 = scmp.ne.s32.totalorder %s98, %s100
      %p107 = scmp.eq.s32.totalorder %s27, 1
      %p108 = por %p106, %p107
      %p109 = scmp.ne.s32.totalorder %s100, %s101
      %p110 = scmp.eq.s32.totalorder %s27, 0
      %p111 = por %p109, %p110
      %p112 = scmp.ne.s32.totalorder %s100, %s101
      %p113 = scmp.eq.s32.totalorder %s28, 1
      %p114 = por %p112, %p113
      %p116 = scmp.ne.s32.totalorder %s101, %s115
      %p117 = scmp.eq.s32.totalorder %s28, 0
      %p118 = por %p116, %p117
      %s120 = sadd.s32 %s119, 1
      %p123 = scmp.eq.s32.totalorder %s22, 1
      %p124 = scmp.ne.s32.totalorder %s119, %s121
      %p125 = scmp.eq.s32.totalorder %s22, 0
      %p126 = por %p124, %p125
      %p127 = scmp.ne.s32.totalorder %s119, %s121
      %p128 = scmp.eq.s32.totalorder %s27, 1
      %p129 = por %p127, %p128
      %p130 = scmp.ne.s32.totalorder %s121, %s122
      %p131 = scmp.eq.s32.totalorder %s27, 0
      %p132 = por %p130, %p131
      %p133 = scmp.ne.s32.totalorder %s121, %s122
      %p134 = scmp.eq.s32.totalorder %s28, 1
      %p135 = por %p133, %p134
      %p137 = scmp.ne.s32.totalorder %s122, %s136
      %p138 = scmp.eq.s32.totalorder %s28, 0
      %p139 = por %p137, %p138
      %s141 = sadd.s32 %s140, 1
      %p144 = scmp.eq.s32.totalorder %s22, 1
      %p145 = scmp.ne.s32.totalorder %s140, %s142
      %p146 = scmp.eq.s32.totalorder %s22, 0
      %p147 = por %p145, %p146
      %p148 = scmp.ne.s32.totalorder %s140, %s142
      %p149 = scmp.eq.s32.totalorder %s27, 1
      %p150 = por %p148, %p149
      %p151 = scmp.ne.s32.totalorder %s142, %s143
      %p152 = scmp.eq.s32.totalorder %s27, 0
      %p153 = por %p151, %p152
      %p154 = scmp.ne.s32.totalorder %s142, %s143
      %p155 = scmp.eq.s32.totalorder %s28, 1
      %p156 = por %p154, %p155
      %p158 = scmp.ne.s32.totalorder %s143, %s157
      %p159 = scmp.eq.s32.totalorder %s28, 0
      %p160 = por %p158, %p159
      %s162 = sadd.s32 %s161, 1
      %p165 = scmp.eq.s32.totalorder %s22, 1
      %p166 = scmp.ne.s32.totalorder %s161, %s163
      %p167 = scmp.eq.s32.totalorder %s22, 0
      %p168 = por %p166, %p167
      %p169 = scmp.ne.s32.totalorder %s161, %s163
      %p170 = scmp.eq.s32.totalorder %s27, 1
      %p171 = por %p169, %p170
      %p172 = scmp.ne.s32.totalorder %s163, %s164
      %p173 = scmp.eq.s32.totalorder %s27, 0
      %p174 = por %p172, %p173
      %p175 = scmp.ne.s32.totalorder %s163, %s164
      %p176 = scmp.eq.s32.totalorder %s28, 1
      %p177 = por %p175, %p176
      %p179 = scmp.ne.s32.totalorder %s164, %s178
      %p180 = scmp.eq.s32.totalorder %s28, 0
      %p181 = por %p179, %p180
      %s183 = sadd.s32 %s182, 1
      %p186 = scmp.eq.s32.totalorder %s22, 1
      %p187 = scmp.ne.s32.totalorder %s182, %s184
      %p188 = scmp.eq.s32.totalorder %s22, 0
      %p189 = por %p187, %p188
      %p190 = scmp.ne.s32.totalorder %s182, %s184
      %p191 = scmp.eq.s32.totalorder %s27, 1
      %p192 = por %p190, %p191
      %p193 = scmp.ne.s32.totalorder %s184, %s185
      %p194 = scmp.eq.s32.totalorder %s27, 0
      %p195 = por %p193, %p194
      %p196 = scmp.ne.s32.totalorder %s184, %s185
      %p197 = scmp.eq.s32.totalorder %s28, 1
      %p198 = por %p196, %p197
      %p200 = scmp.ne.s32.totalorder %s185, %s199
      %p201 = scmp.eq.s32.totalorder %s28, 0
      %p202 = por %p200, %p201
      %s204 = sadd.s32 %s203, 1
      %p207 = scmp.eq.s32.totalorder %s22, 1
      %p208 = scmp.ne.s32.totalorder %s203, %s205
      %p209 = scmp.eq.s32.totalorder %s22, 0
      %p210 = por %p208, %p209
      %p211 = scmp.ne.s32.totalorder %s203, %s205
      %p212 = scmp.eq.s32.totalorder %s27, 1
      %p213 = por %p211, %p212
      %p214 = scmp.ne.s32.totalorder %s205, %s206
      %p215 = scmp.eq.s32.totalorder %s27, 0
      %p216 = por %p214, %p215
      %p217 = scmp.ne.s32.totalorder %s205, %s206
      %p218 = scmp.eq.s32.totalorder %s28, 1
      %p219 = por %p217, %p218
      %p221 = scmp.ne.s32.totalorder %s206, %s220
      %p222 = scmp.eq.s32.totalorder %s28, 0
      %p223 = por %p221, %p222
      %s225 = sadd.s32 %s224, 1
      %p228 = scmp.eq.s32.totalorder %s22, 1
      %p229 = scmp.ne.s32.totalorder %s224, %s226
      %p230 = scmp.eq.s32.totalorder %s22, 0
      %p231 = por %p229, %p230
      %p232 = scmp.ne.s32.totalorder %s224, %s226
      %p233 = scmp.eq.s32.totalorder %s27, 1
      %p234 = por %p232, %p233
      %p235 = scmp.ne.s32.totalorder %s226, %s227
      %p236 = scmp.eq.s32.totalorder %s27, 0
      %p237 = por %p235, %p236
      %p238 = scmp.ne.s32.totalorder %s226, %s227
      %p239 = scmp.eq.s32.totalorder %s28, 1
      %p240 = por %p238, %p239
      %p242 = scmp.ne.s32.totalorder %s227, %s241
      %p243 = scmp.eq.s32.totalorder %s28, 0
      %p244 = por %p242, %p243
      %s246 = sadd.s32 %s245, 1
      %p249 = scmp.eq.s32.totalorder %s22, 1
      %p250 = scmp.ne.s32.totalorder %s245, %s247
      %p251 = scmp.eq.s32.totalorder %s22, 0
      %p252 = por %p250, %p251
      %p253 = scmp.ne.s32.totalorder %s245, %s247
      %p254 = scmp.eq.s32.totalorder %s27, 1
      %p255 = por %p253, %p254
      %p256 = scmp.ne.s32.totalorder %s247, %s248
      %p257 = scmp.eq.s32.totalorder %s27, 0
      %p258 = por %p256, %p257
      %p259 = scmp.ne.s32.totalorder %s247, %s248
      %p260 = scmp.eq.s32.totalorder %s28, 1
      %p261 = por %p259, %p260
      %p263 = scmp.ne.s32.totalorder %s248, %s262
      %p264 = scmp.eq.s32.totalorder %s28, 0
      %p265 = por %p263, %p264
      %s267 = sadd.s32 %s266, 1
      %p270 = scmp.eq.s32.totalorder %s22, 1
      %p271 = scmp.ne.s32.totalorder %s266, %s268
      %p272 = scmp.eq.s32.totalorder %s22, 0
      %p273 = por %p271, %p272
      %p274 = scmp.ne.s32.totalorder %s266, %s268
      %p275 = scmp.eq.s32.totalorder %s27, 1
      %p276 = por %p274, %p275
      %p277 = scmp.ne.s32.totalorder %s268, %s269
      %p278 = scmp.eq.s32.totalorder %s27, 0
      %p279 = por %p277, %p278
      %p280 = scmp.ne.s32.totalorder %s268, %s269
      %p281 = scmp.eq.s32.totalorder %s28, 1
      %p282 = por %p280, %p281
      %p284 = scmp.ne.s32.totalorder %s269, %s283
      %p285 = scmp.eq.s32.totalorder %s28, 0
      %p286 = por %p284, %p285
      %s288 = sadd.s32 %s287, 1
      %p291 = scmp.eq.s32.totalorder %s22, 1
      %p292 = scmp.ne.s32.totalorder %s287, %s289
      %p293 = scmp.eq.s32.totalorder %s22, 0
      %p294 = por %p292, %p293
      %p295 = scmp.ne.s32.totalorder %s287, %s289
      %p296 = scmp.eq.s32.totalorder %s27, 1
      %p297 = por %p295, %p296
      %p298 = scmp.ne.s32.totalorder %s289, %s290
      %p299 = scmp.eq.s32.totalorder %s27, 0
      %p300 = por %p298, %p299
      %p301 = scmp.ne.s32.totalorder %s289, %s290
      %p302 = scmp.eq.s32.totalorder %s28, 1
      %p303 = por %p301, %p302
      %p305 = scmp.ne.s32.totalorder %s290, %s304
      %p306 = scmp.eq.s32.totalorder %s28, 0
      %p307 = por %p305, %p306
      %s308 = ssub.s32 %s22, %s29
      %p309 = scmp.eq.s32.totalorder %s308, 0
      %s311 = sadd.s32 %s310, 1
      %s312 = scalar_select %p309, %s310, %s311
      %p315 = pneg %p309
      %p316 = scmp.eq.s32.totalorder %s22, 1
      %p317 = por %p315, %p316
      %p318 = scmp.ne.s32.totalorder %s310, %s313
      %p319 = scmp.eq.s32.totalorder %s22, 0
      %p320 = por %p318, %p319
      %p321 = scmp.ne.s32.totalorder %s310, %s313
      %p322 = scmp.eq.s32.totalorder %s27, 1
      %p323 = por %p321, %p322
      %p324 = scmp.ne.s32.totalorder %s313, %s314
      %p325 = scmp.eq.s32.totalorder %s27, 0
      %p326 = por %p324, %p325
      %p327 = scmp.ne.s32.totalorder %s313, %s314
      %p328 = scmp.eq.s32.totalorder %s28, 1
      %p329 = por %p327, %p328
      %p331 = scmp.ne.s32.totalorder %s314, %s330
      %p332 = scmp.eq.s32.totalorder %s28, 0
      %p333 = por %p331, %p332
      %p334 = scmp.le.s32.totalorder 1, %s22
      %p335 = scmp.lt.s32.totalorder %s22, 3
      %p336 = pnand %p334, %p335
      %p337 = pneg %p336
      // Predicated region
      $region9: #{tpu_custom_call.1} parent=5 // pred_check
        _
      $region10: #{tpu_custom_call.1} parent=5 // pred_check_branch
        %339 = sbr.rel (%p336) target = $region12
      $region11: #{tpu_custom_call.1} parent=5 // pred_region
        %s340 = ssub.s32 %s22, 1
        // Predicated region
        $region13: #{tpu_custom_call.1} parent=11 // pred_check
          %p341 = pneg %p69
        $region14: #{tpu_custom_call.1} parent=11 // pred_check_branch
          %343 = sbr.rel (%p341) target = $region16
        $region15: #{tpu_custom_call.1} parent=11 // pred_region
          _
        $region16: #{tpu_custom_call.1} parent=11 // pred_fallthru
          _
        // Predicated region
        $region17: #{tpu_custom_call.1} parent=11 // pred_check
          %p344 = pneg %p90
        $region18: #{tpu_custom_call.1} parent=11 // pred_check_branch
          %346 = sbr.rel (%p344) target = $region20
        $region19: #{tpu_custom_call.1} parent=11 // pred_region
          _
        $region20: #{tpu_custom_call.1} parent=11 // pred_fallthru
          _
        // Predicated region
        $region21: #{tpu_custom_call.1} parent=11 // pred_check
          %p347 = pneg %p111
        $region22: #{tpu_custom_call.1} parent=11 // pred_check_branch
          %349 = sbr.rel (%p347) target = $region24
        $region23: #{tpu_custom_call.1} parent=11 // pred_region
          _
        $region24: #{tpu_custom_call.1} parent=11 // pred_fallthru
          _
        // Predicated region
        $region25: #{tpu_custom_call.1} parent=11 // pred_check
          %p350 = pneg %p132
        $region26: #{tpu_custom_call.1} parent=11 // pred_check_branch
          %352 = sbr.rel (%p350) target = $region28
        $region27: #{tpu_custom_call.1} parent=11 // pred_region
          _
        $region28: #{tpu_custom_call.1} parent=11 // pred_fallthru
          _
        // Predicated region
        $region29: #{tpu_custom_call.1} parent=11 // pred_check
          %p353 = pneg %p153
        $region30: #{tpu_custom_call.1} parent=11 // pred_check_branch
          %355 = sbr.rel (%p353) target = $region32
        $region31: #{tpu_custom_call.1} parent=11 // pred_region
          _
        $region32: #{tpu_custom_call.1} parent=11 // pred_fallthru
          _
        // Predicated region
        $region33: #{tpu_custom_call.1} parent=11 // pred_check
          %p356 = pneg %p174
        $region34: #{tpu_custom_call.1} parent=11 // pred_check_branch
          %358 = sbr.rel (%p356) target = $region36
        $region35: #{tpu_custom_call.1} parent=11 // pred_region
          _
        $region36: #{tpu_custom_call.1} parent=11 // pred_fallthru
          _
        // Predicated region
        $region37: #{tpu_custom_call.1} parent=11 // pred_check
          %p359 = pneg %p195
        $region38: #{tpu_custom_call.1} parent=11 // pred_check_branch
          %361 = sbr.rel (%p359) target = $region40
        $region39: #{tpu_custom_call.1} parent=11 // pred_region
          _
        $region40: #{tpu_custom_call.1} parent=11 // pred_fallthru
          _
        // Predicated region
        $region41: #{tpu_custom_call.1} parent=11 // pred_check
          %p362 = pneg %p216
        $region42: #{tpu_custom_call.1} parent=11 // pred_check_branch
          %364 = sbr.rel (%p362) target = $region44
        $region43: #{tpu_custom_call.1} parent=11 // pred_region
          _
        $region44: #{tpu_custom_call.1} parent=11 // pred_fallthru
          _
        // Predicated region
        $region45: #{tpu_custom_call.1} parent=11 // pred_check
          %p365 = pneg %p237
        $region46: #{tpu_custom_call.1} parent=11 // pred_check_branch
          %367 = sbr.rel (%p365) target = $region48
        $region47: #{tpu_custom_call.1} parent=11 // pred_region
          _
        $region48: #{tpu_custom_call.1} parent=11 // pred_fallthru
          _
        // Predicated region
        $region49: #{tpu_custom_call.1} parent=11 // pred_check
          %p368 = pneg %p258
        $region50: #{tpu_custom_call.1} parent=11 // pred_check_branch
          %370 = sbr.rel (%p368) target = $region52
        $region51: #{tpu_custom_call.1} parent=11 // pred_region
          _
        $region52: #{tpu_custom_call.1} parent=11 // pred_fallthru
          _
        // Predicated region
        $region53: #{tpu_custom_call.1} parent=11 // pred_check
          %p371 = pneg %p279
        $region54: #{tpu_custom_call.1} parent=11 // pred_check_branch
          %373 = sbr.rel (%p371) target = $region56
        $region55: #{tpu_custom_call.1} parent=11 // pred_region
          _
        $region56: #{tpu_custom_call.1} parent=11 // pred_fallthru
          _
        // Predicated region
        $region57: #{tpu_custom_call.1} parent=11 // pred_check
          %p374 = pneg %p300
        $region58: #{tpu_custom_call.1} parent=11 // pred_check_branch
          %376 = sbr.rel (%p374) target = $region60
        $region59: #{tpu_custom_call.1} parent=11 // pred_region
          _
        $region60: #{tpu_custom_call.1} parent=11 // pred_fallthru
          _
      $region12: #{tpu_custom_call.1} parent=5 // pred_fallthru
        _
      %p377 = scmp.lt.s32.totalorder %s22, 2
      // Predicated region
      $region61: #{tpu_custom_call.1} parent=5 // pred_check
        %p378 = pneg %p377
      $region62: #{tpu_custom_call.1} parent=5 // pred_check_branch
        %380 = sbr.rel (%p378) target = $region64
      $region63: #{tpu_custom_call.1} parent=5 // pred_region
        // Predicated region
        $region65: #{tpu_custom_call.1} parent=63 // pred_check
          %p381 = pneg %p42
        $region66: #{tpu_custom_call.1} parent=63 // pred_check_branch
          %383 = sbr.rel (%p381) target = $region68
        $region67: #{tpu_custom_call.1} parent=63 // pred_region
          %p384 = scmp.lt.s32.totalorder %s22, 1
          %s385 = scalar_select %p384, %s22, 1
          %s386 = smul.addr %s385, 32
          %s387 = smul.addr %s386, 8
          %s388 = scalar_lea.vmem %s0, %s387
        $region68: #{tpu_custom_call.1} parent=63 // pred_fallthru
          _
      $region64: #{tpu_custom_call.1} parent=5 // pred_fallthru
        _
      %p389 = scmp.le.s32.totalorder 1, %s22
      %p390 = scmp.lt.s32.totalorder %s22, 3
      %p391 = pnand %p389, %p390
      %p392 = pneg %p391
      // Predicated region
      $region69: #{tpu_custom_call.1} parent=5 // pred_check
        _
      $region70: #{tpu_custom_call.1} parent=5 // pred_check_branch
        %394 = sbr.rel (%p391) target = $region72
      $region71: #{tpu_custom_call.1} parent=5 // pred_region
        %s395 = ssub.s32 %s22, 1
        %p396 = scmp.lt.s32.totalorder %s27, 1
        %s397 = scalar_select %p396, %s27, 1
        %s398 = smul.addr %s397, 32
        %s399 = smul.addr %s398, 8
        %s400 = scalar_lea.vmem %s0, %s399
        %p401 = pneg %p48
        %p402 = pneg %p45
        %p403 = pneg %p69
        %p404 = pneg %p66
        %p405 = pneg %p90
        %p406 = pneg %p87
        %p407 = pneg %p111
        %p408 = pneg %p108
        %p409 = pneg %p132
        %p410 = pneg %p129
        %p411 = pneg %p153
        %p412 = pneg %p150
        %p413 = pneg %p174
        %p414 = pneg %p171
        %p415 = pneg %p195
        %p416 = pneg %p192
        %p417 = pneg %p216
        %p418 = pneg %p213
        %p419 = pneg %p237
        %p420 = pneg %p234
        %p421 = pneg %p258
        %p422 = pneg %p255
        %p423 = pneg %p279
        %p424 = pneg %p276
        %p425 = pneg %p300
        %p426 = pneg %p297
        %p427 = pneg %p326
        %p428 = pneg %p323
        %s429 = sand.u32 %s313, 1
        %s430 = scalar_lea.sflag [#allocation5], %s429
        %s431 = sand.u32 %s313, 1
        %s432 = smul.addr %s431, 256
        %s433 = scalar_lea.vmem [#allocation4], %s432
        %p434 = scmp.lt.s32.totalorder %s27, 1
        %s435 = scalar_select %p434, %s27, 1
        %s436 = smul.addr %s435, 32
        %s437 = smul.addr %s436, 8
        %s438 = scalar_lea.vmem %s0, %s437
        %v439 = vld [vmem:[%s438] sm:$0xff]
        %v440 = vld [vmem:[%s438 + $0x8] sm:$0xff]
        %v441 = vld [vmem:[%s438 + $0x10] sm:$0xff]
        %v442 = vld [vmem:[%s438 + $0x18] sm:$0xff]
        %v443 = vld [vmem:[%s438 + $0x20] sm:$0xff]
        %v444 = vld [vmem:[%s438 + $0x28] sm:$0xff]
        %v445 = vld [vmem:[%s438 + $0x30] sm:$0xff]
        %v446 = vld [vmem:[%s438 + $0x38] sm:$0xff]
        %v447 = vld [vmem:[%s438 + $0x40] sm:$0xff]
        %v448 = vld [vmem:[%s438 + $0x48] sm:$0xff]
        %v449 = vld [vmem:[%s438 + $0x50] sm:$0xff]
        %v450 = vld [vmem:[%s438 + $0x58] sm:$0xff]
        %v451 = vld [vmem:[%s438 + $0x60] sm:$0xff]
        %v452 = vld [vmem:[%s438 + $0x68] sm:$0xff]
        %v453 = vld [vmem:[%s438 + $0x70] sm:$0xff]
        %v454 = vld [vmem:[%s438 + $0x78] sm:$0xff]
        %v455 = vld [vmem:[%s438 + $0x80] sm:$0xff]
        %v456 = vld [vmem:[%s438 + $0x88] sm:$0xff]
        %v457 = vld [vmem:[%s438 + $0x90] sm:$0xff]
        %v458 = vld [vmem:[%s438 + $0x98] sm:$0xff]
        %v459 = vld [vmem:[%s438 + $0xa0] sm:$0xff]
        %v460 = vld [vmem:[%s438 + $0xa8] sm:$0xff]
        %v461 = vld [vmem:[%s438 + $0xb0] sm:$0xff]
        %v462 = vld [vmem:[%s438 + $0xb8] sm:$0xff]
        %v463 = vld [vmem:[%s438 + $0xc0] sm:$0xff]
        %v464 = vld [vmem:[%s438 + $0xc8] sm:$0xff]
        %v465 = vld [vmem:[%s438 + $0xd0] sm:$0xff]
        %v466 = vld [vmem:[%s438 + $0xd8] sm:$0xff]
        %v467 = vld [vmem:[%s438 + $0xe0] sm:$0xff]
        %v468 = vld [vmem:[%s438 + $0xe8] sm:$0xff]
        %v469 = vld [vmem:[%s438 + $0xf0] sm:$0xff]
        %v470 = vld [vmem:[%s438 + $0xf8] sm:$0xff]
        %v471 = vld [vmem:[%s1] sm:$0xf]
        %vm472 = vcmask 31744
        %v474 = vsel %vm472, %v439, 0
        %v477 = vsel %vm472, %v440, 0
        %v480 = vsel %vm472, %v441, 0
        %v483 = vsel %vm472, %v442, 0
        %v486 = vsel %vm472, %v443, 0
        %v489 = vsel %vm472, %v444, 0
        %v492 = vsel %vm472, %v445, 0
        %v495 = vsel %vm472, %v446, 0
        %v498 = vsel %vm472, %v447, 0
        %v501 = vsel %vm472, %v448, 0
        %v504 = vsel %vm472, %v449, 0
        %v507 = vsel %vm472, %v450, 0
        %v510 = vsel %vm472, %v451, 0
        %v513 = vsel %vm472, %v452, 0
        %v516 = vsel %vm472, %v453, 0
        %v519 = vsel %vm472, %v454, 0
        %v522 = vsel %vm472, %v455, 0
        %v525 = vsel %vm472, %v456, 0
        %v528 = vsel %vm472, %v457, 0
        %v531 = vsel %vm472, %v458, 0
        %v534 = vsel %vm472, %v459, 0
        %v537 = vsel %vm472, %v460, 0
        %v540 = vsel %vm472, %v461, 0
        %v543 = vsel %vm472, %v462, 0
        %v546 = vsel %vm472, %v463, 0
        %v549 = vsel %vm472, %v464, 0
        %v552 = vsel %vm472, %v465, 0
        %v555 = vsel %vm472, %v466, 0
        %v558 = vsel %vm472, %v467, 0
        %v561 = vsel %vm472, %v468, 0
        %v564 = vsel %vm472, %v469, 0
        %v567 = vsel %vm472, %v470, 0
        %vm569 = vcmask 1043456
        %v571 = vsel %vm569, %v471, 0
        %573 = vmatprep.subr.mxu0 0.0
        %574 = vmatpush1.msra.mxu0 0.0
        %575 = vmatprep.subr.mxu0 0.0
        %576 = vmatpush1.msra.mxu0 0.0
        %577 = vmatprep.subr.mxu0 0.0
        %578 = vmatpush1.msra.mxu0 0.0
        %579 = vmatprep.subr.mxu0 0.0
        %580 = vmatpush1.msra.mxu0 0.0
        %581 = vmatprep.subr.mxu0 0.0
        %582 = vmatpush1.msra.mxu0 0.0
        %583 = vmatprep.subr.mxu0 0.0
        %584 = vmatpush1.msra.mxu0 0.0
        %585 = vmatprep.subr.mxu0 0.0
        %586 = vmatpush1.msra.mxu0 0.0
        %587 = vmatprep.subr.mxu0 0.0
        %588 = vmatpush1.msra.mxu0 0.0
        %589 = vmatprep.subr.mxu0 0.0
        %590 = vmatpush1.msra.mxu0 0.0
        %591 = vmatprep.subr.mxu0 0.0
        %592 = vmatpush1.msra.mxu0 0.0
        %593 = vmatprep.subr.mxu0 0.0
        %594 = vmatpush1.msra.mxu0 0.0
        %595 = vmatprep.subr.mxu0 0.0
        %596 = vmatpush1.msra.mxu0 0.0
        %597 = vmatprep.subr.mxu0 0.0
        %598 = vmatpush1.msra.mxu0 0.0
        %599 = vmatprep.subr.mxu0 0.0
        %600 = vmatpush1.msra.mxu0 0.0
        %601 = vmatprep.subr.mxu0 0.0
        %602 = vmatpush1.msra.mxu0 0.0
        %603 = vmatprep.subr.mxu0 0.0
        %604 = vmatpush1.msra.mxu0 %v571
        %605 = vmatprep.subr.mxu0 0.0
        %606 = vmatpush2.msra.mxu0 0.0
        %607 = vmatprep.subr.mxu0 0.0
        %608 = vmatpush2.msra.mxu0 0.0
        %609 = vmatprep.subr.mxu0 0.0
        %610 = vmatpush2.msra.mxu0 0.0
        %611 = vmatprep.subr.mxu0 0.0
        %612 = vmatpush2.msra.mxu0 0.0
        %613 = vmatprep.subr.mxu0 0.0
        %614 = vmatpush2.msra.mxu0 0.0
        %615 = vmatprep.subr.mxu0 0.0
        %616 = vmatpush2.msra.mxu0 0.0
        %617 = vmatprep.subr.mxu0 0.0
        %618 = vmatpush2.msra.mxu0 0.0
        %619 = vmatprep.subr.mxu0 0.0
        %620 = vmatpush2.msra.mxu0 0.0
        %621 = vmatprep.subr.mxu0 0.0
        %622 = vmatpush2.msra.mxu0 0.0
        %623 = vmatprep.subr.mxu0 0.0
        %624 = vmatpush2.msra.mxu0 0.0
        %625 = vmatprep.subr.mxu0 0.0
        %626 = vmatpush2.msra.mxu0 0.0
        %627 = vmatprep.subr.mxu0 0.0
        %628 = vmatpush2.msra.mxu0 0.0
        %629 = vmatprep.subr.mxu0 0.0
        %630 = vmatpush2.msra.mxu0 0.0
        %631 = vmatprep.subr.mxu0 0.0
        %632 = vmatpush2.msra.mxu0 0.0
        %633 = vmatprep.subr.mxu0 0.0
        %634 = vmatpush2.msra.mxu0 0.0
        %635 = vmatprep.subr.mxu0 0.0
        %636 = vmatpush2.msra.mxu0 0.0
        %637 = vmatprep.mubr.f32.mxu0 0.0
        %638 = vmatmul.mubr.f32.gmra.mxu0 %v474
        %v639 = vpop.f32.mrf.mxu0
        %v640 = vadd.f32 0.0, %v639
        %v641 = vpop.f32.mrf.mxu0
        %642 = vmatprep.mubr.f32.mxu0 0.0
        %643 = vmatmul.mubr.f32.gmra.mxu0 %v477
        %v644 = vpop.f32.mrf.mxu0
        %v645 = vadd.f32 0.0, %v644
        %v646 = vpop.f32.mrf.mxu0
        %647 = vmatprep.mubr.f32.mxu0 0.0
        %648 = vmatmul.mubr.f32.gmra.mxu0 %v480
        %v649 = vpop.f32.mrf.mxu0
        %v650 = vadd.f32 0.0, %v649
        %v651 = vpop.f32.mrf.mxu0
        %652 = vmatprep.mubr.f32.mxu0 0.0
        %653 = vmatmul.mubr.f32.gmra.mxu0 %v483
        %v654 = vpop.f32.mrf.mxu0
        %v655 = vadd.f32 0.0, %v654
        %v656 = vpop.f32.mrf.mxu0
        %657 = vmatprep.mubr.f32.mxu0 0.0
        %658 = vmatmul.mubr.f32.gmra.mxu0 %v486
        %v659 = vpop.f32.mrf.mxu0
        %v660 = vadd.f32 0.0, %v659
        %v661 = vpop.f32.mrf.mxu0
        %662 = vmatprep.mubr.f32.mxu0 0.0
        %663 = vmatmul.mubr.f32.gmra.mxu0 %v489
        %v664 = vpop.f32.mrf.mxu0
        %v665 = vadd.f32 0.0, %v664
        %v666 = vpop.f32.mrf.mxu0
        %667 = vmatprep.mubr.f32.mxu0 0.0
        %668 = vmatmul.mubr.f32.gmra.mxu0 %v492
        %v669 = vpop.f32.mrf.mxu0
        %v670 = vadd.f32 0.0, %v669
        %v671 = vpop.f32.mrf.mxu0
        %672 = vmatprep.mubr.f32.mxu0 0.0
        %673 = vmatmul.mubr.f32.gmra.mxu0 %v495
        %v674 = vpop.f32.mrf.mxu0
        %v675 = vadd.f32 0.0, %v674
        %v676 = vpop.f32.mrf.mxu0
        %677 = vmatprep.mubr.f32.mxu0 0.0
        %678 = vmatmul.mubr.f32.gmra.mxu0 %v498
        %v679 = vpop.f32.mrf.mxu0
        %v680 = vadd.f32 0.0, %v679
        %v681 = vpop.f32.mrf.mxu0
        %682 = vmatprep.mubr.f32.mxu0 0.0
        %683 = vmatmul.mubr.f32.gmra.mxu0 %v501
        %v684 = vpop.f32.mrf.mxu0
        %v685 = vadd.f32 0.0, %v684
        %v686 = vpop.f32.mrf.mxu0
        %687 = vmatprep.mubr.f32.mxu0 0.0
        %688 = vmatmul.mubr.f32.gmra.mxu0 %v504
        %v689 = vpop.f32.mrf.mxu0
        %v690 = vadd.f32 0.0, %v689
        %v691 = vpop.f32.mrf.mxu0
        %692 = vmatprep.mubr.f32.mxu0 0.0
        %693 = vmatmul.mubr.f32.gmra.mxu0 %v507
        %v694 = vpop.f32.mrf.mxu0
        %v695 = vadd.f32 0.0, %v694
        %v696 = vpop.f32.mrf.mxu0
        %697 = vmatprep.mubr.f32.mxu0 0.0
        %698 = vmatmul.mubr.f32.gmra.mxu0 %v510
        %v699 = vpop.f32.mrf.mxu0
        %v700 = vadd.f32 0.0, %v699
        %v701 = vpop.f32.mrf.mxu0
        %702 = vmatprep.mubr.f32.mxu0 0.0
        %703 = vmatmul.mubr.f32.gmra.mxu0 %v513
        %v704 = vpop.f32.mrf.mxu0
        %v705 = vadd.f32 0.0, %v704
        %v706 = vpop.f32.mrf.mxu0
        %707 = vmatprep.mubr.f32.mxu0 0.0
        %708 = vmatmul.mubr.f32.gmra.mxu0 %v516
        %v709 = vpop.f32.mrf.mxu0
        %v710 = vadd.f32 0.0, %v709
        %v711 = vpop.f32.mrf.mxu0
        %712 = vmatprep.mubr.f32.mxu0 0.0
        %713 = vmatmul.mubr.f32.gmra.mxu0 %v519
        %v714 = vpop.f32.mrf.mxu0
        %v715 = vadd.f32 0.0, %v714
        %v716 = vpop.f32.mrf.mxu0
        %717 = vmatprep.mubr.f32.mxu0 0.0
        %718 = vmatmul.mubr.f32.gmra.mxu0 %v522
        %v719 = vpop.f32.mrf.mxu0
        %v720 = vadd.f32 0.0, %v719
        %v721 = vpop.f32.mrf.mxu0
        %722 = vmatprep.mubr.f32.mxu0 0.0
        %723 = vmatmul.mubr.f32.gmra.mxu0 %v525
        %v724 = vpop.f32.mrf.mxu0
        %v725 = vadd.f32 0.0, %v724
        %v726 = vpop.f32.mrf.mxu0
        %727 = vmatprep.mubr.f32.mxu0 0.0
        %728 = vmatmul.mubr.f32.gmra.mxu0 %v528
        %v729 = vpop.f32.mrf.mxu0
        %v730 = vadd.f32 0.0, %v729
        %v731 = vpop.f32.mrf.mxu0
        %732 = vmatprep.mubr.f32.mxu0 0.0
        %733 = vmatmul.mubr.f32.gmra.mxu0 %v531
        %v734 = vpop.f32.mrf.mxu0
        %v735 = vadd.f32 0.0, %v734
        %v736 = vpop.f32.mrf.mxu0
        %737 = vmatprep.mubr.f32.mxu0 0.0
        %738 = vmatmul.mubr.f32.gmra.mxu0 %v534
        %v739 = vpop.f32.mrf.mxu0
        %v740 = vadd.f32 0.0, %v739
        %v741 = vpop.f32.mrf.mxu0
        %742 = vmatprep.mubr.f32.mxu0 0.0
        %743 = vmatmul.mubr.f32.gmra.mxu0 %v537
        %v744 = vpop.f32.mrf.mxu0
        %v745 = vadd.f32 0.0, %v744
        %v746 = vpop.f32.mrf.mxu0
        %747 = vmatprep.mubr.f32.mxu0 0.0
        %748 = vmatmul.mubr.f32.gmra.mxu0 %v540
        %v749 = vpop.f32.mrf.mxu0
        %v750 = vadd.f32 0.0, %v749
        %v751 = vpop.f32.mrf.mxu0
        %752 = vmatprep.mubr.f32.mxu0 0.0
        %753 = vmatmul.mubr.f32.gmra.mxu0 %v543
        %v754 = vpop.f32.mrf.mxu0
        %v755 = vadd.f32 0.0, %v754
        %v756 = vpop.f32.mrf.mxu0
        %757 = vmatprep.mubr.f32.mxu0 0.0
        %758 = vmatmul.mubr.f32.gmra.mxu0 %v546
        %v759 = vpop.f32.mrf.mxu0
        %v760 = vadd.f32 0.0, %v759
        %v761 = vpop.f32.mrf.mxu0
        %762 = vmatprep.mubr.f32.mxu0 0.0
        %763 = vmatmul.mubr.f32.gmra.mxu0 %v549
        %v764 = vpop.f32.mrf.mxu0
        %v765 = vadd.f32 0.0, %v764
        %v766 = vpop.f32.mrf.mxu0
        %767 = vmatprep.mubr.f32.mxu0 0.0
        %768 = vmatmul.mubr.f32.gmra.mxu0 %v552
        %v769 = vpop.f32.mrf.mxu0
        %v770 = vadd.f32 0.0, %v769
        %v771 = vpop.f32.mrf.mxu0
        %772 = vmatprep.mubr.f32.mxu0 0.0
        %773 = vmatmul.mubr.f32.gmra.mxu0 %v555
        %v774 = vpop.f32.mrf.mxu0
        %v775 = vadd.f32 0.0, %v774
        %v776 = vpop.f32.mrf.mxu0
        %777 = vmatprep.mubr.f32.mxu0 0.0
        %778 = vmatmul.mubr.f32.gmra.mxu0 %v558
        %v779 = vpop.f32.mrf.mxu0
        %v780 = vadd.f32 0.0, %v779
        %v781 = vpop.f32.mrf.mxu0
        %782 = vmatprep.mubr.f32.mxu0 0.0
        %783 = vmatmul.mubr.f32.gmra.mxu0 %v561
        %v784 = vpop.f32.mrf.mxu0
        %v785 = vadd.f32 0.0, %v784
        %v786 = vpop.f32.mrf.mxu0
        %787 = vmatprep.mubr.f32.mxu0 0.0
        %788 = vmatmul.mubr.f32.gmra.mxu0 %v564
        %v789 = vpop.f32.mrf.mxu0
        %v790 = vadd.f32 0.0, %v789
        %v791 = vpop.f32.mrf.mxu0
        %792 = vmatprep.mubr.f32.mxu0 0.0
        %793 = vmatmul.mubr.f32.gmra.mxu0 %v567
        %v794 = vpop.f32.mrf.mxu0
        %v795 = vadd.f32 0.0, %v794
        %v796 = vpop.f32.mrf.mxu0
        %797 = vdwg.mxu0
        %v798 = vld [vmem:[%s2] sm:$0x1]
        %v799 = vld [vmem:[%s3] sm:$0x1]
        %v800 = vsel %vm472, %v640, 0.0
        %v801 = vsel %vm472, %v645, 0.0
        %v802 = vadd.f32 %v800, %v801
        %v803 = vsel %vm472, %v650, 0.0
        %v804 = vadd.f32 %v802, %v803
        %v805 = vsel %vm472, %v655, 0.0
        %v806 = vadd.f32 %v804, %v805
        %v807 = vsel %vm472, %v660, 0.0
        %v808 = vadd.f32 %v806, %v807
        %v809 = vsel %vm472, %v665, 0.0
        %v810 = vadd.f32 %v808, %v809
        %v811 = vsel %vm472, %v670, 0.0
        %v812 = vadd.f32 %v810, %v811
        %v813 = vsel %vm472, %v675, 0.0
        %v814 = vadd.f32 %v812, %v813
        %v815 = vsel %vm472, %v680, 0.0
        %v816 = vadd.f32 %v814, %v815
        %v817 = vsel %vm472, %v685, 0.0
        %v818 = vadd.f32 %v816, %v817
        %v819 = vsel %vm472, %v690, 0.0
        %v820 = vadd.f32 %v818, %v819
        %v821 = vsel %vm472, %v695, 0.0
        %v822 = vadd.f32 %v820, %v821
        %v823 = vsel %vm472, %v700, 0.0
        %v824 = vadd.f32 %v822, %v823
        %v825 = vsel %vm472, %v705, 0.0
        %v826 = vadd.f32 %v824, %v825
        %v827 = vsel %vm472, %v710, 0.0
        %v828 = vadd.f32 %v826, %v827
        %v829 = vsel %vm472, %v715, 0.0
        %v830 = vadd.f32 %v828, %v829
        %v831 = vsel %vm472, %v720, 0.0
        %v832 = vadd.f32 %v830, %v831
        %v833 = vsel %vm472, %v725, 0.0
        %v834 = vadd.f32 %v832, %v833
        %v835 = vsel %vm472, %v730, 0.0
        %v836 = vadd.f32 %v834, %v835
        %v837 = vsel %vm472, %v735, 0.0
        %v838 = vadd.f32 %v836, %v837
        %v839 = vsel %vm472, %v740, 0.0
        %v840 = vadd.f32 %v838, %v839
        %v841 = vsel %vm472, %v745, 0.0
        %v842 = vadd.f32 %v840, %v841
        %v843 = vsel %vm472, %v750, 0.0
        %v844 = vadd.f32 %v842, %v843
        %v845 = vsel %vm472, %v755, 0.0
        %v846 = vadd.f32 %v844, %v845
        %v847 = vsel %vm472, %v760, 0.0
        %v848 = vadd.f32 %v846, %v847
        %v849 = vsel %vm472, %v765, 0.0
        %v850 = vadd.f32 %v848, %v849
        %v851 = vsel %vm472, %v770, 0.0
        %v852 = vadd.f32 %v850, %v851
        %v853 = vsel %vm472, %v775, 0.0
        %v854 = vadd.f32 %v852, %v853
        %v855 = vsel %vm472, %v780, 0.0
        %v856 = vadd.f32 %v854, %v855
        %v857 = vsel %vm472, %v785, 0.0
        %v858 = vadd.f32 %v856, %v857
        %v859 = vsel %vm472, %v790, 0.0
        %v860 = vadd.f32 %v858, %v859
        %v861 = vsel %vm472, %v795, 0.0
        %v862 = vadd.f32 %v860, %v861
        %v863 = vrot.slane %v862, 4
        %v864 = vadd.f32 %v862, %v863
        %v865 = vrot.slane %v864, 2
        %v866 = vadd.f32 %v864, %v865
        %v867 = vrot.slane %v866, 1
        %v868 = vadd.f32 %v866, %v867
        %v869 = vmul.f32 %v640, %v640
        %v870 = vmul.f32 %v645, %v645
        %v871 = vmul.f32 %v650, %v650
        %v872 = vmul.f32 %v655, %v655
        %v873 = vmul.f32 %v660, %v660
        %v874 = vmul.f32 %v665, %v665
        %v875 = vmul.f32 %v670, %v670
        %v876 = vmul.f32 %v675, %v675
        %v877 = vmul.f32 %v680, %v680
        %v878 = vmul.f32 %v685, %v685
        %v879 = vmul.f32 %v690, %v690
        %v880 = vmul.f32 %v695, %v695
        %v881 = vmul.f32 %v700, %v700
        %v882 = vmul.f32 %v705, %v705
        %v883 = vmul.f32 %v710, %v710
        %v884 = vmul.f32 %v715, %v715
        %v885 = vmul.f32 %v720, %v720
        %v886 = vmul.f32 %v725, %v725
        %v887 = vmul.f32 %v730, %v730
        %v888 = vmul.f32 %v735, %v735
        %v889 = vmul.f32 %v740, %v740
        %v890 = vmul.f32 %v745, %v745
        %v891 = vmul.f32 %v750, %v750
        %v892 = vmul.f32 %v755, %v755
        %v893 = vmul.f32 %v760, %v760
        %v894 = vmul.f32 %v765, %v765
        %v895 = vmul.f32 %v770, %v770
        %v896 = vmul.f32 %v775, %v775
        %v897 = vmul.f32 %v780, %v780
        %v898 = vmul.f32 %v785, %v785
        %v899 = vmul.f32 %v790, %v790
        %v900 = vmul.f32 %v795, %v795
        %v901 = vsel %vm472, %v869, 0.0
        %v902 = vsel %vm472, %v870, 0.0
        %v903 = vadd.f32 %v901, %v902
        %v904 = vsel %vm472, %v871, 0.0
        %v905 = vadd.f32 %v903, %v904
        %v906 = vsel %vm472, %v872, 0.0
        %v907 = vadd.f32 %v905, %v906
        %v908 = vsel %vm472, %v873, 0.0
        %v909 = vadd.f32 %v907, %v908
        %v910 = vsel %vm472, %v874, 0.0
        %v911 = vadd.f32 %v909, %v910
        %v912 = vsel %vm472, %v875, 0.0
        %v913 = vadd.f32 %v911, %v912
        %v914 = vsel %vm472, %v876, 0.0
        %v915 = vadd.f32 %v913, %v914
        %v916 = vsel %vm472, %v877, 0.0
        %v917 = vadd.f32 %v915, %v916
        %v918 = vsel %vm472, %v878, 0.0
        %v919 = vadd.f32 %v917, %v918
        %v920 = vsel %vm472, %v879, 0.0
        %v921 = vadd.f32 %v919, %v920
        %v922 = vsel %vm472, %v880, 0.0
        %v923 = vadd.f32 %v921, %v922
        %v924 = vsel %vm472, %v881, 0.0
        %v925 = vadd.f32 %v923, %v924
        %v926 = vsel %vm472, %v882, 0.0
        %v927 = vadd.f32 %v925, %v926
        %v928 = vsel %vm472, %v883, 0.0
        %v929 = vadd.f32 %v927, %v928
        %v930 = vsel %vm472, %v884, 0.0
        %v931 = vadd.f32 %v929, %v930
        %v932 = vsel %vm472, %v885, 0.0
        %v933 = vadd.f32 %v931, %v932
        %v934 = vsel %vm472, %v886, 0.0
        %v935 = vadd.f32 %v933, %v934
        %v936 = vsel %vm472, %v887, 0.0
        %v937 = vadd.f32 %v935, %v936
        %v938 = vsel %vm472, %v888, 0.0
        %v939 = vadd.f32 %v937, %v938
        %v940 = vsel %vm472, %v889, 0.0
        %v941 = vadd.f32 %v939, %v940
        %v942 = vsel %vm472, %v890, 0.0
        %v943 = vadd.f32 %v941, %v942
        %v944 = vsel %vm472, %v891, 0.0
        %v945 = vadd.f32 %v943, %v944
        %v946 = vsel %vm472, %v892, 0.0
        %v947 = vadd.f32 %v945, %v946
        %v948 = vsel %vm472, %v893, 0.0
        %v949 = vadd.f32 %v947, %v948
        %v950 = vsel %vm472, %v894, 0.0
        %v951 = vadd.f32 %v949, %v950
        %v952 = vsel %vm472, %v895, 0.0
        %v953 = vadd.f32 %v951, %v952
        %v954 = vsel %vm472, %v896, 0.0
        %v955 = vadd.f32 %v953, %v954
        %v956 = vsel %vm472, %v897, 0.0
        %v957 = vadd.f32 %v955, %v956
        %v958 = vsel %vm472, %v898, 0.0
        %v959 = vadd.f32 %v957, %v958
        %v960 = vsel %vm472, %v899, 0.0
        %v961 = vadd.f32 %v959, %v960
        %v962 = vsel %vm472, %v900, 0.0
        %v963 = vadd.f32 %v961, %v962
        %v964 = vrot.slane %v963, 4
        %v965 = vadd.f32 %v963, %v964
        %v966 = vrot.slane %v965, 2
        %v967 = vadd.f32 %v965, %v966
        %v968 = vrot.slane %v967, 1
        %v969 = vadd.f32 %v967, %v968
        %v970 = vmul.f32 %v868, 0.00390625
        %v971 = vmul.f32 %v969, 0.00390625
        %v972 = vmul.f32 %v970, %v970
        %v973 = vsub.f32 %v971, %v972
        %v974 = vsub.f32 %v640, %v970
        %v975 = vsub.f32 %v645, %v970
        %v976 = vsub.f32 %v650, %v970
        %v977 = vsub.f32 %v655, %v970
        %v978 = vsub.f32 %v660, %v970
        %v979 = vsub.f32 %v665, %v970
        %v980 = vsub.f32 %v670, %v970
        %v981 = vsub.f32 %v675, %v970
        %v982 = vsub.f32 %v680, %v970
        %v983 = vsub.f32 %v685, %v970
        %v984 = vsub.f32 %v690, %v970
        %v985 = vsub.f32 %v695, %v970
        %v986 = vsub.f32 %v700, %v970
        %v987 = vsub.f32 %v705, %v970
        %v988 = vsub.f32 %v710, %v970
        %v989 = vsub.f32 %v715, %v970
        %v990 = vsub.f32 %v720, %v970
        %v991 = vsub.f32 %v725, %v970
        %v992 = vsub.f32 %v730, %v970
        %v993 = vsub.f32 %v735, %v970
        %v994 = vsub.f32 %v740, %v970
        %v995 = vsub.f32 %v745, %v970
        %v996 = vsub.f32 %v750, %v970
        %v997 = vsub.f32 %v755, %v970
        %v998 = vsub.f32 %v760, %v970
        %v999 = vsub.f32 %v765, %v970
        %v1000 = vsub.f32 %v770, %v970
        %v1001 = vsub.f32 %v775, %v970
        %v1002 = vsub.f32 %v780, %v970
        %v1003 = vsub.f32 %v785, %v970
        %v1004 = vsub.f32 %v790, %v970
        %v1005 = vsub.f32 %v795, %v970
        %v1006 = vadd.f32 %v973, 1e-05
        %v1007 = vrsqrt.pop %v1006
        %v1008 = vmul.f32 %v974, %v1007
        %v1009 = vmul.f32 %v975, %v1007
        %v1010 = vmul.f32 %v976, %v1007
        %v1011 = vmul.f32 %v977, %v1007
        %v1012 = vmul.f32 %v978, %v1007
        %v1013 = vmul.f32 %v979, %v1007
        %v1014 = vmul.f32 %v980, %v1007
        %v1015 = vmul.f32 %v981, %v1007
        %v1016 = vmul.f32 %v982, %v1007
        %v1017 = vmul.f32 %v983, %v1007
        %v1018 = vmul.f32 %v984, %v1007
        %v1019 = vmul.f32 %v985, %v1007
        %v1020 = vmul.f32 %v986, %v1007
        %v1021 = vmul.f32 %v987, %v1007
        %v1022 = vmul.f32 %v988, %v1007
        %v1023 = vmul.f32 %v989, %v1007
        %v1024 = vmul.f32 %v990, %v1007
        %v1025 = vmul.f32 %v991, %v1007
        %v1026 = vmul.f32 %v992, %v1007
        %v1027 = vmul.f32 %v993, %v1007
        %v1028 = vmul.f32 %v994, %v1007
        %v1029 = vmul.f32 %v995, %v1007
        %v1030 = vmul.f32 %v996, %v1007
        %v1031 = vmul.f32 %v997, %v1007
        %v1032 = vmul.f32 %v998, %v1007
        %v1033 = vmul.f32 %v999, %v1007
        %v1034 = vmul.f32 %v1000, %v1007
        %v1035 = vmul.f32 %v1001, %v1007
        %v1036 = vmul.f32 %v1002, %v1007
        %v1037 = vmul.f32 %v1003, %v1007
        %v1038 = vmul.f32 %v1004, %v1007
        %v1039 = vmul.f32 %v1005, %v1007
        %v1041 = vlaneseq
        %v1042 = vshrl.u32 %v1041, 7
        %v1043 = vsub.s32 0, %v1042
        %v1044 = vrot.slane %v798, %v1043
        %v1046 = vmul.f32 %v1008, %v1044
        %v1047 = vmul.f32 %v1009, %v1044
        %v1048 = vmul.f32 %v1010, %v1044
        %v1049 = vmul.f32 %v1011, %v1044
        %v1050 = vmul.f32 %v1012, %v1044
        %v1051 = vmul.f32 %v1013, %v1044
        %v1052 = vmul.f32 %v1014, %v1044
        %v1053 = vmul.f32 %v1015, %v1044
        %v1054 = vmul.f32 %v1016, %v1044
        %v1055 = vmul.f32 %v1017, %v1044
        %v1056 = vmul.f32 %v1018, %v1044
        %v1057 = vmul.f32 %v1019, %v1044
        %v1058 = vmul.f32 %v1020, %v1044
        %v1059 = vmul.f32 %v1021, %v1044
        %v1060 = vmul.f32 %v1022, %v1044
        %v1061 = vmul.f32 %v1023, %v1044
        %v1062 = vmul.f32 %v1024, %v1044
        %v1063 = vmul.f32 %v1025, %v1044
        %v1064 = vmul.f32 %v1026, %v1044
        %v1065 = vmul.f32 %v1027, %v1044
        %v1066 = vmul.f32 %v1028, %v1044
        %v1067 = vmul.f32 %v1029, %v1044
        %v1068 = vmul.f32 %v1030, %v1044
        %v1069 = vmul.f32 %v1031, %v1044
        %v1070 = vmul.f32 %v1032, %v1044
        %v1071 = vmul.f32 %v1033, %v1044
        %v1072 = vmul.f32 %v1034, %v1044
        %v1073 = vmul.f32 %v1035, %v1044
        %v1074 = vmul.f32 %v1036, %v1044
        %v1075 = vmul.f32 %v1037, %v1044
        %v1076 = vmul.f32 %v1038, %v1044
        %v1077 = vmul.f32 %v1039, %v1044
        %v1079 = vlaneseq
        %v1080 = vshrl.u32 %v1079, 7
        %v1081 = vsub.s32 0, %v1080
        %v1082 = vrot.slane %v799, %v1081
        %v1084 = vadd.f32 %v1046, %v1082
        %v1085 = vadd.f32 %v1047, %v1082
        %v1086 = vadd.f32 %v1048, %v1082
        %v1087 = vadd.f32 %v1049, %v1082
        %v1088 = vadd.f32 %v1050, %v1082
        %v1089 = vadd.f32 %v1051, %v1082
        %v1090 = vadd.f32 %v1052, %v1082
        %v1091 = vadd.f32 %v1053, %v1082
        %v1092 = vadd.f32 %v1054, %v1082
        %v1093 = vadd.f32 %v1055, %v1082
        %v1094 = vadd.f32 %v1056, %v1082
        %v1095 = vadd.f32 %v1057, %v1082
        %v1096 = vadd.f32 %v1058, %v1082
        %v1097 = vadd.f32 %v1059, %v1082
        %v1098 = vadd.f32 %v1060, %v1082
        %v1099 = vadd.f32 %v1061, %v1082
        %v1100 = vadd.f32 %v1062, %v1082
        %v1101 = vadd.f32 %v1063, %v1082
        %v1102 = vadd.f32 %v1064, %v1082
        %v1103 = vadd.f32 %v1065, %v1082
        %v1104 = vadd.f32 %v1066, %v1082
        %v1105 = vadd.f32 %v1067, %v1082
        %v1106 = vadd.f32 %v1068, %v1082
        %v1107 = vadd.f32 %v1069, %v1082
        %v1108 = vadd.f32 %v1070, %v1082
        %v1109 = vadd.f32 %v1071, %v1082
        %v1110 = vadd.f32 %v1072, %v1082
        %v1111 = vadd.f32 %v1073, %v1082
        %v1112 = vadd.f32 %v1074, %v1082
        %v1113 = vadd.f32 %v1075, %v1082
        %v1114 = vadd.f32 %v1076, %v1082
        %v1115 = vadd.f32 %v1077, %v1082
        %v1116 = vmax.f32 %v1084, 0.0
        %v1117 = vmax.f32 %v1085, 0.0
        %v1118 = vmax.f32 %v1086, 0.0
        %v1119 = vmax.f32 %v1087, 0.0
        %v1120 = vmax.f32 %v1088, 0.0
        %v1121 = vmax.f32 %v1089, 0.0
        %v1122 = vmax.f32 %v1090, 0.0
        %v1123 = vmax.f32 %v1091, 0.0
        %v1124 = vmax.f32 %v1092, 0.0
        %v1125 = vmax.f32 %v1093, 0.0
        %v1126 = vmax.f32 %v1094, 0.0
        %v1127 = vmax.f32 %v1095, 0.0
        %v1128 = vmax.f32 %v1096, 0.0
        %v1129 = vmax.f32 %v1097, 0.0
        %v1130 = vmax.f32 %v1098, 0.0
        %v1131 = vmax.f32 %v1099, 0.0
        %v1132 = vmax.f32 %v1100, 0.0
        %v1133 = vmax.f32 %v1101, 0.0
        %v1134 = vmax.f32 %v1102, 0.0
        %v1135 = vmax.f32 %v1103, 0.0
        %v1136 = vmax.f32 %v1104, 0.0
        %v1137 = vmax.f32 %v1105, 0.0
        %v1138 = vmax.f32 %v1106, 0.0
        %v1139 = vmax.f32 %v1107, 0.0
        %v1140 = vmax.f32 %v1108, 0.0
        %v1141 = vmax.f32 %v1109, 0.0
        %v1142 = vmax.f32 %v1110, 0.0
        %v1143 = vmax.f32 %v1111, 0.0
        %v1144 = vmax.f32 %v1112, 0.0
        %v1145 = vmax.f32 %v1113, 0.0
        %v1146 = vmax.f32 %v1114, 0.0
        %v1147 = vmax.f32 %v1115, 0.0
        %1148 = vst.msk [vmem:[#allocation2] sm:$0xff] %vm472, 0.0
        %1149 = vst.msk [vmem:[#allocation2 + $0x8] sm:$0xff] %vm472, 0.0
        %1150 = vst.msk [vmem:[#allocation2 + $0x10] sm:$0xff] %vm472, 0.0
        %1151 = vst.msk [vmem:[#allocation2 + $0x18] sm:$0xff] %vm472, 0.0
        %1152 = vst.msk [vmem:[#allocation2 + $0x20] sm:$0xff] %vm472, 0.0
        %1153 = vst.msk [vmem:[#allocation2 + $0x28] sm:$0xff] %vm472, 0.0
        %1154 = vst.msk [vmem:[#allocation2 + $0x30] sm:$0xff] %vm472, 0.0
        %1155 = vst.msk [vmem:[#allocation2 + $0x38] sm:$0xff] %vm472, 0.0
        %1156 = vst.msk [vmem:[#allocation2 + $0x40] sm:$0xff] %vm472, 0.0
        %1157 = vst.msk [vmem:[#allocation2 + $0x48] sm:$0xff] %vm472, 0.0
        %1158 = vst.msk [vmem:[#allocation2 + $0x50] sm:$0xff] %vm472, 0.0
        %1159 = vst.msk [vmem:[#allocation2 + $0x58] sm:$0xff] %vm472, 0.0
        %1160 = vst.msk [vmem:[#allocation2 + $0x60] sm:$0xff] %vm472, 0.0
        %1161 = vst.msk [vmem:[#allocation2 + $0x68] sm:$0xff] %vm472, 0.0
        %1162 = vst.msk [vmem:[#allocation2 + $0x70] sm:$0xff] %vm472, 0.0
        %1163 = vst.msk [vmem:[#allocation2 + $0x78] sm:$0xff] %vm472, 0.0
        %1164 = vst.msk [vmem:[#allocation2 + $0x80] sm:$0xff] %vm472, 0.0
        %1165 = vst.msk [vmem:[#allocation2 + $0x88] sm:$0xff] %vm472, 0.0
        %1166 = vst.msk [vmem:[#allocation2 + $0x90] sm:$0xff] %vm472, 0.0
        %1167 = vst.msk [vmem:[#allocation2 + $0x98] sm:$0xff] %vm472, 0.0
        %1168 = vst.msk [vmem:[#allocation2 + $0xa0] sm:$0xff] %vm472, 0.0
        %1169 = vst.msk [vmem:[#allocation2 + $0xa8] sm:$0xff] %vm472, 0.0
        %1170 = vst.msk [vmem:[#allocation2 + $0xb0] sm:$0xff] %vm472, 0.0
        %1171 = vst.msk [vmem:[#allocation2 + $0xb8] sm:$0xff] %vm472, 0.0
        %1172 = vst.msk [vmem:[#allocation2 + $0xc0] sm:$0xff] %vm472, 0.0
        %1173 = vst.msk [vmem:[#allocation2 + $0xc8] sm:$0xff] %vm472, 0.0
        %1174 = vst.msk [vmem:[#allocation2 + $0xd0] sm:$0xff] %vm472, 0.0
        %1175 = vst.msk [vmem:[#allocation2 + $0xd8] sm:$0xff] %vm472, 0.0
        %1176 = vst.msk [vmem:[#allocation2 + $0xe0] sm:$0xff] %vm472, 0.0
        %1177 = vst.msk [vmem:[#allocation2 + $0xe8] sm:$0xff] %vm472, 0.0
        %1178 = vst.msk [vmem:[#allocation2 + $0xf0] sm:$0xff] %vm472, 0.0
        %1179 = vst.msk [vmem:[#allocation2 + $0xf8] sm:$0xff] %vm472, 0.0
        %1180 = vst.msk [vmem:[#allocation2 + $0x100] sm:$0xff] %vm472, 0.0
        %1181 = vst.msk [vmem:[#allocation2 + $0x108] sm:$0xff] %vm472, 0.0
        %1182 = vst.msk [vmem:[#allocation2 + $0x110] sm:$0xff] %vm472, 0.0
        %1183 = vst.msk [vmem:[#allocation2 + $0x118] sm:$0xff] %vm472, 0.0
        %1184 = vst.msk [vmem:[#allocation2 + $0x120] sm:$0xff] %vm472, 0.0
        %1185 = vst.msk [vmem:[#allocation2 + $0x128] sm:$0xff] %vm472, 0.0
        %1186 = vst.msk [vmem:[#allocation2 + $0x130] sm:$0xff] %vm472, 0.0
        %1187 = vst.msk [vmem:[#allocation2 + $0x138] sm:$0xff] %vm472, 0.0
        %1188 = vst.msk [vmem:[#allocation2 + $0x140] sm:$0xff] %vm472, 0.0
        %1189 = vst.msk [vmem:[#allocation2 + $0x148] sm:$0xff] %vm472, 0.0
        %1190 = vst.msk [vmem:[#allocation2 + $0x150] sm:$0xff] %vm472, 0.0
        %1191 = vst.msk [vmem:[#allocation2 + $0x158] sm:$0xff] %vm472, 0.0
        %1192 = vst.msk [vmem:[#allocation2 + $0x160] sm:$0xff] %vm472, 0.0
        %1193 = vst.msk [vmem:[#allocation2 + $0x168] sm:$0xff] %vm472, 0.0
        %1194 = vst.msk [vmem:[#allocation2 + $0x170] sm:$0xff] %vm472, 0.0
        %1195 = vst.msk [vmem:[#allocation2 + $0x178] sm:$0xff] %vm472, 0.0
        %1196 = vst.msk [vmem:[#allocation2 + $0x180] sm:$0xff] %vm472, 0.0
        %1197 = vst.msk [vmem:[#allocation2 + $0x188] sm:$0xff] %vm472, 0.0
        %1198 = vst.msk [vmem:[#allocation2 + $0x190] sm:$0xff] %vm472, 0.0
        %1199 = vst.msk [vmem:[#allocation2 + $0x198] sm:$0xff] %vm472, 0.0
        %1200 = vst.msk [vmem:[#allocation2 + $0x1a0] sm:$0xff] %vm472, 0.0
        %1201 = vst.msk [vmem:[#allocation2 + $0x1a8] sm:$0xff] %vm472, 0.0
        %1202 = vst.msk [vmem:[#allocation2 + $0x1b0] sm:$0xff] %vm472, 0.0
        %1203 = vst.msk [vmem:[#allocation2 + $0x1b8] sm:$0xff] %vm472, 0.0
        %1204 = vst.msk [vmem:[#allocation2 + $0x1c0] sm:$0xff] %vm472, 0.0
        %1205 = vst.msk [vmem:[#allocation2 + $0x1c8] sm:$0xff] %vm472, 0.0
        %1206 = vst.msk [vmem:[#allocation2 + $0x1d0] sm:$0xff] %vm472, 0.0
        %1207 = vst.msk [vmem:[#allocation2 + $0x1d8] sm:$0xff] %vm472, 0.0
        %1208 = vst.msk [vmem:[#allocation2 + $0x1e0] sm:$0xff] %vm472, 0.0
        %1209 = vst.msk [vmem:[#allocation2 + $0x1e8] sm:$0xff] %vm472, 0.0
        %1210 = vst.msk [vmem:[#allocation2 + $0x1f0] sm:$0xff] %vm472, 0.0
        %1211 = vst.msk [vmem:[#allocation2 + $0x1f8] sm:$0xff] %vm472, 0.0
        %1212 = vst.msk [vmem:[#allocation2 + $0x200] sm:$0xff] %vm472, 0.0
        %1213 = vst.msk [vmem:[#allocation2 + $0x208] sm:$0xff] %vm472, 0.0
        %1214 = vst.msk [vmem:[#allocation2 + $0x210] sm:$0xff] %vm472, 0.0
        %1215 = vst.msk [vmem:[#allocation2 + $0x218] sm:$0xff] %vm472, 0.0
        %1216 = vst.msk [vmem:[#allocation2 + $0x220] sm:$0xff] %vm472, 0.0
        %1217 = vst.msk [vmem:[#allocation2 + $0x228] sm:$0xff] %vm472, 0.0
        %1218 = vst.msk [vmem:[#allocation2 + $0x230] sm:$0xff] %vm472, 0.0
        %1219 = vst.msk [vmem:[#allocation2 + $0x238] sm:$0xff] %vm472, 0.0
        %s1220 = scalar_lea.vmem [#allocation2], 32
        %1221 = vst.msk [vmem:[%s1220 + $0x8] sm:$0xff] %vm472, %v1116
        %1222 = vst.msk [vmem:[%s1220 + $0x10] sm:$0xff] %vm472, %v1117
        %1223 = vst.msk [vmem:[%s1220 + $0x28] sm:$0xff] %vm472, %v1118
        %1224 = vst.msk [vmem:[%s1220 + $0x30] sm:$0xff] %vm472, %v1119
        %1225 = vst.msk [vmem:[%s1220 + $0x48] sm:$0xff] %vm472, %v1120
        %1226 = vst.msk [vmem:[%s1220 + $0x50] sm:$0xff] %vm472, %v1121
        %1227 = vst.msk [vmem:[%s1220 + $0x68] sm:$0xff] %vm472, %v1122
        %1228 = vst.msk [vmem:[%s1220 + $0x70] sm:$0xff] %vm472, %v1123
        %1229 = vst.msk [vmem:[%s1220 + $0x88] sm:$0xff] %vm472, %v1124
        %1230 = vst.msk [vmem:[%s1220 + $0x90] sm:$0xff] %vm472, %v1125
        %1231 = vst.msk [vmem:[%s1220 + $0xa8] sm:$0xff] %vm472, %v1126
        %1232 = vst.msk [vmem:[%s1220 + $0xb0] sm:$0xff] %vm472, %v1127
        %1233 = vst.msk [vmem:[%s1220 + $0xc8] sm:$0xff] %vm472, %v1128
        %1234 = vst.msk [vmem:[%s1220 + $0xd0] sm:$0xff] %vm472, %v1129
        %1235 = vst.msk [vmem:[%s1220 + $0xe8] sm:$0xff] %vm472, %v1130
        %1236 = vst.msk [vmem:[%s1220 + $0xf0] sm:$0xff] %vm472, %v1131
        %1237 = vst.msk [vmem:[%s1220 + $0x108] sm:$0xff] %vm472, %v1132
        %1238 = vst.msk [vmem:[%s1220 + $0x110] sm:$0xff] %vm472, %v1133
        %1239 = vst.msk [vmem:[%s1220 + $0x128] sm:$0xff] %vm472, %v1134
        %1240 = vst.msk [vmem:[%s1220 + $0x130] sm:$0xff] %vm472, %v1135
        %1241 = vst.msk [vmem:[%s1220 + $0x148] sm:$0xff] %vm472, %v1136
        %1242 = vst.msk [vmem:[%s1220 + $0x150] sm:$0xff] %vm472, %v1137
        %1243 = vst.msk [vmem:[%s1220 + $0x168] sm:$0xff] %vm472, %v1138
        %1244 = vst.msk [vmem:[%s1220 + $0x170] sm:$0xff] %vm472, %v1139
        %1245 = vst.msk [vmem:[%s1220 + $0x188] sm:$0xff] %vm472, %v1140
        %1246 = vst.msk [vmem:[%s1220 + $0x190] sm:$0xff] %vm472, %v1141
        %1247 = vst.msk [vmem:[%s1220 + $0x1a8] sm:$0xff] %vm472, %v1142
        %1248 = vst.msk [vmem:[%s1220 + $0x1b0] sm:$0xff] %vm472, %v1143
        %1249 = vst.msk [vmem:[%s1220 + $0x1c8] sm:$0xff] %vm472, %v1144
        %1250 = vst.msk [vmem:[%s1220 + $0x1d0] sm:$0xff] %vm472, %v1145
        %1251 = vst.msk [vmem:[%s1220 + $0x1e8] sm:$0xff] %vm472, %v1146
        %1252 = vst.msk [vmem:[%s1220 + $0x1f0] sm:$0xff] %vm472, %v1147
        %v1253 = vld [vmem:[#allocation2 + $0x7] sm:$0xff]
        %v1254 = vld [vmem:[#allocation2 + $0xf] sm:$0xff]
        %v1255 = vld [vmem:[#allocation2 + $0x27] sm:$0xff]
        %v1256 = vld [vmem:[#allocation2 + $0x2f] sm:$0xff]
        %v1257 = vld [vmem:[#allocation2 + $0x47] sm:$0xff]
        %v1258 = vld [vmem:[#allocation2 + $0x4f] sm:$0xff]
        %v1259 = vld [vmem:[#allocation2 + $0x67] sm:$0xff]
        %v1260 = vld [vmem:[#allocation2 + $0x6f] sm:$0xff]
        %v1261 = vld [vmem:[#allocation2 + $0x87] sm:$0xff]
        %v1262 = vld [vmem:[#allocation2 + $0x8f] sm:$0xff]
        %v1263 = vld [vmem:[#allocation2 + $0xa7] sm:$0xff]
        %v1264 = vld [vmem:[#allocation2 + $0xaf] sm:$0xff]
        %v1265 = vld [vmem:[#allocation2 + $0xc7] sm:$0xff]
        %v1266 = vld [vmem:[#allocation2 + $0xcf] sm:$0xff]
        %v1267 = vld [vmem:[#allocation2 + $0xe7] sm:$0xff]
        %v1268 = vld [vmem:[#allocation2 + $0xef] sm:$0xff]
        %v1269 = vld [vmem:[#allocation2 + $0x107] sm:$0xff]
        %v1270 = vld [vmem:[#allocation2 + $0x10f] sm:$0xff]
        %v1271 = vld [vmem:[#allocation2 + $0x127] sm:$0xff]
        %v1272 = vld [vmem:[#allocation2 + $0x12f] sm:$0xff]
        %v1273 = vld [vmem:[#allocation2 + $0x147] sm:$0xff]
        %v1274 = vld [vmem:[#allocation2 + $0x14f] sm:$0xff]
        %v1275 = vld [vmem:[#allocation2 + $0x167] sm:$0xff]
        %v1276 = vld [vmem:[#allocation2 + $0x16f] sm:$0xff]
        %v1277 = vld [vmem:[#allocation2 + $0x187] sm:$0xff]
        %v1278 = vld [vmem:[#allocation2 + $0x18f] sm:$0xff]
        %v1279 = vld [vmem:[#allocation2 + $0x1a7] sm:$0xff]
        %v1280 = vld [vmem:[#allocation2 + $0x1af] sm:$0xff]
        %v1281 = vld [vmem:[#allocation2 + $0x1c7] sm:$0xff]
        %v1282 = vld [vmem:[#allocation2 + $0x1cf] sm:$0xff]
        %v1283 = vld [vmem:[#allocation2 + $0x1e7] sm:$0xff]
        %v1284 = vld [vmem:[#allocation2 + $0x1ef] sm:$0xff]
        %1285 = vst.msk [vmem:[#allocation3] sm:$0xff] %vm472, %v1253
        %1286 = vst.msk [vmem:[#allocation3 + $0x8] sm:$0xff] %vm472, %v1254
        %1287 = vst.msk [vmem:[#allocation3 + $0x10] sm:$0xff] %vm472, %v1255
        %1288 = vst.msk [vmem:[#allocation3 + $0x18] sm:$0xff] %vm472, %v1256
        %1289 = vst.msk [vmem:[#allocation3 + $0x20] sm:$0xff] %vm472, %v1257
        %1290 = vst.msk [vmem:[#allocation3 + $0x28] sm:$0xff] %vm472, %v1258
        %1291 = vst.msk [vmem:[#allocation3 + $0x30] sm:$0xff] %vm472, %v1259
        %1292 = vst.msk [vmem:[#allocation3 + $0x38] sm:$0xff] %vm472, %v1260
        %1293 = vst.msk [vmem:[#allocation3 + $0x40] sm:$0xff] %vm472, %v1261
        %1294 = vst.msk [vmem:[#allocation3 + $0x48] sm:$0xff] %vm472, %v1262
        %1295 = vst.msk [vmem:[#allocation3 + $0x50] sm:$0xff] %vm472, %v1263
        %1296 = vst.msk [vmem:[#allocation3 + $0x58] sm:$0xff] %vm472, %v1264
        %1297 = vst.msk [vmem:[#allocation3 + $0x60] sm:$0xff] %vm472, %v1265
        %1298 = vst.msk [vmem:[#allocation3 + $0x68] sm:$0xff] %vm472, %v1266
        %1299 = vst.msk [vmem:[#allocation3 + $0x70] sm:$0xff] %vm472, %v1267
        %1300 = vst.msk [vmem:[#allocation3 + $0x78] sm:$0xff] %vm472, %v1268
        %1301 = vst.msk [vmem:[#allocation3 + $0x80] sm:$0xff] %vm472, %v1269
        %1302 = vst.msk [vmem:[#allocation3 + $0x88] sm:$0xff] %vm472, %v1270
        %1303 = vst.msk [vmem:[#allocation3 + $0x90] sm:$0xff] %vm472, %v1271
        %1304 = vst.msk [vmem:[#allocation3 + $0x98] sm:$0xff] %vm472, %v1272
        %1305 = vst.msk [vmem:[#allocation3 + $0xa0] sm:$0xff] %vm472, %v1273
        %1306 = vst.msk [vmem:[#allocation3 + $0xa8] sm:$0xff] %vm472, %v1274
        %1307 = vst.msk [vmem:[#allocation3 + $0xb0] sm:$0xff] %vm472, %v1275
        %1308 = vst.msk [vmem:[#allocation3 + $0xb8] sm:$0xff] %vm472, %v1276
        %1309 = vst.msk [vmem:[#allocation3 + $0xc0] sm:$0xff] %vm472, %v1277
        %1310 = vst.msk [vmem:[#allocation3 + $0xc8] sm:$0xff] %vm472, %v1278
        %1311 = vst.msk [vmem:[#allocation3 + $0xd0] sm:$0xff] %vm472, %v1279
        %1312 = vst.msk [vmem:[#allocation3 + $0xd8] sm:$0xff] %vm472, %v1280
        %1313 = vst.msk [vmem:[#allocation3 + $0xe0] sm:$0xff] %vm472, %v1281
        %1314 = vst.msk [vmem:[#allocation3 + $0xe8] sm:$0xff] %vm472, %v1282
        %1315 = vst.msk [vmem:[#allocation3 + $0xf0] sm:$0xff] %vm472, %v1283
        %1316 = vst.msk [vmem:[#allocation3 + $0xf8] sm:$0xff] %vm472, %v1284
        %v1317 = vld [vmem:[#allocation2 + $0x8] sm:$0xff]
        %v1318 = vld [vmem:[#allocation2 + $0x10] sm:$0xff]
        %v1319 = vld [vmem:[#allocation2 + $0x28] sm:$0xff]
        %v1320 = vld [vmem:[#allocation2 + $0x30] sm:$0xff]
        %v1321 = vld [vmem:[#allocation2 + $0x48] sm:$0xff]
        %v1322 = vld [vmem:[#allocation2 + $0x50] sm:$0xff]
        %v1323 = vld [vmem:[#allocation2 + $0x68] sm:$0xff]
        %v1324 = vld [vmem:[#allocation2 + $0x70] sm:$0xff]
        %v1325 = vld [vmem:[#allocation2 + $0x88] sm:$0xff]
        %v1326 = vld [vmem:[#allocation2 + $0x90] sm:$0xff]
        %v1327 = vld [vmem:[#allocation2 + $0xa8] sm:$0xff]
        %v1328 = vld [vmem:[#allocation2 + $0xb0] sm:$0xff]
        %v1329 = vld [vmem:[#allocation2 + $0xc8] sm:$0xff]
        %v1330 = vld [vmem:[#allocation2 + $0xd0] sm:$0xff]
        %v1331 = vld [vmem:[#allocation2 + $0xe8] sm:$0xff]
        %v1332 = vld [vmem:[#allocation2 + $0xf0] sm:$0xff]
        %v1333 = vld [vmem:[#allocation2 + $0x108] sm:$0xff]
        %v1334 = vld [vmem:[#allocation2 + $0x110] sm:$0xff]
        %v1335 = vld [vmem:[#allocation2 + $0x128] sm:$0xff]
        %v1336 = vld [vmem:[#allocation2 + $0x130] sm:$0xff]
        %v1337 = vld [vmem:[#allocation2 + $0x148] sm:$0xff]
        %v1338 = vld [vmem:[#allocation2 + $0x150] sm:$0xff]
        %v1339 = vld [vmem:[#allocation2 + $0x168] sm:$0xff]
        %v1340 = vld [vmem:[#allocation2 + $0x170] sm:$0xff]
        %v1341 = vld [vmem:[#allocation2 + $0x188] sm:$0xff]
        %v1342 = vld [vmem:[#allocation2 + $0x190] sm:$0xff]
        %v1343 = vld [vmem:[#allocation2 + $0x1a8] sm:$0xff]
        %v1344 = vld [vmem:[#allocation2 + $0x1b0] sm:$0xff]
        %v1345 = vld [vmem:[#allocation2 + $0x1c8] sm:$0xff]
        %v1346 = vld [vmem:[#allocation2 + $0x1d0] sm:$0xff]
        %v1347 = vld [vmem:[#allocation2 + $0x1e8] sm:$0xff]
        %v1348 = vld [vmem:[#allocation2 + $0x1f0] sm:$0xff]
        %1381 = vrot.lane.b32.xlu0 %v1317, 4
        %v1382 = vpop.permute.xlu0 %1381
        %1383 = vrot.lane.b32.xlu0 %v1318, 4
        %v1384 = vpop.permute.xlu0 %1383
        %1385 = vrot.lane.b32.xlu0 %v1319, 4
        %v1386 = vpop.permute.xlu0 %1385
        %1387 = vrot.lane.b32.xlu0 %v1320, 4
        %v1388 = vpop.permute.xlu0 %1387
        %1389 = vrot.lane.b32.xlu0 %v1321, 4
        %v1390 = vpop.permute.xlu0 %1389
        %1391 = vrot.lane.b32.xlu0 %v1322, 4
        %v1392 = vpop.permute.xlu0 %1391
        %1393 = vrot.lane.b32.xlu0 %v1323, 4
        %v1394 = vpop.permute.xlu0 %1393
        %1395 = vrot.lane.b32.xlu0 %v1324, 4
        %v1396 = vpop.permute.xlu0 %1395
        %1397 = vrot.lane.b32.xlu0 %v1325, 4
        %v1398 = vpop.permute.xlu0 %1397
        %1399 = vrot.lane.b32.xlu0 %v1326, 4
        %v1400 = vpop.permute.xlu0 %1399
        %1401 = vrot.lane.b32.xlu0 %v1327, 4
        %v1402 = vpop.permute.xlu0 %1401
        %1403 = vrot.lane.b32.xlu0 %v1328, 4
        %v1404 = vpop.permute.xlu0 %1403
        %1405 = vrot.lane.b32.xlu0 %v1329, 4
        %v1406 = vpop.permute.xlu0 %1405
        %1407 = vrot.lane.b32.xlu0 %v1330, 4
        %v1408 = vpop.permute.xlu0 %1407
        %1409 = vrot.lane.b32.xlu0 %v1331, 4
        %v1410 = vpop.permute.xlu0 %1409
        %1411 = vrot.lane.b32.xlu0 %v1332, 4
        %v1412 = vpop.permute.xlu0 %1411
        %1413 = vrot.lane.b32.xlu0 %v1333, 4
        %v1414 = vpop.permute.xlu0 %1413
        %1415 = vrot.lane.b32.xlu0 %v1334, 4
        %v1416 = vpop.permute.xlu0 %1415
        %1417 = vrot.lane.b32.xlu0 %v1335, 4
        %v1418 = vpop.permute.xlu0 %1417
        %1419 = vrot.lane.b32.xlu0 %v1336, 4
        %v1420 = vpop.permute.xlu0 %1419
        %1421 = vrot.lane.b32.xlu0 %v1337, 4
        %v1422 = vpop.permute.xlu0 %1421
        %1423 = vrot.lane.b32.xlu0 %v1338, 4
        %v1424 = vpop.permute.xlu0 %1423
        %1425 = vrot.lane.b32.xlu0 %v1339, 4
        %v1426 = vpop.permute.xlu0 %1425
        %1427 = vrot.lane.b32.xlu0 %v1340, 4
        %v1428 = vpop.permute.xlu0 %1427
        %1429 = vrot.lane.b32.xlu0 %v1341, 4
        %v1430 = vpop.permute.xlu0 %1429
        %1431 = vrot.lane.b32.xlu0 %v1342, 4
        %v1432 = vpop.permute.xlu0 %1431
        %1433 = vrot.lane.b32.xlu0 %v1343, 4
        %v1434 = vpop.permute.xlu0 %1433
        %1435 = vrot.lane.b32.xlu0 %v1344, 4
        %v1436 = vpop.permute.xlu0 %1435
        %1437 = vrot.lane.b32.xlu0 %v1345, 4
        %v1438 = vpop.permute.xlu0 %1437
        %1439 = vrot.lane.b32.xlu0 %v1346, 4
        %v1440 = vpop.permute.xlu0 %1439
        %1441 = vrot.lane.b32.xlu0 %v1347, 4
        %v1442 = vpop.permute.xlu0 %1441
        %1443 = vrot.lane.b32.xlu0 %v1348, 4
        %v1444 = vpop.permute.xlu0 %1443
        %vm1477 = vcmask 64544
        %1478 = vst.msk [vmem:[#allocation3] sm:$0xff] %vm1477, %v1382
        %1479 = vst.msk [vmem:[#allocation3 + $0x8] sm:$0xff] %vm1477, %v1384
        %1480 = vst.msk [vmem:[#allocation3 + $0x10] sm:$0xff] %vm1477, %v1386
        %1481 = vst.msk [vmem:[#allocation3 + $0x18] sm:$0xff] %vm1477, %v1388
        %1482 = vst.msk [vmem:[#allocation3 + $0x20] sm:$0xff] %vm1477, %v1390
        %1483 = vst.msk [vmem:[#allocation3 + $0x28] sm:$0xff] %vm1477, %v1392
        %1484 = vst.msk [vmem:[#allocation3 + $0x30] sm:$0xff] %vm1477, %v1394
        %1485 = vst.msk [vmem:[#allocation3 + $0x38] sm:$0xff] %vm1477, %v1396
        %1486 = vst.msk [vmem:[#allocation3 + $0x40] sm:$0xff] %vm1477, %v1398
        %1487 = vst.msk [vmem:[#allocation3 + $0x48] sm:$0xff] %vm1477, %v1400
        %1488 = vst.msk [vmem:[#allocation3 + $0x50] sm:$0xff] %vm1477, %v1402
        %1489 = vst.msk [vmem:[#allocation3 + $0x58] sm:$0xff] %vm1477, %v1404
        %1490 = vst.msk [vmem:[#allocation3 + $0x60] sm:$0xff] %vm1477, %v1406
        %1491 = vst.msk [vmem:[#allocation3 + $0x68] sm:$0xff] %vm1477, %v1408
        %1492 = vst.msk [vmem:[#allocation3 + $0x70] sm:$0xff] %vm1477, %v1410
        %1493 = vst.msk [vmem:[#allocation3 + $0x78] sm:$0xff] %vm1477, %v1412
        %1494 = vst.msk [vmem:[#allocation3 + $0x80] sm:$0xff] %vm1477, %v1414
        %1495 = vst.msk [vmem:[#allocation3 + $0x88] sm:$0xff] %vm1477, %v1416
        %1496 = vst.msk [vmem:[#allocation3 + $0x90] sm:$0xff] %vm1477, %v1418
        %1497 = vst.msk [vmem:[#allocation3 + $0x98] sm:$0xff] %vm1477, %v1420
        %1498 = vst.msk [vmem:[#allocation3 + $0xa0] sm:$0xff] %vm1477, %v1422
        %1499 = vst.msk [vmem:[#allocation3 + $0xa8] sm:$0xff] %vm1477, %v1424
        %1500 = vst.msk [vmem:[#allocation3 + $0xb0] sm:$0xff] %vm1477, %v1426
        %1501 = vst.msk [vmem:[#allocation3 + $0xb8] sm:$0xff] %vm1477, %v1428
        %1502 = vst.msk [vmem:[#allocation3 + $0xc0] sm:$0xff] %vm1477, %v1430
        %1503 = vst.msk [vmem:[#allocation3 + $0xc8] sm:$0xff] %vm1477, %v1432
        %1504 = vst.msk [vmem:[#allocation3 + $0xd0] sm:$0xff] %vm1477, %v1434
        %1505 = vst.msk [vmem:[#allocation3 + $0xd8] sm:$0xff] %vm1477, %v1436
        %1506 = vst.msk [vmem:[#allocation3 + $0xe0] sm:$0xff] %vm1477, %v1438
        %1507 = vst.msk [vmem:[#allocation3 + $0xe8] sm:$0xff] %vm1477, %v1440
        %1508 = vst.msk [vmem:[#allocation3 + $0xf0] sm:$0xff] %vm1477, %v1442
        %1509 = vst.msk [vmem:[#allocation3 + $0xf8] sm:$0xff] %vm1477, %v1444
        %v1510 = vld [vmem:[#allocation2 + $0x9] sm:$0xff]
        %v1511 = vld [vmem:[#allocation2 + $0x11] sm:$0xff]
        %v1512 = vld [vmem:[#allocation2 + $0x29] sm:$0xff]
        %v1513 = vld [vmem:[#allocation2 + $0x31] sm:$0xff]
        %v1514 = vld [vmem:[#allocation2 + $0x49] sm:$0xff]
        %v1515 = vld [vmem:[#allocation2 + $0x51] sm:$0xff]
        %v1516 = vld [vmem:[#allocation2 + $0x69] sm:$0xff]
        %v1517 = vld [vmem:[#allocation2 + $0x71] sm:$0xff]
        %v1518 = vld [vmem:[#allocation2 + $0x89] sm:$0xff]
        %v1519 = vld [vmem:[#allocation2 + $0x91] sm:$0xff]
        %v1520 = vld [vmem:[#allocation2 + $0xa9] sm:$0xff]
        %v1521 = vld [vmem:[#allocation2 + $0xb1] sm:$0xff]
        %v1522 = vld [vmem:[#allocation2 + $0xc9] sm:$0xff]
        %v1523 = vld [vmem:[#allocation2 + $0xd1] sm:$0xff]
        %v1524 = vld [vmem:[#allocation2 + $0xe9] sm:$0xff]
        %v1525 = vld [vmem:[#allocation2 + $0xf1] sm:$0xff]
        %v1526 = vld [vmem:[#allocation2 + $0x109] sm:$0xff]
        %v1527 = vld [vmem:[#allocation2 + $0x111] sm:$0xff]
        %v1528 = vld [vmem:[#allocation2 + $0x129] sm:$0xff]
        %v1529 = vld [vmem:[#allocation2 + $0x131] sm:$0xff]
        %v1530 = vld [vmem:[#allocation2 + $0x149] sm:$0xff]
        %v1531 = vld [vmem:[#allocation2 + $0x151] sm:$0xff]
        %v1532 = vld [vmem:[#allocation2 + $0x169] sm:$0xff]
        %v1533 = vld [vmem:[#allocation2 + $0x171] sm:$0xff]
        %v1534 = vld [vmem:[#allocation2 + $0x189] sm:$0xff]
        %v1535 = vld [vmem:[#allocation2 + $0x191] sm:$0xff]
        %v1536 = vld [vmem:[#allocation2 + $0x1a9] sm:$0xff]
        %v1537 = vld [vmem:[#allocation2 + $0x1b1] sm:$0xff]
        %v1538 = vld [vmem:[#allocation2 + $0x1c9] sm:$0xff]
        %v1539 = vld [vmem:[#allocation2 + $0x1d1] sm:$0xff]
        %v1540 = vld [vmem:[#allocation2 + $0x1e9] sm:$0xff]
        %v1541 = vld [vmem:[#allocation2 + $0x1f1] sm:$0xff]
        %1574 = vrot.lane.b32.xlu0 %v1510, 8
        %v1575 = vpop.permute.xlu0 %1574
        %1576 = vrot.lane.b32.xlu0 %v1511, 8
        %v1577 = vpop.permute.xlu0 %1576
        %1578 = vrot.lane.b32.xlu0 %v1512, 8
        %v1579 = vpop.permute.xlu0 %1578
        %1580 = vrot.lane.b32.xlu0 %v1513, 8
        %v1581 = vpop.permute.xlu0 %1580
        %1582 = vrot.lane.b32.xlu0 %v1514, 8
        %v1583 = vpop.permute.xlu0 %1582
        %1584 = vrot.lane.b32.xlu0 %v1515, 8
        %v1585 = vpop.permute.xlu0 %1584
        %1586 = vrot.lane.b32.xlu0 %v1516, 8
        %v1587 = vpop.permute.xlu0 %1586
        %1588 = vrot.lane.b32.xlu0 %v1517, 8
        %v1589 = vpop.permute.xlu0 %1588
        %1590 = vrot.lane.b32.xlu0 %v1518, 8
        %v1591 = vpop.permute.xlu0 %1590
        %1592 = vrot.lane.b32.xlu0 %v1519, 8
        %v1593 = vpop.permute.xlu0 %1592
        %1594 = vrot.lane.b32.xlu0 %v1520, 8
        %v1595 = vpop.permute.xlu0 %1594
        %1596 = vrot.lane.b32.xlu0 %v1521, 8
        %v1597 = vpop.permute.xlu0 %1596
        %1598 = vrot.lane.b32.xlu0 %v1522, 8
        %v1599 = vpop.permute.xlu0 %1598
        %1600 = vrot.lane.b32.xlu0 %v1523, 8
        %v1601 = vpop.permute.xlu0 %1600
        %1602 = vrot.lane.b32.xlu0 %v1524, 8
        %v1603 = vpop.permute.xlu0 %1602
        %1604 = vrot.lane.b32.xlu0 %v1525, 8
        %v1605 = vpop.permute.xlu0 %1604
        %1606 = vrot.lane.b32.xlu0 %v1526, 8
        %v1607 = vpop.permute.xlu0 %1606
        %1608 = vrot.lane.b32.xlu0 %v1527, 8
        %v1609 = vpop.permute.xlu0 %1608
        %1610 = vrot.lane.b32.xlu0 %v1528, 8
        %v1611 = vpop.permute.xlu0 %1610
        %1612 = vrot.lane.b32.xlu0 %v1529, 8
        %v1613 = vpop.permute.xlu0 %1612
        %1614 = vrot.lane.b32.xlu0 %v1530, 8
        %v1615 = vpop.permute.xlu0 %1614
        %1616 = vrot.lane.b32.xlu0 %v1531, 8
        %v1617 = vpop.permute.xlu0 %1616
        %1618 = vrot.lane.b32.xlu0 %v1532, 8
        %v1619 = vpop.permute.xlu0 %1618
        %1620 = vrot.lane.b32.xlu0 %v1533, 8
        %v1621 = vpop.permute.xlu0 %1620
        %1622 = vrot.lane.b32.xlu0 %v1534, 8
        %v1623 = vpop.permute.xlu0 %1622
        %1624 = vrot.lane.b32.xlu0 %v1535, 8
        %v1625 = vpop.permute.xlu0 %1624
        %1626 = vrot.lane.b32.xlu0 %v1536, 8
        %v1627 = vpop.permute.xlu0 %1626
        %1628 = vrot.lane.b32.xlu0 %v1537, 8
        %v1629 = vpop.permute.xlu0 %1628
        %1630 = vrot.lane.b32.xlu0 %v1538, 8
        %v1631 = vpop.permute.xlu0 %1630
        %1632 = vrot.lane.b32.xlu0 %v1539, 8
        %v1633 = vpop.permute.xlu0 %1632
        %1634 = vrot.lane.b32.xlu0 %v1540, 8
        %v1635 = vpop.permute.xlu0 %1634
        %1636 = vrot.lane.b32.xlu0 %v1541, 8
        %v1637 = vpop.permute.xlu0 %1636
        %vm1670 = vcmask 97344
        %1671 = vst.msk [vmem:[#allocation3] sm:$0xff] %vm1670, %v1575
        %1672 = vst.msk [vmem:[#allocation3 + $0x8] sm:$0xff] %vm1670, %v1577
        %1673 = vst.msk [vmem:[#allocation3 + $0x10] sm:$0xff] %vm1670, %v1579
        %1674 = vst.msk [vmem:[#allocation3 + $0x18] sm:$0xff] %vm1670, %v1581
        %1675 = vst.msk [vmem:[#allocation3 + $0x20] sm:$0xff] %vm1670, %v1583
        %1676 = vst.msk [vmem:[#allocation3 + $0x28] sm:$0xff] %vm1670, %v1585
        %1677 = vst.msk [vmem:[#allocation3 + $0x30] sm:$0xff] %vm1670, %v1587
        %1678 = vst.msk [vmem:[#allocation3 + $0x38] sm:$0xff] %vm1670, %v1589
        %1679 = vst.msk [vmem:[#allocation3 + $0x40] sm:$0xff] %vm1670, %v1591
        %1680 = vst.msk [vmem:[#allocation3 + $0x48] sm:$0xff] %vm1670, %v1593
        %1681 = vst.msk [vmem:[#allocation3 + $0x50] sm:$0xff] %vm1670, %v1595
        %1682 = vst.msk [vmem:[#allocation3 + $0x58] sm:$0xff] %vm1670, %v1597
        %1683 = vst.msk [vmem:[#allocation3 + $0x60] sm:$0xff] %vm1670, %v1599
        %1684 = vst.msk [vmem:[#allocation3 + $0x68] sm:$0xff] %vm1670, %v1601
        %1685 = vst.msk [vmem:[#allocation3 + $0x70] sm:$0xff] %vm1670, %v1603
        %1686 = vst.msk [vmem:[#allocation3 + $0x78] sm:$0xff] %vm1670, %v1605
        %1687 = vst.msk [vmem:[#allocation3 + $0x80] sm:$0xff] %vm1670, %v1607
        %1688 = vst.msk [vmem:[#allocation3 + $0x88] sm:$0xff] %vm1670, %v1609
        %1689 = vst.msk [vmem:[#allocation3 + $0x90] sm:$0xff] %vm1670, %v1611
        %1690 = vst.msk [vmem:[#allocation3 + $0x98] sm:$0xff] %vm1670, %v1613
        %1691 = vst.msk [vmem:[#allocation3 + $0xa0] sm:$0xff] %vm1670, %v1615
        %1692 = vst.msk [vmem:[#allocation3 + $0xa8] sm:$0xff] %vm1670, %v1617
        %1693 = vst.msk [vmem:[#allocation3 + $0xb0] sm:$0xff] %vm1670, %v1619
        %1694 = vst.msk [vmem:[#allocation3 + $0xb8] sm:$0xff] %vm1670, %v1621
        %1695 = vst.msk [vmem:[#allocation3 + $0xc0] sm:$0xff] %vm1670, %v1623
        %1696 = vst.msk [vmem:[#allocation3 + $0xc8] sm:$0xff] %vm1670, %v1625
        %1697 = vst.msk [vmem:[#allocation3 + $0xd0] sm:$0xff] %vm1670, %v1627
        %1698 = vst.msk [vmem:[#allocation3 + $0xd8] sm:$0xff] %vm1670, %v1629
        %1699 = vst.msk [vmem:[#allocation3 + $0xe0] sm:$0xff] %vm1670, %v1631
        %1700 = vst.msk [vmem:[#allocation3 + $0xe8] sm:$0xff] %vm1670, %v1633
        %1701 = vst.msk [vmem:[#allocation3 + $0xf0] sm:$0xff] %vm1670, %v1635
        %1702 = vst.msk [vmem:[#allocation3 + $0xf8] sm:$0xff] %vm1670, %v1637
        %v1703 = vld [vmem:[%s1220 + $0x7] sm:$0xff]
        %v1704 = vld [vmem:[%s1220 + $0xf] sm:$0xff]
        %v1705 = vld [vmem:[%s1220 + $0x27] sm:$0xff]
        %v1706 = vld [vmem:[%s1220 + $0x2f] sm:$0xff]
        %v1707 = vld [vmem:[%s1220 + $0x47] sm:$0xff]
        %v1708 = vld [vmem:[%s1220 + $0x4f] sm:$0xff]
        %v1709 = vld [vmem:[%s1220 + $0x67] sm:$0xff]
        %v1710 = vld [vmem:[%s1220 + $0x6f] sm:$0xff]
        %v1711 = vld [vmem:[%s1220 + $0x87] sm:$0xff]
        %v1712 = vld [vmem:[%s1220 + $0x8f] sm:$0xff]
        %v1713 = vld [vmem:[%s1220 + $0xa7] sm:$0xff]
        %v1714 = vld [vmem:[%s1220 + $0xaf] sm:$0xff]
        %v1715 = vld [vmem:[%s1220 + $0xc7] sm:$0xff]
        %v1716 = vld [vmem:[%s1220 + $0xcf] sm:$0xff]
        %v1717 = vld [vmem:[%s1220 + $0xe7] sm:$0xff]
        %v1718 = vld [vmem:[%s1220 + $0xef] sm:$0xff]
        %v1719 = vld [vmem:[%s1220 + $0x107] sm:$0xff]
        %v1720 = vld [vmem:[%s1220 + $0x10f] sm:$0xff]
        %v1721 = vld [vmem:[%s1220 + $0x127] sm:$0xff]
        %v1722 = vld [vmem:[%s1220 + $0x12f] sm:$0xff]
        %v1723 = vld [vmem:[%s1220 + $0x147] sm:$0xff]
        %v1724 = vld [vmem:[%s1220 + $0x14f] sm:$0xff]
        %v1725 = vld [vmem:[%s1220 + $0x167] sm:$0xff]
        %v1726 = vld [vmem:[%s1220 + $0x16f] sm:$0xff]
        %v1727 = vld [vmem:[%s1220 + $0x187] sm:$0xff]
        %v1728 = vld [vmem:[%s1220 + $0x18f] sm:$0xff]
        %v1729 = vld [vmem:[%s1220 + $0x1a7] sm:$0xff]
        %v1730 = vld [vmem:[%s1220 + $0x1af] sm:$0xff]
        %v1731 = vld [vmem:[%s1220 + $0x1c7] sm:$0xff]
        %v1732 = vld [vmem:[%s1220 + $0x1cf] sm:$0xff]
        %v1733 = vld [vmem:[%s1220 + $0x1e7] sm:$0xff]
        %v1734 = vld [vmem:[%s1220 + $0x1ef] sm:$0xff]
        %1767 = vrot.lane.b32.xlu0 %v1703, 12
        %v1768 = vpop.permute.xlu0 %1767
        %1769 = vrot.lane.b32.xlu0 %v1704, 12
        %v1770 = vpop.permute.xlu0 %1769
        %1771 = vrot.lane.b32.xlu0 %v1705, 12
        %v1772 = vpop.permute.xlu0 %1771
        %1773 = vrot.lane.b32.xlu0 %v1706, 12
        %v1774 = vpop.permute.xlu0 %1773
        %1775 = vrot.lane.b32.xlu0 %v1707, 12
        %v1776 = vpop.permute.xlu0 %1775
        %1777 = vrot.lane.b32.xlu0 %v1708, 12
        %v1778 = vpop.permute.xlu0 %1777
        %1779 = vrot.lane.b32.xlu0 %v1709, 12
        %v1780 = vpop.permute.xlu0 %1779
        %1781 = vrot.lane.b32.xlu0 %v1710, 12
        %v1782 = vpop.permute.xlu0 %1781
        %1783 = vrot.lane.b32.xlu0 %v1711, 12
        %v1784 = vpop.permute.xlu0 %1783
        %1785 = vrot.lane.b32.xlu0 %v1712, 12
        %v1786 = vpop.permute.xlu0 %1785
        %1787 = vrot.lane.b32.xlu0 %v1713, 12
        %v1788 = vpop.permute.xlu0 %1787
        %1789 = vrot.lane.b32.xlu0 %v1714, 12
        %v1790 = vpop.permute.xlu0 %1789
        %1791 = vrot.lane.b32.xlu0 %v1715, 12
        %v1792 = vpop.permute.xlu0 %1791
        %1793 = vrot.lane.b32.xlu0 %v1716, 12
        %v1794 = vpop.permute.xlu0 %1793
        %1795 = vrot.lane.b32.xlu0 %v1717, 12
        %v1796 = vpop.permute.xlu0 %1795
        %1797 = vrot.lane.b32.xlu0 %v1718, 12
        %v1798 = vpop.permute.xlu0 %1797
        %1799 = vrot.lane.b32.xlu0 %v1719, 12
        %v1800 = vpop.permute.xlu0 %1799
        %1801 = vrot.lane.b32.xlu0 %v1720, 12
        %v1802 = vpop.permute.xlu0 %1801
        %1803 = vrot.lane.b32.xlu0 %v1721, 12
        %v1804 = vpop.permute.xlu0 %1803
        %1805 = vrot.lane.b32.xlu0 %v1722, 12
        %v1806 = vpop.permute.xlu0 %1805
        %1807 = vrot.lane.b32.xlu0 %v1723, 12
        %v1808 = vpop.permute.xlu0 %1807
        %1809 = vrot.lane.b32.xlu0 %v1724, 12
        %v1810 = vpop.permute.xlu0 %1809
        %1811 = vrot.lane.b32.xlu0 %v1725, 12
        %v1812 = vpop.permute.xlu0 %1811
        %1813 = vrot.lane.b32.xlu0 %v1726, 12
        %v1814 = vpop.permute.xlu0 %1813
        %1815 = vrot.lane.b32.xlu0 %v1727, 12
        %v1816 = vpop.permute.xlu0 %1815
        %1817 = vrot.lane.b32.xlu0 %v1728, 12
        %v1818 = vpop.permute.xlu0 %1817
        %1819 = vrot.lane.b32.xlu0 %v1729, 12
        %v1820 = vpop.permute.xlu0 %1819
        %1821 = vrot.lane.b32.xlu0 %v1730, 12
        %v1822 = vpop.permute.xlu0 %1821
        %1823 = vrot.lane.b32.xlu0 %v1731, 12
        %v1824 = vpop.permute.xlu0 %1823
        %1825 = vrot.lane.b32.xlu0 %v1732, 12
        %v1826 = vpop.permute.xlu0 %1825
        %1827 = vrot.lane.b32.xlu0 %v1733, 12
        %v1828 = vpop.permute.xlu0 %1827
        %1829 = vrot.lane.b32.xlu0 %v1734, 12
        %v1830 = vpop.permute.xlu0 %1829
        %vm1863 = vcmask 130144
        %1864 = vst.msk [vmem:[#allocation3] sm:$0xff] %vm1863, %v1768
        %1865 = vst.msk [vmem:[#allocation3 + $0x8] sm:$0xff] %vm1863, %v1770
        %1866 = vst.msk [vmem:[#allocation3 + $0x10] sm:$0xff] %vm1863, %v1772
        %1867 = vst.msk [vmem:[#allocation3 + $0x18] sm:$0xff] %vm1863, %v1774
        %1868 = vst.msk [vmem:[#allocation3 + $0x20] sm:$0xff] %vm1863, %v1776
        %1869 = vst.msk [vmem:[#allocation3 + $0x28] sm:$0xff] %vm1863, %v1778
        %1870 = vst.msk [vmem:[#allocation3 + $0x30] sm:$0xff] %vm1863, %v1780
        %1871 = vst.msk [vmem:[#allocation3 + $0x38] sm:$0xff] %vm1863, %v1782
        %1872 = vst.msk [vmem:[#allocation3 + $0x40] sm:$0xff] %vm1863, %v1784
        %1873 = vst.msk [vmem:[#allocation3 + $0x48] sm:$0xff] %vm1863, %v1786
        %1874 = vst.msk [vmem:[#allocation3 + $0x50] sm:$0xff] %vm1863, %v1788
        %1875 = vst.msk [vmem:[#allocation3 + $0x58] sm:$0xff] %vm1863, %v1790
        %1876 = vst.msk [vmem:[#allocation3 + $0x60] sm:$0xff] %vm1863, %v1792
        %1877 = vst.msk [vmem:[#allocation3 + $0x68] sm:$0xff] %vm1863, %v1794
        %1878 = vst.msk [vmem:[#allocation3 + $0x70] sm:$0xff] %vm1863, %v1796
        %1879 = vst.msk [vmem:[#allocation3 + $0x78] sm:$0xff] %vm1863, %v1798
        %1880 = vst.msk [vmem:[#allocation3 + $0x80] sm:$0xff] %vm1863, %v1800
        %1881 = vst.msk [vmem:[#allocation3 + $0x88] sm:$0xff] %vm1863, %v1802
        %1882 = vst.msk [vmem:[#allocation3 + $0x90] sm:$0xff] %vm1863, %v1804
        %1883 = vst.msk [vmem:[#allocation3 + $0x98] sm:$0xff] %vm1863, %v1806
        %1884 = vst.msk [vmem:[#allocation3 + $0xa0] sm:$0xff] %vm1863, %v1808
        %1885 = vst.msk [vmem:[#allocation3 + $0xa8] sm:$0xff] %vm1863, %v1810
        %1886 = vst.msk [vmem:[#allocation3 + $0xb0] sm:$0xff] %vm1863, %v1812
        %1887 = vst.msk [vmem:[#allocation3 + $0xb8] sm:$0xff] %vm1863, %v1814
        %1888 = vst.msk [vmem:[#allocation3 + $0xc0] sm:$0xff] %vm1863, %v1816
        %1889 = vst.msk [vmem:[#allocation3 + $0xc8] sm:$0xff] %vm1863, %v1818
        %1890 = vst.msk [vmem:[#allocation3 + $0xd0] sm:$0xff] %vm1863, %v1820
        %1891 = vst.msk [vmem:[#allocation3 + $0xd8] sm:$0xff] %vm1863, %v1822
        %1892 = vst.msk [vmem:[#allocation3 + $0xe0] sm:$0xff] %vm1863, %v1824
        %1893 = vst.msk [vmem:[#allocation3 + $0xe8] sm:$0xff] %vm1863, %v1826
        %1894 = vst.msk [vmem:[#allocation3 + $0xf0] sm:$0xff] %vm1863, %v1828
        %1895 = vst.msk [vmem:[#allocation3 + $0xf8] sm:$0xff] %vm1863, %v1830
        %v1896 = vld [vmem:[%s1220 + $0x8] sm:$0xff]
        %v1897 = vld [vmem:[%s1220 + $0x10] sm:$0xff]
        %v1898 = vld [vmem:[%s1220 + $0x28] sm:$0xff]
        %v1899 = vld [vmem:[%s1220 + $0x30] sm:$0xff]
        %v1900 = vld [vmem:[%s1220 + $0x48] sm:$0xff]
        %v1901 = vld [vmem:[%s1220 + $0x50] sm:$0xff]
        %v1902 = vld [vmem:[%s1220 + $0x68] sm:$0xff]
        %v1903 = vld [vmem:[%s1220 + $0x70] sm:$0xff]
        %v1904 = vld [vmem:[%s1220 + $0x88] sm:$0xff]
        %v1905 = vld [vmem:[%s1220 + $0x90] sm:$0xff]
        %v1906 = vld [vmem:[%s1220 + $0xa8] sm:$0xff]
        %v1907 = vld [vmem:[%s1220 + $0xb0] sm:$0xff]
        %v1908 = vld [vmem:[%s1220 + $0xc8] sm:$0xff]
        %v1909 = vld [vmem:[%s1220 + $0xd0] sm:$0xff]
        %v1910 = vld [vmem:[%s1220 + $0xe8] sm:$0xff]
        %v1911 = vld [vmem:[%s1220 + $0xf0] sm:$0xff]
        %v1912 = vld [vmem:[%s1220 + $0x108] sm:$0xff]
        %v1913 = vld [vmem:[%s1220 + $0x110] sm:$0xff]
        %v1914 = vld [vmem:[%s1220 + $0x128] sm:$0xff]
        %v1915 = vld [vmem:[%s1220 + $0x130] sm:$0xff]
        %v1916 = vld [vmem:[%s1220 + $0x148] sm:$0xff]
        %v1917 = vld [vmem:[%s1220 + $0x150] sm:$0xff]
        %v1918 = vld [vmem:[%s1220 + $0x168] sm:$0xff]
        %v1919 = vld [vmem:[%s1220 + $0x170] sm:$0xff]
        %v1920 = vld [vmem:[%s1220 + $0x188] sm:$0xff]
        %v1921 = vld [vmem:[%s1220 + $0x190] sm:$0xff]
        %v1922 = vld [vmem:[%s1220 + $0x1a8] sm:$0xff]
        %v1923 = vld [vmem:[%s1220 + $0x1b0] sm:$0xff]
        %v1924 = vld [vmem:[%s1220 + $0x1c8] sm:$0xff]
        %v1925 = vld [vmem:[%s1220 + $0x1d0] sm:$0xff]
        %v1926 = vld [vmem:[%s1220 + $0x1e8] sm:$0xff]
        %v1927 = vld [vmem:[%s1220 + $0x1f0] sm:$0xff]
        %1960 = vrot.lane.b32.xlu0 %v1896, 16
        %v1961 = vpop.permute.xlu0 %1960
        %1962 = vrot.lane.b32.xlu0 %v1897, 16
        %v1963 = vpop.permute.xlu0 %1962
        %1964 = vrot.lane.b32.xlu0 %v1898, 16
        %v1965 = vpop.permute.xlu0 %1964
        %1966 = vrot.lane.b32.xlu0 %v1899, 16
        %v1967 = vpop.permute.xlu0 %1966
        %1968 = vrot.lane.b32.xlu0 %v1900, 16
        %v1969 = vpop.permute.xlu0 %1968
        %1970 = vrot.lane.b32.xlu0 %v1901, 16
        %v1971 = vpop.permute.xlu0 %1970
        %1972 = vrot.lane.b32.xlu0 %v1902, 16
        %v1973 = vpop.permute.xlu0 %1972
        %1974 = vrot.lane.b32.xlu0 %v1903, 16
        %v1975 = vpop.permute.xlu0 %1974
        %1976 = vrot.lane.b32.xlu0 %v1904, 16
        %v1977 = vpop.permute.xlu0 %1976
        %1978 = vrot.lane.b32.xlu0 %v1905, 16
        %v1979 = vpop.permute.xlu0 %1978
        %1980 = vrot.lane.b32.xlu0 %v1906, 16
        %v1981 = vpop.permute.xlu0 %1980
        %1982 = vrot.lane.b32.xlu0 %v1907, 16
        %v1983 = vpop.permute.xlu0 %1982
        %1984 = vrot.lane.b32.xlu0 %v1908, 16
        %v1985 = vpop.permute.xlu0 %1984
        %1986 = vrot.lane.b32.xlu0 %v1909, 16
        %v1987 = vpop.permute.xlu0 %1986
        %1988 = vrot.lane.b32.xlu0 %v1910, 16
        %v1989 = vpop.permute.xlu0 %1988
        %1990 = vrot.lane.b32.xlu0 %v1911, 16
        %v1991 = vpop.permute.xlu0 %1990
        %1992 = vrot.lane.b32.xlu0 %v1912, 16
        %v1993 = vpop.permute.xlu0 %1992
        %1994 = vrot.lane.b32.xlu0 %v1913, 16
        %v1995 = vpop.permute.xlu0 %1994
        %1996 = vrot.lane.b32.xlu0 %v1914, 16
        %v1997 = vpop.permute.xlu0 %1996
        %1998 = vrot.lane.b32.xlu0 %v1915, 16
        %v1999 = vpop.permute.xlu0 %1998
        %2000 = vrot.lane.b32.xlu0 %v1916, 16
        %v2001 = vpop.permute.xlu0 %2000
        %2002 = vrot.lane.b32.xlu0 %v1917, 16
        %v2003 = vpop.permute.xlu0 %2002
        %2004 = vrot.lane.b32.xlu0 %v1918, 16
        %v2005 = vpop.permute.xlu0 %2004
        %2006 = vrot.lane.b32.xlu0 %v1919, 16
        %v2007 = vpop.permute.xlu0 %2006
        %2008 = vrot.lane.b32.xlu0 %v1920, 16
        %v2009 = vpop.permute.xlu0 %2008
        %2010 = vrot.lane.b32.xlu0 %v1921, 16
        %v2011 = vpop.permute.xlu0 %2010
        %2012 = vrot.lane.b32.xlu0 %v1922, 16
        %v2013 = vpop.permute.xlu0 %2012
        %2014 = vrot.lane.b32.xlu0 %v1923, 16
        %v2015 = vpop.permute.xlu0 %2014
        %2016 = vrot.lane.b32.xlu0 %v1924, 16
        %v2017 = vpop.permute.xlu0 %2016
        %2018 = vrot.lane.b32.xlu0 %v1925, 16
        %v2019 = vpop.permute.xlu0 %2018
        %2020 = vrot.lane.b32.xlu0 %v1926, 16
        %v2021 = vpop.permute.xlu0 %2020
        %2022 = vrot.lane.b32.xlu0 %v1927, 16
        %v2023 = vpop.permute.xlu0 %2022
        %vm2056 = vcmask 162944
        %2057 = vst.msk [vmem:[#allocation3] sm:$0xff] %vm2056, %v1961
        %2058 = vst.msk [vmem:[#allocation3 + $0x8] sm:$0xff] %vm2056, %v1963
        %2059 = vst.msk [vmem:[#allocation3 + $0x10] sm:$0xff] %vm2056, %v1965
        %2060 = vst.msk [vmem:[#allocation3 + $0x18] sm:$0xff] %vm2056, %v1967
        %2061 = vst.msk [vmem:[#allocation3 + $0x20] sm:$0xff] %vm2056, %v1969
        %2062 = vst.msk [vmem:[#allocation3 + $0x28] sm:$0xff] %vm2056, %v1971
        %2063 = vst.msk [vmem:[#allocation3 + $0x30] sm:$0xff] %vm2056, %v1973
        %2064 = vst.msk [vmem:[#allocation3 + $0x38] sm:$0xff] %vm2056, %v1975
        %2065 = vst.msk [vmem:[#allocation3 + $0x40] sm:$0xff] %vm2056, %v1977
        %2066 = vst.msk [vmem:[#allocation3 + $0x48] sm:$0xff] %vm2056, %v1979
        %2067 = vst.msk [vmem:[#allocation3 + $0x50] sm:$0xff] %vm2056, %v1981
        %2068 = vst.msk [vmem:[#allocation3 + $0x58] sm:$0xff] %vm2056, %v1983
        %2069 = vst.msk [vmem:[#allocation3 + $0x60] sm:$0xff] %vm2056, %v1985
        %2070 = vst.msk [vmem:[#allocation3 + $0x68] sm:$0xff] %vm2056, %v1987
        %2071 = vst.msk [vmem:[#allocation3 + $0x70] sm:$0xff] %vm2056, %v1989
        %2072 = vst.msk [vmem:[#allocation3 + $0x78] sm:$0xff] %vm2056, %v1991
        %2073 = vst.msk [vmem:[#allocation3 + $0x80] sm:$0xff] %vm2056, %v1993
        %2074 = vst.msk [vmem:[#allocation3 + $0x88] sm:$0xff] %vm2056, %v1995
        %2075 = vst.msk [vmem:[#allocation3 + $0x90] sm:$0xff] %vm2056, %v1997
        %2076 = vst.msk [vmem:[#allocation3 + $0x98] sm:$0xff] %vm2056, %v1999
        %2077 = vst.msk [vmem:[#allocation3 + $0xa0] sm:$0xff] %vm2056, %v2001
        %2078 = vst.msk [vmem:[#allocation3 + $0xa8] sm:$0xff] %vm2056, %v2003
        %2079 = vst.msk [vmem:[#allocation3 + $0xb0] sm:$0xff] %vm2056, %v2005
        %2080 = vst.msk [vmem:[#allocation3 + $0xb8] sm:$0xff] %vm2056, %v2007
        %2081 = vst.msk [vmem:[#allocation3 + $0xc0] sm:$0xff] %vm2056, %v2009
        %2082 = vst.msk [vmem:[#allocation3 + $0xc8] sm:$0xff] %vm2056, %v2011
        %2083 = vst.msk [vmem:[#allocation3 + $0xd0] sm:$0xff] %vm2056, %v2013
        %2084 = vst.msk [vmem:[#allocation3 + $0xd8] sm:$0xff] %vm2056, %v2015
        %2085 = vst.msk [vmem:[#allocation3 + $0xe0] sm:$0xff] %vm2056, %v2017
        %2086 = vst.msk [vmem:[#allocation3 + $0xe8] sm:$0xff] %vm2056, %v2019
        %2087 = vst.msk [vmem:[#allocation3 + $0xf0] sm:$0xff] %vm2056, %v2021
        %2088 = vst.msk [vmem:[#allocation3 + $0xf8] sm:$0xff] %vm2056, %v2023
        %v2089 = vld [vmem:[%s1220 + $0x9] sm:$0xff]
        %v2090 = vld [vmem:[%s1220 + $0x11] sm:$0xff]
        %v2091 = vld [vmem:[%s1220 + $0x29] sm:$0xff]
        %v2092 = vld [vmem:[%s1220 + $0x31] sm:$0xff]
        %v2093 = vld [vmem:[%s1220 + $0x49] sm:$0xff]
        %v2094 = vld [vmem:[%s1220 + $0x51] sm:$0xff]
        %v2095 = vld [vmem:[%s1220 + $0x69] sm:$0xff]
        %v2096 = vld [vmem:[%s1220 + $0x71] sm:$0xff]
        %v2097 = vld [vmem:[%s1220 + $0x89] sm:$0xff]
        %v2098 = vld [vmem:[%s1220 + $0x91] sm:$0xff]
        %v2099 = vld [vmem:[%s1220 + $0xa9] sm:$0xff]
        %v2100 = vld [vmem:[%s1220 + $0xb1] sm:$0xff]
        %v2101 = vld [vmem:[%s1220 + $0xc9] sm:$0xff]
        %v2102 = vld [vmem:[%s1220 + $0xd1] sm:$0xff]
        %v2103 = vld [vmem:[%s1220 + $0xe9] sm:$0xff]
        %v2104 = vld [vmem:[%s1220 + $0xf1] sm:$0xff]
        %v2105 = vld [vmem:[%s1220 + $0x109] sm:$0xff]
        %v2106 = vld [vmem:[%s1220 + $0x111] sm:$0xff]
        %v2107 = vld [vmem:[%s1220 + $0x129] sm:$0xff]
        %v2108 = vld [vmem:[%s1220 + $0x131] sm:$0xff]
        %v2109 = vld [vmem:[%s1220 + $0x149] sm:$0xff]
        %v2110 = vld [vmem:[%s1220 + $0x151] sm:$0xff]
        %v2111 = vld [vmem:[%s1220 + $0x169] sm:$0xff]
        %v2112 = vld [vmem:[%s1220 + $0x171] sm:$0xff]
        %v2113 = vld [vmem:[%s1220 + $0x189] sm:$0xff]
        %v2114 = vld [vmem:[%s1220 + $0x191] sm:$0xff]
        %v2115 = vld [vmem:[%s1220 + $0x1a9] sm:$0xff]
        %v2116 = vld [vmem:[%s1220 + $0x1b1] sm:$0xff]
        %v2117 = vld [vmem:[%s1220 + $0x1c9] sm:$0xff]
        %v2118 = vld [vmem:[%s1220 + $0x1d1] sm:$0xff]
        %v2119 = vld [vmem:[%s1220 + $0x1e9] sm:$0xff]
        %v2120 = vld [vmem:[%s1220 + $0x1f1] sm:$0xff]
        %2153 = vrot.lane.b32.xlu0 %v2089, 20
        %v2154 = vpop.permute.xlu0 %2153
        %2155 = vrot.lane.b32.xlu0 %v2090, 20
        %v2156 = vpop.permute.xlu0 %2155
        %2157 = vrot.lane.b32.xlu0 %v2091, 20
        %v2158 = vpop.permute.xlu0 %2157
        %2159 = vrot.lane.b32.xlu0 %v2092, 20
        %v2160 = vpop.permute.xlu0 %2159
        %2161 = vrot.lane.b32.xlu0 %v2093, 20
        %v2162 = vpop.permute.xlu0 %2161
        %2163 = vrot.lane.b32.xlu0 %v2094, 20
        %v2164 = vpop.permute.xlu0 %2163
        %2165 = vrot.lane.b32.xlu0 %v2095, 20
        %v2166 = vpop.permute.xlu0 %2165
        %2167 = vrot.lane.b32.xlu0 %v2096, 20
        %v2168 = vpop.permute.xlu0 %2167
        %2169 = vrot.lane.b32.xlu0 %v2097, 20
        %v2170 = vpop.permute.xlu0 %2169
        %2171 = vrot.lane.b32.xlu0 %v2098, 20
        %v2172 = vpop.permute.xlu0 %2171
        %2173 = vrot.lane.b32.xlu0 %v2099, 20
        %v2174 = vpop.permute.xlu0 %2173
        %2175 = vrot.lane.b32.xlu0 %v2100, 20
        %v2176 = vpop.permute.xlu0 %2175
        %2177 = vrot.lane.b32.xlu0 %v2101, 20
        %v2178 = vpop.permute.xlu0 %2177
        %2179 = vrot.lane.b32.xlu0 %v2102, 20
        %v2180 = vpop.permute.xlu0 %2179
        %2181 = vrot.lane.b32.xlu0 %v2103, 20
        %v2182 = vpop.permute.xlu0 %2181
        %2183 = vrot.lane.b32.xlu0 %v2104, 20
        %v2184 = vpop.permute.xlu0 %2183
        %2185 = vrot.lane.b32.xlu0 %v2105, 20
        %v2186 = vpop.permute.xlu0 %2185
        %2187 = vrot.lane.b32.xlu0 %v2106, 20
        %v2188 = vpop.permute.xlu0 %2187
        %2189 = vrot.lane.b32.xlu0 %v2107, 20
        %v2190 = vpop.permute.xlu0 %2189
        %2191 = vrot.lane.b32.xlu0 %v2108, 20
        %v2192 = vpop.permute.xlu0 %2191
        %2193 = vrot.lane.b32.xlu0 %v2109, 20
        %v2194 = vpop.permute.xlu0 %2193
        %2195 = vrot.lane.b32.xlu0 %v2110, 20
        %v2196 = vpop.permute.xlu0 %2195
        %2197 = vrot.lane.b32.xlu0 %v2111, 20
        %v2198 = vpop.permute.xlu0 %2197
        %2199 = vrot.lane.b32.xlu0 %v2112, 20
        %v2200 = vpop.permute.xlu0 %2199
        %2201 = vrot.lane.b32.xlu0 %v2113, 20
        %v2202 = vpop.permute.xlu0 %2201
        %2203 = vrot.lane.b32.xlu0 %v2114, 20
        %v2204 = vpop.permute.xlu0 %2203
        %2205 = vrot.lane.b32.xlu0 %v2115, 20
        %v2206 = vpop.permute.xlu0 %2205
        %2207 = vrot.lane.b32.xlu0 %v2116, 20
        %v2208 = vpop.permute.xlu0 %2207
        %2209 = vrot.lane.b32.xlu0 %v2117, 20
        %v2210 = vpop.permute.xlu0 %2209
        %2211 = vrot.lane.b32.xlu0 %v2118, 20
        %v2212 = vpop.permute.xlu0 %2211
        %2213 = vrot.lane.b32.xlu0 %v2119, 20
        %v2214 = vpop.permute.xlu0 %2213
        %2215 = vrot.lane.b32.xlu0 %v2120, 20
        %v2216 = vpop.permute.xlu0 %2215
        %vm2249 = vcmask 195744
        %2250 = vst.msk [vmem:[#allocation3] sm:$0xff] %vm2249, %v2154
        %2251 = vst.msk [vmem:[#allocation3 + $0x8] sm:$0xff] %vm2249, %v2156
        %2252 = vst.msk [vmem:[#allocation3 + $0x10] sm:$0xff] %vm2249, %v2158
        %2253 = vst.msk [vmem:[#allocation3 + $0x18] sm:$0xff] %vm2249, %v2160
        %2254 = vst.msk [vmem:[#allocation3 + $0x20] sm:$0xff] %vm2249, %v2162
        %2255 = vst.msk [vmem:[#allocation3 + $0x28] sm:$0xff] %vm2249, %v2164
        %2256 = vst.msk [vmem:[#allocation3 + $0x30] sm:$0xff] %vm2249, %v2166
        %2257 = vst.msk [vmem:[#allocation3 + $0x38] sm:$0xff] %vm2249, %v2168
        %2258 = vst.msk [vmem:[#allocation3 + $0x40] sm:$0xff] %vm2249, %v2170
        %2259 = vst.msk [vmem:[#allocation3 + $0x48] sm:$0xff] %vm2249, %v2172
        %2260 = vst.msk [vmem:[#allocation3 + $0x50] sm:$0xff] %vm2249, %v2174
        %2261 = vst.msk [vmem:[#allocation3 + $0x58] sm:$0xff] %vm2249, %v2176
        %2262 = vst.msk [vmem:[#allocation3 + $0x60] sm:$0xff] %vm2249, %v2178
        %2263 = vst.msk [vmem:[#allocation3 + $0x68] sm:$0xff] %vm2249, %v2180
        %2264 = vst.msk [vmem:[#allocation3 + $0x70] sm:$0xff] %vm2249, %v2182
        %2265 = vst.msk [vmem:[#allocation3 + $0x78] sm:$0xff] %vm2249, %v2184
        %2266 = vst.msk [vmem:[#allocation3 + $0x80] sm:$0xff] %vm2249, %v2186
        %2267 = vst.msk [vmem:[#allocation3 + $0x88] sm:$0xff] %vm2249, %v2188
        %2268 = vst.msk [vmem:[#allocation3 + $0x90] sm:$0xff] %vm2249, %v2190
        %2269 = vst.msk [vmem:[#allocation3 + $0x98] sm:$0xff] %vm2249, %v2192
        %2270 = vst.msk [vmem:[#allocation3 + $0xa0] sm:$0xff] %vm2249, %v2194
        %2271 = vst.msk [vmem:[#allocation3 + $0xa8] sm:$0xff] %vm2249, %v2196
        %2272 = vst.msk [vmem:[#allocation3 + $0xb0] sm:$0xff] %vm2249, %v2198
        %2273 = vst.msk [vmem:[#allocation3 + $0xb8] sm:$0xff] %vm2249, %v2200
        %2274 = vst.msk [vmem:[#allocation3 + $0xc0] sm:$0xff] %vm2249, %v2202
        %2275 = vst.msk [vmem:[#allocation3 + $0xc8] sm:$0xff] %vm2249, %v2204
        %2276 = vst.msk [vmem:[#allocation3 + $0xd0] sm:$0xff] %vm2249, %v2206
        %2277 = vst.msk [vmem:[#allocation3 + $0xd8] sm:$0xff] %vm2249, %v2208
        %2278 = vst.msk [vmem:[#allocation3 + $0xe0] sm:$0xff] %vm2249, %v2210
        %2279 = vst.msk [vmem:[#allocation3 + $0xe8] sm:$0xff] %vm2249, %v2212
        %2280 = vst.msk [vmem:[#allocation3 + $0xf0] sm:$0xff] %vm2249, %v2214
        %2281 = vst.msk [vmem:[#allocation3 + $0xf8] sm:$0xff] %vm2249, %v2216
        %s2282 = scalar_lea.vmem [#allocation2], 64
        %v2283 = vld [vmem:[%s2282 + $0x7] sm:$0xff]
        %v2284 = vld [vmem:[%s2282 + $0xf] sm:$0xff]
        %v2285 = vld [vmem:[%s2282 + $0x27] sm:$0xff]
        %v2286 = vld [vmem:[%s2282 + $0x2f] sm:$0xff]
        %v2287 = vld [vmem:[%s2282 + $0x47] sm:$0xff]
        %v2288 = vld [vmem:[%s2282 + $0x4f] sm:$0xff]
        %v2289 = vld [vmem:[%s2282 + $0x67] sm:$0xff]
        %v2290 = vld [vmem:[%s2282 + $0x6f] sm:$0xff]
        %v2291 = vld [vmem:[%s2282 + $0x87] sm:$0xff]
        %v2292 = vld [vmem:[%s2282 + $0x8f] sm:$0xff]
        %v2293 = vld [vmem:[%s2282 + $0xa7] sm:$0xff]
        %v2294 = vld [vmem:[%s2282 + $0xaf] sm:$0xff]
        %v2295 = vld [vmem:[%s2282 + $0xc7] sm:$0xff]
        %v2296 = vld [vmem:[%s2282 + $0xcf] sm:$0xff]
        %v2297 = vld [vmem:[%s2282 + $0xe7] sm:$0xff]
        %v2298 = vld [vmem:[%s2282 + $0xef] sm:$0xff]
        %v2299 = vld [vmem:[%s2282 + $0x107] sm:$0xff]
        %v2300 = vld [vmem:[%s2282 + $0x10f] sm:$0xff]
        %v2301 = vld [vmem:[%s2282 + $0x127] sm:$0xff]
        %v2302 = vld [vmem:[%s2282 + $0x12f] sm:$0xff]
        %v2303 = vld [vmem:[%s2282 + $0x147] sm:$0xff]
        %v2304 = vld [vmem:[%s2282 + $0x14f] sm:$0xff]
        %v2305 = vld [vmem:[%s2282 + $0x167] sm:$0xff]
        %v2306 = vld [vmem:[%s2282 + $0x16f] sm:$0xff]
        %v2307 = vld [vmem:[%s2282 + $0x187] sm:$0xff]
        %v2308 = vld [vmem:[%s2282 + $0x18f] sm:$0xff]
        %v2309 = vld [vmem:[%s2282 + $0x1a7] sm:$0xff]
        %v2310 = vld [vmem:[%s2282 + $0x1af] sm:$0xff]
        %v2311 = vld [vmem:[%s2282 + $0x1c7] sm:$0xff]
        %v2312 = vld [vmem:[%s2282 + $0x1cf] sm:$0xff]
        %v2313 = vld [vmem:[%s2282 + $0x1e7] sm:$0xff]
        %v2314 = vld [vmem:[%s2282 + $0x1ef] sm:$0xff]
        %2347 = vrot.lane.b32.xlu0 %v2283, 24
        %v2348 = vpop.permute.xlu0 %2347
        %2349 = vrot.lane.b32.xlu0 %v2284, 24
        %v2350 = vpop.permute.xlu0 %2349
        %2351 = vrot.lane.b32.xlu0 %v2285, 24
        %v2352 = vpop.permute.xlu0 %2351
        %2353 = vrot.lane.b32.xlu0 %v2286, 24
        %v2354 = vpop.permute.xlu0 %2353
        %2355 = vrot.lane.b32.xlu0 %v2287, 24
        %v2356 = vpop.permute.xlu0 %2355
        %2357 = vrot.lane.b32.xlu0 %v2288, 24
        %v2358 = vpop.permute.xlu0 %2357
        %2359 = vrot.lane.b32.xlu0 %v2289, 24
        %v2360 = vpop.permute.xlu0 %2359
        %2361 = vrot.lane.b32.xlu0 %v2290, 24
        %v2362 = vpop.permute.xlu0 %2361
        %2363 = vrot.lane.b32.xlu0 %v2291, 24
        %v2364 = vpop.permute.xlu0 %2363
        %2365 = vrot.lane.b32.xlu0 %v2292, 24
        %v2366 = vpop.permute.xlu0 %2365
        %2367 = vrot.lane.b32.xlu0 %v2293, 24
        %v2368 = vpop.permute.xlu0 %2367
        %2369 = vrot.lane.b32.xlu0 %v2294, 24
        %v2370 = vpop.permute.xlu0 %2369
        %2371 = vrot.lane.b32.xlu0 %v2295, 24
        %v2372 = vpop.permute.xlu0 %2371
        %2373 = vrot.lane.b32.xlu0 %v2296, 24
        %v2374 = vpop.permute.xlu0 %2373
        %2375 = vrot.lane.b32.xlu0 %v2297, 24
        %v2376 = vpop.permute.xlu0 %2375
        %2377 = vrot.lane.b32.xlu0 %v2298, 24
        %v2378 = vpop.permute.xlu0 %2377
        %2379 = vrot.lane.b32.xlu0 %v2299, 24
        %v2380 = vpop.permute.xlu0 %2379
        %2381 = vrot.lane.b32.xlu0 %v2300, 24
        %v2382 = vpop.permute.xlu0 %2381
        %2383 = vrot.lane.b32.xlu0 %v2301, 24
        %v2384 = vpop.permute.xlu0 %2383
        %2385 = vrot.lane.b32.xlu0 %v2302, 24
        %v2386 = vpop.permute.xlu0 %2385
        %2387 = vrot.lane.b32.xlu0 %v2303, 24
        %v2388 = vpop.permute.xlu0 %2387
        %2389 = vrot.lane.b32.xlu0 %v2304, 24
        %v2390 = vpop.permute.xlu0 %2389
        %2391 = vrot.lane.b32.xlu0 %v2305, 24
        %v2392 = vpop.permute.xlu0 %2391
        %2393 = vrot.lane.b32.xlu0 %v2306, 24
        %v2394 = vpop.permute.xlu0 %2393
        %2395 = vrot.lane.b32.xlu0 %v2307, 24
        %v2396 = vpop.permute.xlu0 %2395
        %2397 = vrot.lane.b32.xlu0 %v2308, 24
        %v2398 = vpop.permute.xlu0 %2397
        %2399 = vrot.lane.b32.xlu0 %v2309, 24
        %v2400 = vpop.permute.xlu0 %2399
        %2401 = vrot.lane.b32.xlu0 %v2310, 24
        %v2402 = vpop.permute.xlu0 %2401
        %2403 = vrot.lane.b32.xlu0 %v2311, 24
        %v2404 = vpop.permute.xlu0 %2403
        %2405 = vrot.lane.b32.xlu0 %v2312, 24
        %v2406 = vpop.permute.xlu0 %2405
        %2407 = vrot.lane.b32.xlu0 %v2313, 24
        %v2408 = vpop.permute.xlu0 %2407
        %2409 = vrot.lane.b32.xlu0 %v2314, 24
        %v2410 = vpop.permute.xlu0 %2409
        %vm2443 = vcmask 228544
        %2444 = vst.msk [vmem:[#allocation3] sm:$0xff] %vm2443, %v2348
        %2445 = vst.msk [vmem:[#allocation3 + $0x8] sm:$0xff] %vm2443, %v2350
        %2446 = vst.msk [vmem:[#allocation3 + $0x10] sm:$0xff] %vm2443, %v2352
        %2447 = vst.msk [vmem:[#allocation3 + $0x18] sm:$0xff] %vm2443, %v2354
        %2448 = vst.msk [vmem:[#allocation3 + $0x20] sm:$0xff] %vm2443, %v2356
        %2449 = vst.msk [vmem:[#allocation3 + $0x28] sm:$0xff] %vm2443, %v2358
        %2450 = vst.msk [vmem:[#allocation3 + $0x30] sm:$0xff] %vm2443, %v2360
        %2451 = vst.msk [vmem:[#allocation3 + $0x38] sm:$0xff] %vm2443, %v2362
        %2452 = vst.msk [vmem:[#allocation3 + $0x40] sm:$0xff] %vm2443, %v2364
        %2453 = vst.msk [vmem:[#allocation3 + $0x48] sm:$0xff] %vm2443, %v2366
        %2454 = vst.msk [vmem:[#allocation3 + $0x50] sm:$0xff] %vm2443, %v2368
        %2455 = vst.msk [vmem:[#allocation3 + $0x58] sm:$0xff] %vm2443, %v2370
        %2456 = vst.msk [vmem:[#allocation3 + $0x60] sm:$0xff] %vm2443, %v2372
        %2457 = vst.msk [vmem:[#allocation3 + $0x68] sm:$0xff] %vm2443, %v2374
        %2458 = vst.msk [vmem:[#allocation3 + $0x70] sm:$0xff] %vm2443, %v2376
        %2459 = vst.msk [vmem:[#allocation3 + $0x78] sm:$0xff] %vm2443, %v2378
        %2460 = vst.msk [vmem:[#allocation3 + $0x80] sm:$0xff] %vm2443, %v2380
        %2461 = vst.msk [vmem:[#allocation3 + $0x88] sm:$0xff] %vm2443, %v2382
        %2462 = vst.msk [vmem:[#allocation3 + $0x90] sm:$0xff] %vm2443, %v2384
        %2463 = vst.msk [vmem:[#allocation3 + $0x98] sm:$0xff] %vm2443, %v2386
        %2464 = vst.msk [vmem:[#allocation3 + $0xa0] sm:$0xff] %vm2443, %v2388
        %2465 = vst.msk [vmem:[#allocation3 + $0xa8] sm:$0xff] %vm2443, %v2390
        %2466 = vst.msk [vmem:[#allocation3 + $0xb0] sm:$0xff] %vm2443, %v2392
        %2467 = vst.msk [vmem:[#allocation3 + $0xb8] sm:$0xff] %vm2443, %v2394
        %2468 = vst.msk [vmem:[#allocation3 + $0xc0] sm:$0xff] %vm2443, %v2396
        %2469 = vst.msk [vmem:[#allocation3 + $0xc8] sm:$0xff] %vm2443, %v2398
        %2470 = vst.msk [vmem:[#allocation3 + $0xd0] sm:$0xff] %vm2443, %v2400
        %2471 = vst.msk [vmem:[#allocation3 + $0xd8] sm:$0xff] %vm2443, %v2402
        %2472 = vst.msk [vmem:[#allocation3 + $0xe0] sm:$0xff] %vm2443, %v2404
        %2473 = vst.msk [vmem:[#allocation3 + $0xe8] sm:$0xff] %vm2443, %v2406
        %2474 = vst.msk [vmem:[#allocation3 + $0xf0] sm:$0xff] %vm2443, %v2408
        %2475 = vst.msk [vmem:[#allocation3 + $0xf8] sm:$0xff] %vm2443, %v2410
        %v2476 = vld [vmem:[%s2282 + $0x8] sm:$0xff]
        %v2477 = vld [vmem:[%s2282 + $0x10] sm:$0xff]
        %v2478 = vld [vmem:[%s2282 + $0x28] sm:$0xff]
        %v2479 = vld [vmem:[%s2282 + $0x30] sm:$0xff]
        %v2480 = vld [vmem:[%s2282 + $0x48] sm:$0xff]
        %v2481 = vld [vmem:[%s2282 + $0x50] sm:$0xff]
        %v2482 = vld [vmem:[%s2282 + $0x68] sm:$0xff]
        %v2483 = vld [vmem:[%s2282 + $0x70] sm:$0xff]
        %v2484 = vld [vmem:[%s2282 + $0x88] sm:$0xff]
        %v2485 = vld [vmem:[%s2282 + $0x90] sm:$0xff]
        %v2486 = vld [vmem:[%s2282 + $0xa8] sm:$0xff]
        %v2487 = vld [vmem:[%s2282 + $0xb0] sm:$0xff]
        %v2488 = vld [vmem:[%s2282 + $0xc8] sm:$0xff]
        %v2489 = vld [vmem:[%s2282 + $0xd0] sm:$0xff]
        %v2490 = vld [vmem:[%s2282 + $0xe8] sm:$0xff]
        %v2491 = vld [vmem:[%s2282 + $0xf0] sm:$0xff]
        %v2492 = vld [vmem:[%s2282 + $0x108] sm:$0xff]
        %v2493 = vld [vmem:[%s2282 + $0x110] sm:$0xff]
        %v2494 = vld [vmem:[%s2282 + $0x128] sm:$0xff]
        %v2495 = vld [vmem:[%s2282 + $0x130] sm:$0xff]
        %v2496 = vld [vmem:[%s2282 + $0x148] sm:$0xff]
        %v2497 = vld [vmem:[%s2282 + $0x150] sm:$0xff]
        %v2498 = vld [vmem:[%s2282 + $0x168] sm:$0xff]
        %v2499 = vld [vmem:[%s2282 + $0x170] sm:$0xff]
        %v2500 = vld [vmem:[%s2282 + $0x188] sm:$0xff]
        %v2501 = vld [vmem:[%s2282 + $0x190] sm:$0xff]
        %v2502 = vld [vmem:[%s2282 + $0x1a8] sm:$0xff]
        %v2503 = vld [vmem:[%s2282 + $0x1b0] sm:$0xff]
        %v2504 = vld [vmem:[%s2282 + $0x1c8] sm:$0xff]
        %v2505 = vld [vmem:[%s2282 + $0x1d0] sm:$0xff]
        %v2506 = vld [vmem:[%s2282 + $0x1e8] sm:$0xff]
        %v2507 = vld [vmem:[%s2282 + $0x1f0] sm:$0xff]
        %2540 = vrot.lane.b32.xlu0 %v2476, 28
        %v2541 = vpop.permute.xlu0 %2540
        %2542 = vrot.lane.b32.xlu0 %v2477, 28
        %v2543 = vpop.permute.xlu0 %2542
        %2544 = vrot.lane.b32.xlu0 %v2478, 28
        %v2545 = vpop.permute.xlu0 %2544
        %2546 = vrot.lane.b32.xlu0 %v2479, 28
        %v2547 = vpop.permute.xlu0 %2546
        %2548 = vrot.lane.b32.xlu0 %v2480, 28
        %v2549 = vpop.permute.xlu0 %2548
        %2550 = vrot.lane.b32.xlu0 %v2481, 28
        %v2551 = vpop.permute.xlu0 %2550
        %2552 = vrot.lane.b32.xlu0 %v2482, 28
        %v2553 = vpop.permute.xlu0 %2552
        %2554 = vrot.lane.b32.xlu0 %v2483, 28
        %v2555 = vpop.permute.xlu0 %2554
        %2556 = vrot.lane.b32.xlu0 %v2484, 28
        %v2557 = vpop.permute.xlu0 %2556
        %2558 = vrot.lane.b32.xlu0 %v2485, 28
        %v2559 = vpop.permute.xlu0 %2558
        %2560 = vrot.lane.b32.xlu0 %v2486, 28
        %v2561 = vpop.permute.xlu0 %2560
        %2562 = vrot.lane.b32.xlu0 %v2487, 28
        %v2563 = vpop.permute.xlu0 %2562
        %2564 = vrot.lane.b32.xlu0 %v2488, 28
        %v2565 = vpop.permute.xlu0 %2564
        %2566 = vrot.lane.b32.xlu0 %v2489, 28
        %v2567 = vpop.permute.xlu0 %2566
        %2568 = vrot.lane.b32.xlu0 %v2490, 28
        %v2569 = vpop.permute.xlu0 %2568
        %2570 = vrot.lane.b32.xlu0 %v2491, 28
        %v2571 = vpop.permute.xlu0 %2570
        %2572 = vrot.lane.b32.xlu0 %v2492, 28
        %v2573 = vpop.permute.xlu0 %2572
        %2574 = vrot.lane.b32.xlu0 %v2493, 28
        %v2575 = vpop.permute.xlu0 %2574
        %2576 = vrot.lane.b32.xlu0 %v2494, 28
        %v2577 = vpop.permute.xlu0 %2576
        %2578 = vrot.lane.b32.xlu0 %v2495, 28
        %v2579 = vpop.permute.xlu0 %2578
        %2580 = vrot.lane.b32.xlu0 %v2496, 28
        %v2581 = vpop.permute.xlu0 %2580
        %2582 = vrot.lane.b32.xlu0 %v2497, 28
        %v2583 = vpop.permute.xlu0 %2582
        %2584 = vrot.lane.b32.xlu0 %v2498, 28
        %v2585 = vpop.permute.xlu0 %2584
        %2586 = vrot.lane.b32.xlu0 %v2499, 28
        %v2587 = vpop.permute.xlu0 %2586
        %2588 = vrot.lane.b32.xlu0 %v2500, 28
        %v2589 = vpop.permute.xlu0 %2588
        %2590 = vrot.lane.b32.xlu0 %v2501, 28
        %v2591 = vpop.permute.xlu0 %2590
        %2592 = vrot.lane.b32.xlu0 %v2502, 28
        %v2593 = vpop.permute.xlu0 %2592
        %2594 = vrot.lane.b32.xlu0 %v2503, 28
        %v2595 = vpop.permute.xlu0 %2594
        %2596 = vrot.lane.b32.xlu0 %v2504, 28
        %v2597 = vpop.permute.xlu0 %2596
        %2598 = vrot.lane.b32.xlu0 %v2505, 28
        %v2599 = vpop.permute.xlu0 %2598
        %2600 = vrot.lane.b32.xlu0 %v2506, 28
        %v2601 = vpop.permute.xlu0 %2600
        %2602 = vrot.lane.b32.xlu0 %v2507, 28
        %v2603 = vpop.permute.xlu0 %2602
        %vm2636 = vcmask 261344
        %2637 = vst.msk [vmem:[#allocation3] sm:$0xff] %vm2636, %v2541
        %2638 = vst.msk [vmem:[#allocation3 + $0x8] sm:$0xff] %vm2636, %v2543
        %2639 = vst.msk [vmem:[#allocation3 + $0x10] sm:$0xff] %vm2636, %v2545
        %2640 = vst.msk [vmem:[#allocation3 + $0x18] sm:$0xff] %vm2636, %v2547
        %2641 = vst.msk [vmem:[#allocation3 + $0x20] sm:$0xff] %vm2636, %v2549
        %2642 = vst.msk [vmem:[#allocation3 + $0x28] sm:$0xff] %vm2636, %v2551
        %2643 = vst.msk [vmem:[#allocation3 + $0x30] sm:$0xff] %vm2636, %v2553
        %2644 = vst.msk [vmem:[#allocation3 + $0x38] sm:$0xff] %vm2636, %v2555
        %2645 = vst.msk [vmem:[#allocation3 + $0x40] sm:$0xff] %vm2636, %v2557
        %2646 = vst.msk [vmem:[#allocation3 + $0x48] sm:$0xff] %vm2636, %v2559
        %2647 = vst.msk [vmem:[#allocation3 + $0x50] sm:$0xff] %vm2636, %v2561
        %2648 = vst.msk [vmem:[#allocation3 + $0x58] sm:$0xff] %vm2636, %v2563
        %2649 = vst.msk [vmem:[#allocation3 + $0x60] sm:$0xff] %vm2636, %v2565
        %2650 = vst.msk [vmem:[#allocation3 + $0x68] sm:$0xff] %vm2636, %v2567
        %2651 = vst.msk [vmem:[#allocation3 + $0x70] sm:$0xff] %vm2636, %v2569
        %2652 = vst.msk [vmem:[#allocation3 + $0x78] sm:$0xff] %vm2636, %v2571
        %2653 = vst.msk [vmem:[#allocation3 + $0x80] sm:$0xff] %vm2636, %v2573
        %2654 = vst.msk [vmem:[#allocation3 + $0x88] sm:$0xff] %vm2636, %v2575
        %2655 = vst.msk [vmem:[#allocation3 + $0x90] sm:$0xff] %vm2636, %v2577
        %2656 = vst.msk [vmem:[#allocation3 + $0x98] sm:$0xff] %vm2636, %v2579
        %2657 = vst.msk [vmem:[#allocation3 + $0xa0] sm:$0xff] %vm2636, %v2581
        %2658 = vst.msk [vmem:[#allocation3 + $0xa8] sm:$0xff] %vm2636, %v2583
        %2659 = vst.msk [vmem:[#allocation3 + $0xb0] sm:$0xff] %vm2636, %v2585
        %2660 = vst.msk [vmem:[#allocation3 + $0xb8] sm:$0xff] %vm2636, %v2587
        %2661 = vst.msk [vmem:[#allocation3 + $0xc0] sm:$0xff] %vm2636, %v2589
        %2662 = vst.msk [vmem:[#allocation3 + $0xc8] sm:$0xff] %vm2636, %v2591
        %2663 = vst.msk [vmem:[#allocation3 + $0xd0] sm:$0xff] %vm2636, %v2593
        %2664 = vst.msk [vmem:[#allocation3 + $0xd8] sm:$0xff] %vm2636, %v2595
        %2665 = vst.msk [vmem:[#allocation3 + $0xe0] sm:$0xff] %vm2636, %v2597
        %2666 = vst.msk [vmem:[#allocation3 + $0xe8] sm:$0xff] %vm2636, %v2599
        %2667 = vst.msk [vmem:[#allocation3 + $0xf0] sm:$0xff] %vm2636, %v2601
        %2668 = vst.msk [vmem:[#allocation3 + $0xf8] sm:$0xff] %vm2636, %v2603
        %v2669 = vld [vmem:[%s2282 + $0x9] sm:$0xff]
        %v2670 = vld [vmem:[%s2282 + $0x11] sm:$0xff]
        %v2671 = vld [vmem:[%s2282 + $0x29] sm:$0xff]
        %v2672 = vld [vmem:[%s2282 + $0x31] sm:$0xff]
        %v2673 = vld [vmem:[%s2282 + $0x49] sm:$0xff]
        %v2674 = vld [vmem:[%s2282 + $0x51] sm:$0xff]
        %v2675 = vld [vmem:[%s2282 + $0x69] sm:$0xff]
        %v2676 = vld [vmem:[%s2282 + $0x71] sm:$0xff]
        %v2677 = vld [vmem:[%s2282 + $0x89] sm:$0xff]
        %v2678 = vld [vmem:[%s2282 + $0x91] sm:$0xff]
        %v2679 = vld [vmem:[%s2282 + $0xa9] sm:$0xff]
        %v2680 = vld [vmem:[%s2282 + $0xb1] sm:$0xff]
        %v2681 = vld [vmem:[%s2282 + $0xc9] sm:$0xff]
        %v2682 = vld [vmem:[%s2282 + $0xd1] sm:$0xff]
        %v2683 = vld [vmem:[%s2282 + $0xe9] sm:$0xff]
        %v2684 = vld [vmem:[%s2282 + $0xf1] sm:$0xff]
        %v2685 = vld [vmem:[%s2282 + $0x109] sm:$0xff]
        %v2686 = vld [vmem:[%s2282 + $0x111] sm:$0xff]
        %v2687 = vld [vmem:[%s2282 + $0x129] sm:$0xff]
        %v2688 = vld [vmem:[%s2282 + $0x131] sm:$0xff]
        %v2689 = vld [vmem:[%s2282 + $0x149] sm:$0xff]
        %v2690 = vld [vmem:[%s2282 + $0x151] sm:$0xff]
        %v2691 = vld [vmem:[%s2282 + $0x169] sm:$0xff]
        %v2692 = vld [vmem:[%s2282 + $0x171] sm:$0xff]
        %v2693 = vld [vmem:[%s2282 + $0x189] sm:$0xff]
        %v2694 = vld [vmem:[%s2282 + $0x191] sm:$0xff]
        %v2695 = vld [vmem:[%s2282 + $0x1a9] sm:$0xff]
        %v2696 = vld [vmem:[%s2282 + $0x1b1] sm:$0xff]
        %v2697 = vld [vmem:[%s2282 + $0x1c9] sm:$0xff]
        %v2698 = vld [vmem:[%s2282 + $0x1d1] sm:$0xff]
        %v2699 = vld [vmem:[%s2282 + $0x1e9] sm:$0xff]
        %v2700 = vld [vmem:[%s2282 + $0x1f1] sm:$0xff]
        %2733 = vrot.lane.b32.xlu0 %v2669, 32
        %v2734 = vpop.permute.xlu0 %2733
        %2735 = vrot.lane.b32.xlu0 %v2670, 32
        %v2736 = vpop.permute.xlu0 %2735
        %2737 = vrot.lane.b32.xlu0 %v2671, 32
        %v2738 = vpop.permute.xlu0 %2737
        %2739 = vrot.lane.b32.xlu0 %v2672, 32
        %v2740 = vpop.permute.xlu0 %2739
        %2741 = vrot.lane.b32.xlu0 %v2673, 32
        %v2742 = vpop.permute.xlu0 %2741
        %2743 = vrot.lane.b32.xlu0 %v2674, 32
        %v2744 = vpop.permute.xlu0 %2743
        %2745 = vrot.lane.b32.xlu0 %v2675, 32
        %v2746 = vpop.permute.xlu0 %2745
        %2747 = vrot.lane.b32.xlu0 %v2676, 32
        %v2748 = vpop.permute.xlu0 %2747
        %2749 = vrot.lane.b32.xlu0 %v2677, 32
        %v2750 = vpop.permute.xlu0 %2749
        %2751 = vrot.lane.b32.xlu0 %v2678, 32
        %v2752 = vpop.permute.xlu0 %2751
        %2753 = vrot.lane.b32.xlu0 %v2679, 32
        %v2754 = vpop.permute.xlu0 %2753
        %2755 = vrot.lane.b32.xlu0 %v2680, 32
        %v2756 = vpop.permute.xlu0 %2755
        %2757 = vrot.lane.b32.xlu0 %v2681, 32
        %v2758 = vpop.permute.xlu0 %2757
        %2759 = vrot.lane.b32.xlu0 %v2682, 32
        %v2760 = vpop.permute.xlu0 %2759
        %2761 = vrot.lane.b32.xlu0 %v2683, 32
        %v2762 = vpop.permute.xlu0 %2761
        %2763 = vrot.lane.b32.xlu0 %v2684, 32
        %v2764 = vpop.permute.xlu0 %2763
        %2765 = vrot.lane.b32.xlu0 %v2685, 32
        %v2766 = vpop.permute.xlu0 %2765
        %2767 = vrot.lane.b32.xlu0 %v2686, 32
        %v2768 = vpop.permute.xlu0 %2767
        %2769 = vrot.lane.b32.xlu0 %v2687, 32
        %v2770 = vpop.permute.xlu0 %2769
        %2771 = vrot.lane.b32.xlu0 %v2688, 32
        %v2772 = vpop.permute.xlu0 %2771
        %2773 = vrot.lane.b32.xlu0 %v2689, 32
        %v2774 = vpop.permute.xlu0 %2773
        %2775 = vrot.lane.b32.xlu0 %v2690, 32
        %v2776 = vpop.permute.xlu0 %2775
        %2777 = vrot.lane.b32.xlu0 %v2691, 32
        %v2778 = vpop.permute.xlu0 %2777
        %2779 = vrot.lane.b32.xlu0 %v2692, 32
        %v2780 = vpop.permute.xlu0 %2779
        %2781 = vrot.lane.b32.xlu0 %v2693, 32
        %v2782 = vpop.permute.xlu0 %2781
        %2783 = vrot.lane.b32.xlu0 %v2694, 32
        %v2784 = vpop.permute.xlu0 %2783
        %2785 = vrot.lane.b32.xlu0 %v2695, 32
        %v2786 = vpop.permute.xlu0 %2785
        %2787 = vrot.lane.b32.xlu0 %v2696, 32
        %v2788 = vpop.permute.xlu0 %2787
        %2789 = vrot.lane.b32.xlu0 %v2697, 32
        %v2790 = vpop.permute.xlu0 %2789
        %2791 = vrot.lane.b32.xlu0 %v2698, 32
        %v2792 = vpop.permute.xlu0 %2791
        %2793 = vrot.lane.b32.xlu0 %v2699, 32
        %v2794 = vpop.permute.xlu0 %2793
        %2795 = vrot.lane.b32.xlu0 %v2700, 32
        %v2796 = vpop.permute.xlu0 %2795
        %vm2829 = vcmask 294144
        %2830 = vst.msk [vmem:[#allocation3] sm:$0xff] %vm2829, %v2734
        %2831 = vst.msk [vmem:[#allocation3 + $0x8] sm:$0xff] %vm2829, %v2736
        %2832 = vst.msk [vmem:[#allocation3 + $0x10] sm:$0xff] %vm2829, %v2738
        %2833 = vst.msk [vmem:[#allocation3 + $0x18] sm:$0xff] %vm2829, %v2740
        %2834 = vst.msk [vmem:[#allocation3 + $0x20] sm:$0xff] %vm2829, %v2742
        %2835 = vst.msk [vmem:[#allocation3 + $0x28] sm:$0xff] %vm2829, %v2744
        %2836 = vst.msk [vmem:[#allocation3 + $0x30] sm:$0xff] %vm2829, %v2746
        %2837 = vst.msk [vmem:[#allocation3 + $0x38] sm:$0xff] %vm2829, %v2748
        %2838 = vst.msk [vmem:[#allocation3 + $0x40] sm:$0xff] %vm2829, %v2750
        %2839 = vst.msk [vmem:[#allocation3 + $0x48] sm:$0xff] %vm2829, %v2752
        %2840 = vst.msk [vmem:[#allocation3 + $0x50] sm:$0xff] %vm2829, %v2754
        %2841 = vst.msk [vmem:[#allocation3 + $0x58] sm:$0xff] %vm2829, %v2756
        %2842 = vst.msk [vmem:[#allocation3 + $0x60] sm:$0xff] %vm2829, %v2758
        %2843 = vst.msk [vmem:[#allocation3 + $0x68] sm:$0xff] %vm2829, %v2760
        %2844 = vst.msk [vmem:[#allocation3 + $0x70] sm:$0xff] %vm2829, %v2762
        %2845 = vst.msk [vmem:[#allocation3 + $0x78] sm:$0xff] %vm2829, %v2764
        %2846 = vst.msk [vmem:[#allocation3 + $0x80] sm:$0xff] %vm2829, %v2766
        %2847 = vst.msk [vmem:[#allocation3 + $0x88] sm:$0xff] %vm2829, %v2768
        %2848 = vst.msk [vmem:[#allocation3 + $0x90] sm:$0xff] %vm2829, %v2770
        %2849 = vst.msk [vmem:[#allocation3 + $0x98] sm:$0xff] %vm2829, %v2772
        %2850 = vst.msk [vmem:[#allocation3 + $0xa0] sm:$0xff] %vm2829, %v2774
        %2851 = vst.msk [vmem:[#allocation3 + $0xa8] sm:$0xff] %vm2829, %v2776
        %2852 = vst.msk [vmem:[#allocation3 + $0xb0] sm:$0xff] %vm2829, %v2778
        %2853 = vst.msk [vmem:[#allocation3 + $0xb8] sm:$0xff] %vm2829, %v2780
        %2854 = vst.msk [vmem:[#allocation3 + $0xc0] sm:$0xff] %vm2829, %v2782
        %2855 = vst.msk [vmem:[#allocation3 + $0xc8] sm:$0xff] %vm2829, %v2784
        %2856 = vst.msk [vmem:[#allocation3 + $0xd0] sm:$0xff] %vm2829, %v2786
        %2857 = vst.msk [vmem:[#allocation3 + $0xd8] sm:$0xff] %vm2829, %v2788
        %2858 = vst.msk [vmem:[#allocation3 + $0xe0] sm:$0xff] %vm2829, %v2790
        %2859 = vst.msk [vmem:[#allocation3 + $0xe8] sm:$0xff] %vm2829, %v2792
        %2860 = vst.msk [vmem:[#allocation3 + $0xf0] sm:$0xff] %vm2829, %v2794
        %2861 = vst.msk [vmem:[#allocation3 + $0xf8] sm:$0xff] %vm2829, %v2796
        %v2862 = vld [vmem:[#allocation3] sm:$0xff]
        %v2863 = vld [vmem:[#allocation3 + $0x8] sm:$0xff]
        %v2864 = vld [vmem:[#allocation3 + $0x10] sm:$0xff]
        %v2865 = vld [vmem:[#allocation3 + $0x18] sm:$0xff]
        %v2866 = vld [vmem:[#allocation3 + $0x20] sm:$0xff]
        %v2867 = vld [vmem:[#allocation3 + $0x28] sm:$0xff]
        %v2868 = vld [vmem:[#allocation3 + $0x30] sm:$0xff]
        %v2869 = vld [vmem:[#allocation3 + $0x38] sm:$0xff]
        %v2870 = vld [vmem:[#allocation3 + $0x40] sm:$0xff]
        %v2871 = vld [vmem:[#allocation3 + $0x48] sm:$0xff]
        %v2872 = vld [vmem:[#allocation3 + $0x50] sm:$0xff]
        %v2873 = vld [vmem:[#allocation3 + $0x58] sm:$0xff]
        %v2874 = vld [vmem:[#allocation3 + $0x60] sm:$0xff]
        %v2875 = vld [vmem:[#allocation3 + $0x68] sm:$0xff]
        %v2876 = vld [vmem:[#allocation3 + $0x70] sm:$0xff]
        %v2877 = vld [vmem:[#allocation3 + $0x78] sm:$0xff]
        %v2878 = vld [vmem:[#allocation3 + $0x80] sm:$0xff]
        %v2879 = vld [vmem:[#allocation3 + $0x88] sm:$0xff]
        %v2880 = vld [vmem:[#allocation3 + $0x90] sm:$0xff]
        %v2881 = vld [vmem:[#allocation3 + $0x98] sm:$0xff]
        %v2882 = vld [vmem:[#allocation3 + $0xa0] sm:$0xff]
        %v2883 = vld [vmem:[#allocation3 + $0xa8] sm:$0xff]
        %v2884 = vld [vmem:[#allocation3 + $0xb0] sm:$0xff]
        %v2885 = vld [vmem:[#allocation3 + $0xb8] sm:$0xff]
        %v2886 = vld [vmem:[#allocation3 + $0xc0] sm:$0xff]
        %v2887 = vld [vmem:[#allocation3 + $0xc8] sm:$0xff]
        %v2888 = vld [vmem:[#allocation3 + $0xd0] sm:$0xff]
        %v2889 = vld [vmem:[#allocation3 + $0xd8] sm:$0xff]
        %v2890 = vld [vmem:[#allocation3 + $0xe0] sm:$0xff]
        %v2891 = vld [vmem:[#allocation3 + $0xe8] sm:$0xff]
        %v2892 = vld [vmem:[#allocation3 + $0xf0] sm:$0xff]
        %v2893 = vld [vmem:[#allocation3 + $0xf8] sm:$0xff]
        %v2894 = vld [vmem:[%s4] sm:$0xff]
        %v2895 = vld [vmem:[%s4 + $0x8] sm:$0xff]
        %v2896 = vld [vmem:[%s4 + $0x10] sm:$0xff]
        %v2897 = vld [vmem:[%s4 + $0x18] sm:$0xff]
        %v2898 = vld [vmem:[%s4 + $0x20] sm:$0xf]
        %vm2899 = vcmask 293888
        %v2901 = vsel %vm2899, %v2862, 0
        %v2904 = vsel %vm2899, %v2863, 0
        %v2907 = vsel %vm2899, %v2864, 0
        %v2910 = vsel %vm2899, %v2865, 0
        %v2913 = vsel %vm2899, %v2866, 0
        %v2916 = vsel %vm2899, %v2867, 0
        %v2919 = vsel %vm2899, %v2868, 0
        %v2922 = vsel %vm2899, %v2869, 0
        %v2925 = vsel %vm2899, %v2870, 0
        %v2928 = vsel %vm2899, %v2871, 0
        %v2931 = vsel %vm2899, %v2872, 0
        %v2934 = vsel %vm2899, %v2873, 0
        %v2937 = vsel %vm2899, %v2874, 0
        %v2940 = vsel %vm2899, %v2875, 0
        %v2943 = vsel %vm2899, %v2876, 0
        %v2946 = vsel %vm2899, %v2877, 0
        %v2949 = vsel %vm2899, %v2878, 0
        %v2952 = vsel %vm2899, %v2879, 0
        %v2955 = vsel %vm2899, %v2880, 0
        %v2958 = vsel %vm2899, %v2881, 0
        %v2961 = vsel %vm2899, %v2882, 0
        %v2964 = vsel %vm2899, %v2883, 0
        %v2967 = vsel %vm2899, %v2884, 0
        %v2970 = vsel %vm2899, %v2885, 0
        %v2973 = vsel %vm2899, %v2886, 0
        %v2976 = vsel %vm2899, %v2887, 0
        %v2979 = vsel %vm2899, %v2888, 0
        %v2982 = vsel %vm2899, %v2889, 0
        %v2985 = vsel %vm2899, %v2890, 0
        %v2988 = vsel %vm2899, %v2891, 0
        %v2991 = vsel %vm2899, %v2892, 0
        %v2994 = vsel %vm2899, %v2893, 0
        %v2997 = vsel %vm569, %v2898, 0
        %2999 = vmatprep.subr.mxu0 0.0
        %3000 = vmatpush1.msra.mxu0 0.0
        %3001 = vmatprep.subr.mxu0 0.0
        %3002 = vmatpush1.msra.mxu0 0.0
        %3003 = vmatprep.subr.mxu0 0.0
        %3004 = vmatpush1.msra.mxu0 0.0
        %3005 = vmatprep.subr.mxu0 0.0
        %3006 = vmatpush1.msra.mxu0 0.0
        %3007 = vmatprep.subr.mxu0 0.0
        %3008 = vmatpush1.msra.mxu0 0.0
        %3009 = vmatprep.subr.mxu0 0.0
        %3010 = vmatpush1.msra.mxu0 0.0
        %3011 = vmatprep.subr.mxu0 0.0
        %3012 = vmatpush1.msra.mxu0 0.0
        %3013 = vmatprep.subr.mxu0 0.0
        %3014 = vmatpush1.msra.mxu0 0.0
        %3015 = vmatprep.subr.mxu0 0.0
        %3016 = vmatpush1.msra.mxu0 0.0
        %3017 = vmatprep.subr.mxu0 0.0
        %3018 = vmatpush1.msra.mxu0 0.0
        %3019 = vmatprep.subr.mxu0 0.0
        %3020 = vmatpush1.msra.mxu0 0.0
        %3021 = vmatprep.subr.mxu0 0.0
        %3022 = vmatpush1.msra.mxu0 %v2997
        %3023 = vmatprep.subr.mxu0 0.0
        %3024 = vmatpush1.msra.mxu0 %v2897
        %3025 = vmatprep.subr.mxu0 0.0
        %3026 = vmatpush1.msra.mxu0 %v2896
        %3027 = vmatprep.subr.mxu0 0.0
        %3028 = vmatpush1.msra.mxu0 %v2895
        %3029 = vmatprep.subr.mxu0 0.0
        %3030 = vmatpush1.msra.mxu0 %v2894
        %3031 = vmatprep.subr.mxu0 0.0
        %3032 = vmatpush2.msra.mxu0 0.0
        %3033 = vmatprep.subr.mxu0 0.0
        %3034 = vmatpush2.msra.mxu0 0.0
        %3035 = vmatprep.subr.mxu0 0.0
        %3036 = vmatpush2.msra.mxu0 0.0
        %3037 = vmatprep.subr.mxu0 0.0
        %3038 = vmatpush2.msra.mxu0 0.0
        %3039 = vmatprep.subr.mxu0 0.0
        %3040 = vmatpush2.msra.mxu0 0.0
        %3041 = vmatprep.subr.mxu0 0.0
        %3042 = vmatpush2.msra.mxu0 0.0
        %3043 = vmatprep.subr.mxu0 0.0
        %3044 = vmatpush2.msra.mxu0 0.0
        %3045 = vmatprep.subr.mxu0 0.0
        %3046 = vmatpush2.msra.mxu0 0.0
        %3047 = vmatprep.subr.mxu0 0.0
        %3048 = vmatpush2.msra.mxu0 0.0
        %3049 = vmatprep.subr.mxu0 0.0
        %3050 = vmatpush2.msra.mxu0 0.0
        %3051 = vmatprep.subr.mxu0 0.0
        %3052 = vmatpush2.msra.mxu0 0.0
        %3053 = vmatprep.subr.mxu0 0.0
        %3054 = vmatpush2.msra.mxu0 0.0
        %3055 = vmatprep.subr.mxu0 0.0
        %3056 = vmatpush2.msra.mxu0 0.0
        %3057 = vmatprep.subr.mxu0 0.0
        %3058 = vmatpush2.msra.mxu0 0.0
        %3059 = vmatprep.subr.mxu0 0.0
        %3060 = vmatpush2.msra.mxu0 0.0
        %3061 = vmatprep.subr.mxu0 0.0
        %3062 = vmatpush2.msra.mxu0 0.0
        %3063 = vmatprep.mubr.f32.mxu0 0.0
        %3064 = vmatmul.mubr.f32.gmra.mxu0 %v2901
        %v3065 = vpop.f32.mrf.mxu0
        %v3066 = vadd.f32 0.0, %v3065
        %v3067 = vpop.f32.mrf.mxu0
        %3068 = vmatprep.mubr.f32.mxu0 0.0
        %3069 = vmatmul.mubr.f32.gmra.mxu0 %v2904
        %v3070 = vpop.f32.mrf.mxu0
        %v3071 = vadd.f32 0.0, %v3070
        %v3072 = vpop.f32.mrf.mxu0
        %3073 = vmatprep.mubr.f32.mxu0 0.0
        %3074 = vmatmul.mubr.f32.gmra.mxu0 %v2907
        %v3075 = vpop.f32.mrf.mxu0
        %v3076 = vadd.f32 0.0, %v3075
        %v3077 = vpop.f32.mrf.mxu0
        %3078 = vmatprep.mubr.f32.mxu0 0.0
        %3079 = vmatmul.mubr.f32.gmra.mxu0 %v2910
        %v3080 = vpop.f32.mrf.mxu0
        %v3081 = vadd.f32 0.0, %v3080
        %v3082 = vpop.f32.mrf.mxu0
        %3083 = vmatprep.mubr.f32.mxu0 0.0
        %3084 = vmatmul.mubr.f32.gmra.mxu0 %v2913
        %v3085 = vpop.f32.mrf.mxu0
        %v3086 = vadd.f32 0.0, %v3085
        %v3087 = vpop.f32.mrf.mxu0
        %3088 = vmatprep.mubr.f32.mxu0 0.0
        %3089 = vmatmul.mubr.f32.gmra.mxu0 %v2916
        %v3090 = vpop.f32.mrf.mxu0
        %v3091 = vadd.f32 0.0, %v3090
        %v3092 = vpop.f32.mrf.mxu0
        %3093 = vmatprep.mubr.f32.mxu0 0.0
        %3094 = vmatmul.mubr.f32.gmra.mxu0 %v2919
        %v3095 = vpop.f32.mrf.mxu0
        %v3096 = vadd.f32 0.0, %v3095
        %v3097 = vpop.f32.mrf.mxu0
        %3098 = vmatprep.mubr.f32.mxu0 0.0
        %3099 = vmatmul.mubr.f32.gmra.mxu0 %v2922
        %v3100 = vpop.f32.mrf.mxu0
        %v3101 = vadd.f32 0.0, %v3100
        %v3102 = vpop.f32.mrf.mxu0
        %3103 = vmatprep.mubr.f32.mxu0 0.0
        %3104 = vmatmul.mubr.f32.gmra.mxu0 %v2925
        %v3105 = vpop.f32.mrf.mxu0
        %v3106 = vadd.f32 0.0, %v3105
        %v3107 = vpop.f32.mrf.mxu0
        %3108 = vmatprep.mubr.f32.mxu0 0.0
        %3109 = vmatmul.mubr.f32.gmra.mxu0 %v2928
        %v3110 = vpop.f32.mrf.mxu0
        %v3111 = vadd.f32 0.0, %v3110
        %v3112 = vpop.f32.mrf.mxu0
        %3113 = vmatprep.mubr.f32.mxu0 0.0
        %3114 = vmatmul.mubr.f32.gmra.mxu0 %v2931
        %v3115 = vpop.f32.mrf.mxu0
        %v3116 = vadd.f32 0.0, %v3115
        %v3117 = vpop.f32.mrf.mxu0
        %3118 = vmatprep.mubr.f32.mxu0 0.0
        %3119 = vmatmul.mubr.f32.gmra.mxu0 %v2934
        %v3120 = vpop.f32.mrf.mxu0
        %v3121 = vadd.f32 0.0, %v3120
        %v3122 = vpop.f32.mrf.mxu0
        %3123 = vmatprep.mubr.f32.mxu0 0.0
        %3124 = vmatmul.mubr.f32.gmra.mxu0 %v2937
        %v3125 = vpop.f32.mrf.mxu0
        %v3126 = vadd.f32 0.0, %v3125
        %v3127 = vpop.f32.mrf.mxu0
        %3128 = vmatprep.mubr.f32.mxu0 0.0
        %3129 = vmatmul.mubr.f32.gmra.mxu0 %v2940
        %v3130 = vpop.f32.mrf.mxu0
        %v3131 = vadd.f32 0.0, %v3130
        %v3132 = vpop.f32.mrf.mxu0
        %3133 = vmatprep.mubr.f32.mxu0 0.0
        %3134 = vmatmul.mubr.f32.gmra.mxu0 %v2943
        %v3135 = vpop.f32.mrf.mxu0
        %v3136 = vadd.f32 0.0, %v3135
        %v3137 = vpop.f32.mrf.mxu0
        %3138 = vmatprep.mubr.f32.mxu0 0.0
        %3139 = vmatmul.mubr.f32.gmra.mxu0 %v2946
        %v3140 = vpop.f32.mrf.mxu0
        %v3141 = vadd.f32 0.0, %v3140
        %v3142 = vpop.f32.mrf.mxu0
        %3143 = vmatprep.mubr.f32.mxu0 0.0
        %3144 = vmatmul.mubr.f32.gmra.mxu0 %v2949
        %v3145 = vpop.f32.mrf.mxu0
        %v3146 = vadd.f32 0.0, %v3145
        %v3147 = vpop.f32.mrf.mxu0
        %3148 = vmatprep.mubr.f32.mxu0 0.0
        %3149 = vmatmul.mubr.f32.gmra.mxu0 %v2952
        %v3150 = vpop.f32.mrf.mxu0
        %v3151 = vadd.f32 0.0, %v3150
        %v3152 = vpop.f32.mrf.mxu0
        %3153 = vmatprep.mubr.f32.mxu0 0.0
        %3154 = vmatmul.mubr.f32.gmra.mxu0 %v2955
        %v3155 = vpop.f32.mrf.mxu0
        %v3156 = vadd.f32 0.0, %v3155
        %v3157 = vpop.f32.mrf.mxu0
        %3158 = vmatprep.mubr.f32.mxu0 0.0
        %3159 = vmatmul.mubr.f32.gmra.mxu0 %v2958
        %v3160 = vpop.f32.mrf.mxu0
        %v3161 = vadd.f32 0.0, %v3160
        %v3162 = vpop.f32.mrf.mxu0
        %3163 = vmatprep.mubr.f32.mxu0 0.0
        %3164 = vmatmul.mubr.f32.gmra.mxu0 %v2961
        %v3165 = vpop.f32.mrf.mxu0
        %v3166 = vadd.f32 0.0, %v3165
        %v3167 = vpop.f32.mrf.mxu0
        %3168 = vmatprep.mubr.f32.mxu0 0.0
        %3169 = vmatmul.mubr.f32.gmra.mxu0 %v2964
        %v3170 = vpop.f32.mrf.mxu0
        %v3171 = vadd.f32 0.0, %v3170
        %v3172 = vpop.f32.mrf.mxu0
        %3173 = vmatprep.mubr.f32.mxu0 0.0
        %3174 = vmatmul.mubr.f32.gmra.mxu0 %v2967
        %v3175 = vpop.f32.mrf.mxu0
        %v3176 = vadd.f32 0.0, %v3175
        %v3177 = vpop.f32.mrf.mxu0
        %3178 = vmatprep.mubr.f32.mxu0 0.0
        %3179 = vmatmul.mubr.f32.gmra.mxu0 %v2970
        %v3180 = vpop.f32.mrf.mxu0
        %v3181 = vadd.f32 0.0, %v3180
        %v3182 = vpop.f32.mrf.mxu0
        %3183 = vmatprep.mubr.f32.mxu0 0.0
        %3184 = vmatmul.mubr.f32.gmra.mxu0 %v2973
        %v3185 = vpop.f32.mrf.mxu0
        %v3186 = vadd.f32 0.0, %v3185
        %v3187 = vpop.f32.mrf.mxu0
        %3188 = vmatprep.mubr.f32.mxu0 0.0
        %3189 = vmatmul.mubr.f32.gmra.mxu0 %v2976
        %v3190 = vpop.f32.mrf.mxu0
        %v3191 = vadd.f32 0.0, %v3190
        %v3192 = vpop.f32.mrf.mxu0
        %3193 = vmatprep.mubr.f32.mxu0 0.0
        %3194 = vmatmul.mubr.f32.gmra.mxu0 %v2979
        %v3195 = vpop.f32.mrf.mxu0
        %v3196 = vadd.f32 0.0, %v3195
        %v3197 = vpop.f32.mrf.mxu0
        %3198 = vmatprep.mubr.f32.mxu0 0.0
        %3199 = vmatmul.mubr.f32.gmra.mxu0 %v2982
        %v3200 = vpop.f32.mrf.mxu0
        %v3201 = vadd.f32 0.0, %v3200
        %v3202 = vpop.f32.mrf.mxu0
        %3203 = vmatprep.mubr.f32.mxu0 0.0
        %3204 = vmatmul.mubr.f32.gmra.mxu0 %v2985
        %v3205 = vpop.f32.mrf.mxu0
        %v3206 = vadd.f32 0.0, %v3205
        %v3207 = vpop.f32.mrf.mxu0
        %3208 = vmatprep.mubr.f32.mxu0 0.0
        %3209 = vmatmul.mubr.f32.gmra.mxu0 %v2988
        %v3210 = vpop.f32.mrf.mxu0
        %v3211 = vadd.f32 0.0, %v3210
        %v3212 = vpop.f32.mrf.mxu0
        %3213 = vmatprep.mubr.f32.mxu0 0.0
        %3214 = vmatmul.mubr.f32.gmra.mxu0 %v2991
        %v3215 = vpop.f32.mrf.mxu0
        %v3216 = vadd.f32 0.0, %v3215
        %v3217 = vpop.f32.mrf.mxu0
        %3218 = vmatprep.mubr.f32.mxu0 0.0
        %3219 = vmatmul.mubr.f32.gmra.mxu0 %v2994
        %v3220 = vpop.f32.mrf.mxu0
        %v3221 = vadd.f32 0.0, %v3220
        %v3222 = vpop.f32.mrf.mxu0
        %3223 = vdwg.mxu0
        %v3224 = vld [vmem:[%s5] sm:$0x1]
        %v3225 = vld [vmem:[%s6] sm:$0x1]
        %v3226 = vsel %vm472, %v3066, 0.0
        %v3227 = vsel %vm472, %v3071, 0.0
        %v3228 = vadd.f32 %v3226, %v3227
        %v3229 = vsel %vm472, %v3076, 0.0
        %v3230 = vadd.f32 %v3228, %v3229
        %v3231 = vsel %vm472, %v3081, 0.0
        %v3232 = vadd.f32 %v3230, %v3231
        %v3233 = vsel %vm472, %v3086, 0.0
        %v3234 = vadd.f32 %v3232, %v3233
        %v3235 = vsel %vm472, %v3091, 0.0
        %v3236 = vadd.f32 %v3234, %v3235
        %v3237 = vsel %vm472, %v3096, 0.0
        %v3238 = vadd.f32 %v3236, %v3237
        %v3239 = vsel %vm472, %v3101, 0.0
        %v3240 = vadd.f32 %v3238, %v3239
        %v3241 = vsel %vm472, %v3106, 0.0
        %v3242 = vadd.f32 %v3240, %v3241
        %v3243 = vsel %vm472, %v3111, 0.0
        %v3244 = vadd.f32 %v3242, %v3243
        %v3245 = vsel %vm472, %v3116, 0.0
        %v3246 = vadd.f32 %v3244, %v3245
        %v3247 = vsel %vm472, %v3121, 0.0
        %v3248 = vadd.f32 %v3246, %v3247
        %v3249 = vsel %vm472, %v3126, 0.0
        %v3250 = vadd.f32 %v3248, %v3249
        %v3251 = vsel %vm472, %v3131, 0.0
        %v3252 = vadd.f32 %v3250, %v3251
        %v3253 = vsel %vm472, %v3136, 0.0
        %v3254 = vadd.f32 %v3252, %v3253
        %v3255 = vsel %vm472, %v3141, 0.0
        %v3256 = vadd.f32 %v3254, %v3255
        %v3257 = vsel %vm472, %v3146, 0.0
        %v3258 = vadd.f32 %v3256, %v3257
        %v3259 = vsel %vm472, %v3151, 0.0
        %v3260 = vadd.f32 %v3258, %v3259
        %v3261 = vsel %vm472, %v3156, 0.0
        %v3262 = vadd.f32 %v3260, %v3261
        %v3263 = vsel %vm472, %v3161, 0.0
        %v3264 = vadd.f32 %v3262, %v3263
        %v3265 = vsel %vm472, %v3166, 0.0
        %v3266 = vadd.f32 %v3264, %v3265
        %v3267 = vsel %vm472, %v3171, 0.0
        %v3268 = vadd.f32 %v3266, %v3267
        %v3269 = vsel %vm472, %v3176, 0.0
        %v3270 = vadd.f32 %v3268, %v3269
        %v3271 = vsel %vm472, %v3181, 0.0
        %v3272 = vadd.f32 %v3270, %v3271
        %v3273 = vsel %vm472, %v3186, 0.0
        %v3274 = vadd.f32 %v3272, %v3273
        %v3275 = vsel %vm472, %v3191, 0.0
        %v3276 = vadd.f32 %v3274, %v3275
        %v3277 = vsel %vm472, %v3196, 0.0
        %v3278 = vadd.f32 %v3276, %v3277
        %v3279 = vsel %vm472, %v3201, 0.0
        %v3280 = vadd.f32 %v3278, %v3279
        %v3281 = vsel %vm472, %v3206, 0.0
        %v3282 = vadd.f32 %v3280, %v3281
        %v3283 = vsel %vm472, %v3211, 0.0
        %v3284 = vadd.f32 %v3282, %v3283
        %v3285 = vsel %vm472, %v3216, 0.0
        %v3286 = vadd.f32 %v3284, %v3285
        %v3287 = vsel %vm472, %v3221, 0.0
        %v3288 = vadd.f32 %v3286, %v3287
        %v3289 = vrot.slane %v3288, 4
        %v3290 = vadd.f32 %v3288, %v3289
        %v3291 = vrot.slane %v3290, 2
        %v3292 = vadd.f32 %v3290, %v3291
        %v3293 = vrot.slane %v3292, 1
        %v3294 = vadd.f32 %v3292, %v3293
        %v3295 = vmul.f32 %v3066, %v3066
        %v3296 = vmul.f32 %v3071, %v3071
        %v3297 = vmul.f32 %v3076, %v3076
        %v3298 = vmul.f32 %v3081, %v3081
        %v3299 = vmul.f32 %v3086, %v3086
        %v3300 = vmul.f32 %v3091, %v3091
        %v3301 = vmul.f32 %v3096, %v3096
        %v3302 = vmul.f32 %v3101, %v3101
        %v3303 = vmul.f32 %v3106, %v3106
        %v3304 = vmul.f32 %v3111, %v3111
        %v3305 = vmul.f32 %v3116, %v3116
        %v3306 = vmul.f32 %v3121, %v3121
        %v3307 = vmul.f32 %v3126, %v3126
        %v3308 = vmul.f32 %v3131, %v3131
        %v3309 = vmul.f32 %v3136, %v3136
        %v3310 = vmul.f32 %v3141, %v3141
        %v3311 = vmul.f32 %v3146, %v3146
        %v3312 = vmul.f32 %v3151, %v3151
        %v3313 = vmul.f32 %v3156, %v3156
        %v3314 = vmul.f32 %v3161, %v3161
        %v3315 = vmul.f32 %v3166, %v3166
        %v3316 = vmul.f32 %v3171, %v3171
        %v3317 = vmul.f32 %v3176, %v3176
        %v3318 = vmul.f32 %v3181, %v3181
        %v3319 = vmul.f32 %v3186, %v3186
        %v3320 = vmul.f32 %v3191, %v3191
        %v3321 = vmul.f32 %v3196, %v3196
        %v3322 = vmul.f32 %v3201, %v3201
        %v3323 = vmul.f32 %v3206, %v3206
        %v3324 = vmul.f32 %v3211, %v3211
        %v3325 = vmul.f32 %v3216, %v3216
        %v3326 = vmul.f32 %v3221, %v3221
        %v3327 = vsel %vm472, %v3295, 0.0
        %v3328 = vsel %vm472, %v3296, 0.0
        %v3329 = vadd.f32 %v3327, %v3328
        %v3330 = vsel %vm472, %v3297, 0.0
        %v3331 = vadd.f32 %v3329, %v3330
        %v3332 = vsel %vm472, %v3298, 0.0
        %v3333 = vadd.f32 %v3331, %v3332
        %v3334 = vsel %vm472, %v3299, 0.0
        %v3335 = vadd.f32 %v3333, %v3334
        %v3336 = vsel %vm472, %v3300, 0.0
        %v3337 = vadd.f32 %v3335, %v3336
        %v3338 = vsel %vm472, %v3301, 0.0
        %v3339 = vadd.f32 %v3337, %v3338
        %v3340 = vsel %vm472, %v3302, 0.0
        %v3341 = vadd.f32 %v3339, %v3340
        %v3342 = vsel %vm472, %v3303, 0.0
        %v3343 = vadd.f32 %v3341, %v3342
        %v3344 = vsel %vm472, %v3304, 0.0
        %v3345 = vadd.f32 %v3343, %v3344
        %v3346 = vsel %vm472, %v3305, 0.0
        %v3347 = vadd.f32 %v3345, %v3346
        %v3348 = vsel %vm472, %v3306, 0.0
        %v3349 = vadd.f32 %v3347, %v3348
        %v3350 = vsel %vm472, %v3307, 0.0
        %v3351 = vadd.f32 %v3349, %v3350
        %v3352 = vsel %vm472, %v3308, 0.0
        %v3353 = vadd.f32 %v3351, %v3352
        %v3354 = vsel %vm472, %v3309, 0.0
        %v3355 = vadd.f32 %v3353, %v3354
        %v3356 = vsel %vm472, %v3310, 0.0
        %v3357 = vadd.f32 %v3355, %v3356
        %v3358 = vsel %vm472, %v3311, 0.0
        %v3359 = vadd.f32 %v3357, %v3358
        %v3360 = vsel %vm472, %v3312, 0.0
        %v3361 = vadd.f32 %v3359, %v3360
        %v3362 = vsel %vm472, %v3313, 0.0
        %v3363 = vadd.f32 %v3361, %v3362
        %v3364 = vsel %vm472, %v3314, 0.0
        %v3365 = vadd.f32 %v3363, %v3364
        %v3366 = vsel %vm472, %v3315, 0.0
        %v3367 = vadd.f32 %v3365, %v3366
        %v3368 = vsel %vm472, %v3316, 0.0
        %v3369 = vadd.f32 %v3367, %v3368
        %v3370 = vsel %vm472, %v3317, 0.0
        %v3371 = vadd.f32 %v3369, %v3370
        %v3372 = vsel %vm472, %v3318, 0.0
        %v3373 = vadd.f32 %v3371, %v3372
        %v3374 = vsel %vm472, %v3319, 0.0
        %v3375 = vadd.f32 %v3373, %v3374
        %v3376 = vsel %vm472, %v3320, 0.0
        %v3377 = vadd.f32 %v3375, %v3376
        %v3378 = vsel %vm472, %v3321, 0.0
        %v3379 = vadd.f32 %v3377, %v3378
        %v3380 = vsel %vm472, %v3322, 0.0
        %v3381 = vadd.f32 %v3379, %v3380
        %v3382 = vsel %vm472, %v3323, 0.0
        %v3383 = vadd.f32 %v3381, %v3382
        %v3384 = vsel %vm472, %v3324, 0.0
        %v3385 = vadd.f32 %v3383, %v3384
        %v3386 = vsel %vm472, %v3325, 0.0
        %v3387 = vadd.f32 %v3385, %v3386
        %v3388 = vsel %vm472, %v3326, 0.0
        %v3389 = vadd.f32 %v3387, %v3388
        %v3390 = vrot.slane %v3389, 4
        %v3391 = vadd.f32 %v3389, %v3390
        %v3392 = vrot.slane %v3391, 2
        %v3393 = vadd.f32 %v3391, %v3392
        %v3394 = vrot.slane %v3393, 1
        %v3395 = vadd.f32 %v3393, %v3394
        %v3396 = vmul.f32 %v3294, 0.00390625
        %v3397 = vmul.f32 %v3395, 0.00390625
        %v3398 = vmul.f32 %v3396, %v3396
        %v3399 = vsub.f32 %v3397, %v3398
        %v3400 = vsub.f32 %v3066, %v3396
        %v3401 = vsub.f32 %v3071, %v3396
        %v3402 = vsub.f32 %v3076, %v3396
        %v3403 = vsub.f32 %v3081, %v3396
        %v3404 = vsub.f32 %v3086, %v3396
        %v3405 = vsub.f32 %v3091, %v3396
        %v3406 = vsub.f32 %v3096, %v3396
        %v3407 = vsub.f32 %v3101, %v3396
        %v3408 = vsub.f32 %v3106, %v3396
        %v3409 = vsub.f32 %v3111, %v3396
        %v3410 = vsub.f32 %v3116, %v3396
        %v3411 = vsub.f32 %v3121, %v3396
        %v3412 = vsub.f32 %v3126, %v3396
        %v3413 = vsub.f32 %v3131, %v3396
        %v3414 = vsub.f32 %v3136, %v3396
        %v3415 = vsub.f32 %v3141, %v3396
        %v3416 = vsub.f32 %v3146, %v3396
        %v3417 = vsub.f32 %v3151, %v3396
        %v3418 = vsub.f32 %v3156, %v3396
        %v3419 = vsub.f32 %v3161, %v3396
        %v3420 = vsub.f32 %v3166, %v3396
        %v3421 = vsub.f32 %v3171, %v3396
        %v3422 = vsub.f32 %v3176, %v3396
        %v3423 = vsub.f32 %v3181, %v3396
        %v3424 = vsub.f32 %v3186, %v3396
        %v3425 = vsub.f32 %v3191, %v3396
        %v3426 = vsub.f32 %v3196, %v3396
        %v3427 = vsub.f32 %v3201, %v3396
        %v3428 = vsub.f32 %v3206, %v3396
        %v3429 = vsub.f32 %v3211, %v3396
        %v3430 = vsub.f32 %v3216, %v3396
        %v3431 = vsub.f32 %v3221, %v3396
        %v3432 = vadd.f32 %v3399, 1e-05
        %v3433 = vrsqrt.pop %v3432
        %v3434 = vmul.f32 %v3400, %v3433
        %v3435 = vmul.f32 %v3401, %v3433
        %v3436 = vmul.f32 %v3402, %v3433
        %v3437 = vmul.f32 %v3403, %v3433
        %v3438 = vmul.f32 %v3404, %v3433
        %v3439 = vmul.f32 %v3405, %v3433
        %v3440 = vmul.f32 %v3406, %v3433
        %v3441 = vmul.f32 %v3407, %v3433
        %v3442 = vmul.f32 %v3408, %v3433
        %v3443 = vmul.f32 %v3409, %v3433
        %v3444 = vmul.f32 %v3410, %v3433
        %v3445 = vmul.f32 %v3411, %v3433
        %v3446 = vmul.f32 %v3412, %v3433
        %v3447 = vmul.f32 %v3413, %v3433
        %v3448 = vmul.f32 %v3414, %v3433
        %v3449 = vmul.f32 %v3415, %v3433
        %v3450 = vmul.f32 %v3416, %v3433
        %v3451 = vmul.f32 %v3417, %v3433
        %v3452 = vmul.f32 %v3418, %v3433
        %v3453 = vmul.f32 %v3419, %v3433
        %v3454 = vmul.f32 %v3420, %v3433
        %v3455 = vmul.f32 %v3421, %v3433
        %v3456 = vmul.f32 %v3422, %v3433
        %v3457 = vmul.f32 %v3423, %v3433
        %v3458 = vmul.f32 %v3424, %v3433
        %v3459 = vmul.f32 %v3425, %v3433
        %v3460 = vmul.f32 %v3426, %v3433
        %v3461 = vmul.f32 %v3427, %v3433
        %v3462 = vmul.f32 %v3428, %v3433
        %v3463 = vmul.f32 %v3429, %v3433
        %v3464 = vmul.f32 %v3430, %v3433
        %v3465 = vmul.f32 %v3431, %v3433
        %v3467 = vlaneseq
        %v3468 = vshrl.u32 %v3467, 7
        %v3469 = vsub.s32 0, %v3468
        %v3470 = vrot.slane %v3224, %v3469
        %v3472 = vmul.f32 %v3434, %v3470
        %v3473 = vmul.f32 %v3435, %v3470
        %v3474 = vmul.f32 %v3436, %v3470
        %v3475 = vmul.f32 %v3437, %v3470
        %v3476 = vmul.f32 %v3438, %v3470
        %v3477 = vmul.f32 %v3439, %v3470
        %v3478 = vmul.f32 %v3440, %v3470
        %v3479 = vmul.f32 %v3441, %v3470
        %v3480 = vmul.f32 %v3442, %v3470
        %v3481 = vmul.f32 %v3443, %v3470
        %v3482 = vmul.f32 %v3444, %v3470
        %v3483 = vmul.f32 %v3445, %v3470
        %v3484 = vmul.f32 %v3446, %v3470
        %v3485 = vmul.f32 %v3447, %v3470
        %v3486 = vmul.f32 %v3448, %v3470
        %v3487 = vmul.f32 %v3449, %v3470
        %v3488 = vmul.f32 %v3450, %v3470
        %v3489 = vmul.f32 %v3451, %v3470
        %v3490 = vmul.f32 %v3452, %v3470
        %v3491 = vmul.f32 %v3453, %v3470
        %v3492 = vmul.f32 %v3454, %v3470
        %v3493 = vmul.f32 %v3455, %v3470
        %v3494 = vmul.f32 %v3456, %v3470
        %v3495 = vmul.f32 %v3457, %v3470
        %v3496 = vmul.f32 %v3458, %v3470
        %v3497 = vmul.f32 %v3459, %v3470
        %v3498 = vmul.f32 %v3460, %v3470
        %v3499 = vmul.f32 %v3461, %v3470
        %v3500 = vmul.f32 %v3462, %v3470
        %v3501 = vmul.f32 %v3463, %v3470
        %v3502 = vmul.f32 %v3464, %v3470
        %v3503 = vmul.f32 %v3465, %v3470
        %v3505 = vlaneseq
        %v3506 = vshrl.u32 %v3505, 7
        %v3507 = vsub.s32 0, %v3506
        %v3508 = vrot.slane %v3225, %v3507
        %v3510 = vadd.f32 %v3472, %v3508
        %v3511 = vadd.f32 %v3473, %v3508
        %v3512 = vadd.f32 %v3474, %v3508
        %v3513 = vadd.f32 %v3475, %v3508
        %v3514 = vadd.f32 %v3476, %v3508
        %v3515 = vadd.f32 %v3477, %v3508
        %v3516 = vadd.f32 %v3478, %v3508
        %v3517 = vadd.f32 %v3479, %v3508
        %v3518 = vadd.f32 %v3480, %v3508
        %v3519 = vadd.f32 %v3481, %v3508
        %v3520 = vadd.f32 %v3482, %v3508
        %v3521 = vadd.f32 %v3483, %v3508
        %v3522 = vadd.f32 %v3484, %v3508
        %v3523 = vadd.f32 %v3485, %v3508
        %v3524 = vadd.f32 %v3486, %v3508
        %v3525 = vadd.f32 %v3487, %v3508
        %v3526 = vadd.f32 %v3488, %v3508
        %v3527 = vadd.f32 %v3489, %v3508
        %v3528 = vadd.f32 %v3490, %v3508
        %v3529 = vadd.f32 %v3491, %v3508
        %v3530 = vadd.f32 %v3492, %v3508
        %v3531 = vadd.f32 %v3493, %v3508
        %v3532 = vadd.f32 %v3494, %v3508
        %v3533 = vadd.f32 %v3495, %v3508
        %v3534 = vadd.f32 %v3496, %v3508
        %v3535 = vadd.f32 %v3497, %v3508
        %v3536 = vadd.f32 %v3498, %v3508
        %v3537 = vadd.f32 %v3499, %v3508
        %v3538 = vadd.f32 %v3500, %v3508
        %v3539 = vadd.f32 %v3501, %v3508
        %v3540 = vadd.f32 %v3502, %v3508
        %v3541 = vadd.f32 %v3503, %v3508
        %v3542 = vmax.f32 %v3510, 0.0
        %v3543 = vmax.f32 %v3511, 0.0
        %v3544 = vmax.f32 %v3512, 0.0
        %v3545 = vmax.f32 %v3513, 0.0
        %v3546 = vmax.f32 %v3514, 0.0
        %v3547 = vmax.f32 %v3515, 0.0
        %v3548 = vmax.f32 %v3516, 0.0
        %v3549 = vmax.f32 %v3517, 0.0
        %v3550 = vmax.f32 %v3518, 0.0
        %v3551 = vmax.f32 %v3519, 0.0
        %v3552 = vmax.f32 %v3520, 0.0
        %v3553 = vmax.f32 %v3521, 0.0
        %v3554 = vmax.f32 %v3522, 0.0
        %v3555 = vmax.f32 %v3523, 0.0
        %v3556 = vmax.f32 %v3524, 0.0
        %v3557 = vmax.f32 %v3525, 0.0
        %v3558 = vmax.f32 %v3526, 0.0
        %v3559 = vmax.f32 %v3527, 0.0
        %v3560 = vmax.f32 %v3528, 0.0
        %v3561 = vmax.f32 %v3529, 0.0
        %v3562 = vmax.f32 %v3530, 0.0
        %v3563 = vmax.f32 %v3531, 0.0
        %v3564 = vmax.f32 %v3532, 0.0
        %v3565 = vmax.f32 %v3533, 0.0
        %v3566 = vmax.f32 %v3534, 0.0
        %v3567 = vmax.f32 %v3535, 0.0
        %v3568 = vmax.f32 %v3536, 0.0
        %v3569 = vmax.f32 %v3537, 0.0
        %v3570 = vmax.f32 %v3538, 0.0
        %v3571 = vmax.f32 %v3539, 0.0
        %v3572 = vmax.f32 %v3540, 0.0
        %v3573 = vmax.f32 %v3541, 0.0
        %v3574 = vld [vmem:[%s7] sm:$0xf]
        %v3576 = vsel %vm472, %v3542, 0
        %v3579 = vsel %vm472, %v3543, 0
        %v3582 = vsel %vm472, %v3544, 0
        %v3585 = vsel %vm472, %v3545, 0
        %v3588 = vsel %vm472, %v3546, 0
        %v3591 = vsel %vm472, %v3547, 0
        %v3594 = vsel %vm472, %v3548, 0
        %v3597 = vsel %vm472, %v3549, 0
        %v3600 = vsel %vm472, %v3550, 0
        %v3603 = vsel %vm472, %v3551, 0
        %v3606 = vsel %vm472, %v3552, 0
        %v3609 = vsel %vm472, %v3553, 0
        %v3612 = vsel %vm472, %v3554, 0
        %v3615 = vsel %vm472, %v3555, 0
        %v3618 = vsel %vm472, %v3556, 0
        %v3621 = vsel %vm472, %v3557, 0
        %v3624 = vsel %vm472, %v3558, 0
        %v3627 = vsel %vm472, %v3559, 0
        %v3630 = vsel %vm472, %v3560, 0
        %v3633 = vsel %vm472, %v3561, 0
        %v3636 = vsel %vm472, %v3562, 0
        %v3639 = vsel %vm472, %v3563, 0
        %v3642 = vsel %vm472, %v3564, 0
        %v3645 = vsel %vm472, %v3565, 0
        %v3648 = vsel %vm472, %v3566, 0
        %v3651 = vsel %vm472, %v3567, 0
        %v3654 = vsel %vm472, %v3568, 0
        %v3657 = vsel %vm472, %v3569, 0
        %v3660 = vsel %vm472, %v3570, 0
        %v3663 = vsel %vm472, %v3571, 0
        %v3666 = vsel %vm472, %v3572, 0
        %v3669 = vsel %vm472, %v3573, 0
        %v3672 = vsel %vm569, %v3574, 0
        %3674 = vmatprep.subr.mxu0 0.0
        %3675 = vmatpush1.msra.mxu0 0.0
        %3676 = vmatprep.subr.mxu0 0.0
        %3677 = vmatpush1.msra.mxu0 0.0
        %3678 = vmatprep.subr.mxu0 0.0
        %3679 = vmatpush1.msra.mxu0 0.0
        %3680 = vmatprep.subr.mxu0 0.0
        %3681 = vmatpush1.msra.mxu0 0.0
        %3682 = vmatprep.subr.mxu0 0.0
        %3683 = vmatpush1.msra.mxu0 0.0
        %3684 = vmatprep.subr.mxu0 0.0
        %3685 = vmatpush1.msra.mxu0 0.0
        %3686 = vmatprep.subr.mxu0 0.0
        %3687 = vmatpush1.msra.mxu0 0.0
        %3688 = vmatprep.subr.mxu0 0.0
        %3689 = vmatpush1.msra.mxu0 0.0
        %3690 = vmatprep.subr.mxu0 0.0
        %3691 = vmatpush1.msra.mxu0 0.0
        %3692 = vmatprep.subr.mxu0 0.0
        %3693 = vmatpush1.msra.mxu0 0.0
        %3694 = vmatprep.subr.mxu0 0.0
        %3695 = vmatpush1.msra.mxu0 0.0
        %3696 = vmatprep.subr.mxu0 0.0
        %3697 = vmatpush1.msra.mxu0 0.0
        %3698 = vmatprep.subr.mxu0 0.0
        %3699 = vmatpush1.msra.mxu0 0.0
        %3700 = vmatprep.subr.mxu0 0.0
        %3701 = vmatpush1.msra.mxu0 0.0
        %3702 = vmatprep.subr.mxu0 0.0
        %3703 = vmatpush1.msra.mxu0 0.0
        %3704 = vmatprep.subr.mxu0 0.0
        %3705 = vmatpush1.msra.mxu0 %v3672
        %3706 = vmatprep.subr.mxu0 0.0
        %3707 = vmatpush2.msra.mxu0 0.0
        %3708 = vmatprep.subr.mxu0 0.0
        %3709 = vmatpush2.msra.mxu0 0.0
        %3710 = vmatprep.subr.mxu0 0.0
        %3711 = vmatpush2.msra.mxu0 0.0
        %3712 = vmatprep.subr.mxu0 0.0
        %3713 = vmatpush2.msra.mxu0 0.0
        %3714 = vmatprep.subr.mxu0 0.0
        %3715 = vmatpush2.msra.mxu0 0.0
        %3716 = vmatprep.subr.mxu0 0.0
        %3717 = vmatpush2.msra.mxu0 0.0
        %3718 = vmatprep.subr.mxu0 0.0
        %3719 = vmatpush2.msra.mxu0 0.0
        %3720 = vmatprep.subr.mxu0 0.0
        %3721 = vmatpush2.msra.mxu0 0.0
        %3722 = vmatprep.subr.mxu0 0.0
        %3723 = vmatpush2.msra.mxu0 0.0
        %3724 = vmatprep.subr.mxu0 0.0
        %3725 = vmatpush2.msra.mxu0 0.0
        %3726 = vmatprep.subr.mxu0 0.0
        %3727 = vmatpush2.msra.mxu0 0.0
        %3728 = vmatprep.subr.mxu0 0.0
        %3729 = vmatpush2.msra.mxu0 0.0
        %3730 = vmatprep.subr.mxu0 0.0
        %3731 = vmatpush2.msra.mxu0 0.0
        %3732 = vmatprep.subr.mxu0 0.0
        %3733 = vmatpush2.msra.mxu0 0.0
        %3734 = vmatprep.subr.mxu0 0.0
        %3735 = vmatpush2.msra.mxu0 0.0
        %3736 = vmatprep.subr.mxu0 0.0
        %3737 = vmatpush2.msra.mxu0 0.0
        %3738 = vmatprep.mubr.f32.mxu0 0.0
        %3739 = vmatmul.mubr.f32.gmra.mxu0 %v3576
        %v3740 = vpop.f32.mrf.mxu0
        %v3741 = vadd.f32 0.0, %v3740
        %v3742 = vpop.f32.mrf.mxu0
        %3743 = vmatprep.mubr.f32.mxu0 0.0
        %3744 = vmatmul.mubr.f32.gmra.mxu0 %v3579
        %v3745 = vpop.f32.mrf.mxu0
        %v3746 = vadd.f32 0.0, %v3745
        %v3747 = vpop.f32.mrf.mxu0
        %3748 = vmatprep.mubr.f32.mxu0 0.0
        %3749 = vmatmul.mubr.f32.gmra.mxu0 %v3582
        %v3750 = vpop.f32.mrf.mxu0
        %v3751 = vadd.f32 0.0, %v3750
        %v3752 = vpop.f32.mrf.mxu0
        %3753 = vmatprep.mubr.f32.mxu0 0.0
        %3754 = vmatmul.mubr.f32.gmra.mxu0 %v3585
        %v3755 = vpop.f32.mrf.mxu0
        %v3756 = vadd.f32 0.0, %v3755
        %v3757 = vpop.f32.mrf.mxu0
        %3758 = vmatprep.mubr.f32.mxu0 0.0
        %3759 = vmatmul.mubr.f32.gmra.mxu0 %v3588
        %v3760 = vpop.f32.mrf.mxu0
        %v3761 = vadd.f32 0.0, %v3760
        %v3762 = vpop.f32.mrf.mxu0
        %3763 = vmatprep.mubr.f32.mxu0 0.0
        %3764 = vmatmul.mubr.f32.gmra.mxu0 %v3591
        %v3765 = vpop.f32.mrf.mxu0
        %v3766 = vadd.f32 0.0, %v3765
        %v3767 = vpop.f32.mrf.mxu0
        %3768 = vmatprep.mubr.f32.mxu0 0.0
        %3769 = vmatmul.mubr.f32.gmra.mxu0 %v3594
        %v3770 = vpop.f32.mrf.mxu0
        %v3771 = vadd.f32 0.0, %v3770
        %v3772 = vpop.f32.mrf.mxu0
        %3773 = vmatprep.mubr.f32.mxu0 0.0
        %3774 = vmatmul.mubr.f32.gmra.mxu0 %v3597
        %v3775 = vpop.f32.mrf.mxu0
        %v3776 = vadd.f32 0.0, %v3775
        %v3777 = vpop.f32.mrf.mxu0
        %3778 = vmatprep.mubr.f32.mxu0 0.0
        %3779 = vmatmul.mubr.f32.gmra.mxu0 %v3600
        %v3780 = vpop.f32.mrf.mxu0
        %v3781 = vadd.f32 0.0, %v3780
        %v3782 = vpop.f32.mrf.mxu0
        %3783 = vmatprep.mubr.f32.mxu0 0.0
        %3784 = vmatmul.mubr.f32.gmra.mxu0 %v3603
        %v3785 = vpop.f32.mrf.mxu0
        %v3786 = vadd.f32 0.0, %v3785
        %v3787 = vpop.f32.mrf.mxu0
        %3788 = vmatprep.mubr.f32.mxu0 0.0
        %3789 = vmatmul.mubr.f32.gmra.mxu0 %v3606
        %v3790 = vpop.f32.mrf.mxu0
        %v3791 = vadd.f32 0.0, %v3790
        %v3792 = vpop.f32.mrf.mxu0
        %3793 = vmatprep.mubr.f32.mxu0 0.0
        %3794 = vmatmul.mubr.f32.gmra.mxu0 %v3609
        %v3795 = vpop.f32.mrf.mxu0
        %v3796 = vadd.f32 0.0, %v3795
        %v3797 = vpop.f32.mrf.mxu0
        %3798 = vmatprep.mubr.f32.mxu0 0.0
        %3799 = vmatmul.mubr.f32.gmra.mxu0 %v3612
        %v3800 = vpop.f32.mrf.mxu0
        %v3801 = vadd.f32 0.0, %v3800
        %v3802 = vpop.f32.mrf.mxu0
        %3803 = vmatprep.mubr.f32.mxu0 0.0
        %3804 = vmatmul.mubr.f32.gmra.mxu0 %v3615
        %v3805 = vpop.f32.mrf.mxu0
        %v3806 = vadd.f32 0.0, %v3805
        %v3807 = vpop.f32.mrf.mxu0
        %3808 = vmatprep.mubr.f32.mxu0 0.0
        %3809 = vmatmul.mubr.f32.gmra.mxu0 %v3618
        %v3810 = vpop.f32.mrf.mxu0
        %v3811 = vadd.f32 0.0, %v3810
        %v3812 = vpop.f32.mrf.mxu0
        %3813 = vmatprep.mubr.f32.mxu0 0.0
        %3814 = vmatmul.mubr.f32.gmra.mxu0 %v3621
        %v3815 = vpop.f32.mrf.mxu0
        %v3816 = vadd.f32 0.0, %v3815
        %v3817 = vpop.f32.mrf.mxu0
        %3818 = vmatprep.mubr.f32.mxu0 0.0
        %3819 = vmatmul.mubr.f32.gmra.mxu0 %v3624
        %v3820 = vpop.f32.mrf.mxu0
        %v3821 = vadd.f32 0.0, %v3820
        %v3822 = vpop.f32.mrf.mxu0
        %3823 = vmatprep.mubr.f32.mxu0 0.0
        %3824 = vmatmul.mubr.f32.gmra.mxu0 %v3627
        %v3825 = vpop.f32.mrf.mxu0
        %v3826 = vadd.f32 0.0, %v3825
        %v3827 = vpop.f32.mrf.mxu0
        %3828 = vmatprep.mubr.f32.mxu0 0.0
        %3829 = vmatmul.mubr.f32.gmra.mxu0 %v3630
        %v3830 = vpop.f32.mrf.mxu0
        %v3831 = vadd.f32 0.0, %v3830
        %v3832 = vpop.f32.mrf.mxu0
        %3833 = vmatprep.mubr.f32.mxu0 0.0
        %3834 = vmatmul.mubr.f32.gmra.mxu0 %v3633
        %v3835 = vpop.f32.mrf.mxu0
        %v3836 = vadd.f32 0.0, %v3835
        %v3837 = vpop.f32.mrf.mxu0
        %3838 = vmatprep.mubr.f32.mxu0 0.0
        %3839 = vmatmul.mubr.f32.gmra.mxu0 %v3636
        %v3840 = vpop.f32.mrf.mxu0
        %v3841 = vadd.f32 0.0, %v3840
        %v3842 = vpop.f32.mrf.mxu0
        %3843 = vmatprep.mubr.f32.mxu0 0.0
        %3844 = vmatmul.mubr.f32.gmra.mxu0 %v3639
        %v3845 = vpop.f32.mrf.mxu0
        %v3846 = vadd.f32 0.0, %v3845
        %v3847 = vpop.f32.mrf.mxu0
        %3848 = vmatprep.mubr.f32.mxu0 0.0
        %3849 = vmatmul.mubr.f32.gmra.mxu0 %v3642
        %v3850 = vpop.f32.mrf.mxu0
        %v3851 = vadd.f32 0.0, %v3850
        %v3852 = vpop.f32.mrf.mxu0
        %3853 = vmatprep.mubr.f32.mxu0 0.0
        %3854 = vmatmul.mubr.f32.gmra.mxu0 %v3645
        %v3855 = vpop.f32.mrf.mxu0
        %v3856 = vadd.f32 0.0, %v3855
        %v3857 = vpop.f32.mrf.mxu0
        %3858 = vmatprep.mubr.f32.mxu0 0.0
        %3859 = vmatmul.mubr.f32.gmra.mxu0 %v3648
        %v3860 = vpop.f32.mrf.mxu0
        %v3861 = vadd.f32 0.0, %v3860
        %v3862 = vpop.f32.mrf.mxu0
        %3863 = vmatprep.mubr.f32.mxu0 0.0
        %3864 = vmatmul.mubr.f32.gmra.mxu0 %v3651
        %v3865 = vpop.f32.mrf.mxu0
        %v3866 = vadd.f32 0.0, %v3865
        %v3867 = vpop.f32.mrf.mxu0
        %3868 = vmatprep.mubr.f32.mxu0 0.0
        %3869 = vmatmul.mubr.f32.gmra.mxu0 %v3654
        %v3870 = vpop.f32.mrf.mxu0
        %v3871 = vadd.f32 0.0, %v3870
        %v3872 = vpop.f32.mrf.mxu0
        %3873 = vmatprep.mubr.f32.mxu0 0.0
        %3874 = vmatmul.mubr.f32.gmra.mxu0 %v3657
        %v3875 = vpop.f32.mrf.mxu0
        %v3876 = vadd.f32 0.0, %v3875
        %v3877 = vpop.f32.mrf.mxu0
        %3878 = vmatprep.mubr.f32.mxu0 0.0
        %3879 = vmatmul.mubr.f32.gmra.mxu0 %v3660
        %v3880 = vpop.f32.mrf.mxu0
        %v3881 = vadd.f32 0.0, %v3880
        %v3882 = vpop.f32.mrf.mxu0
        %3883 = vmatprep.mubr.f32.mxu0 0.0
        %3884 = vmatmul.mubr.f32.gmra.mxu0 %v3663
        %v3885 = vpop.f32.mrf.mxu0
        %v3886 = vadd.f32 0.0, %v3885
        %v3887 = vpop.f32.mrf.mxu0
        %3888 = vmatprep.mubr.f32.mxu0 0.0
        %3889 = vmatmul.mubr.f32.gmra.mxu0 %v3666
        %v3890 = vpop.f32.mrf.mxu0
        %v3891 = vadd.f32 0.0, %v3890
        %v3892 = vpop.f32.mrf.mxu0
        %3893 = vmatprep.mubr.f32.mxu0 0.0
        %3894 = vmatmul.mubr.f32.gmra.mxu0 %v3669
        %v3895 = vpop.f32.mrf.mxu0
        %v3896 = vadd.f32 0.0, %v3895
        %v3897 = vpop.f32.mrf.mxu0
        %3898 = vdwg.mxu0
        %v3899 = vld [vmem:[%s8] sm:$0x1]
        %v3900 = vld [vmem:[%s9] sm:$0x1]
        %vm3901 = vcmask 130048
        %v3902 = vsel %vm3901, %v3741, 0.0
        %v3903 = vsel %vm3901, %v3746, 0.0
        %v3904 = vadd.f32 %v3902, %v3903
        %v3905 = vsel %vm3901, %v3751, 0.0
        %v3906 = vadd.f32 %v3904, %v3905
        %v3907 = vsel %vm3901, %v3756, 0.0
        %v3908 = vadd.f32 %v3906, %v3907
        %v3909 = vsel %vm3901, %v3761, 0.0
        %v3910 = vadd.f32 %v3908, %v3909
        %v3911 = vsel %vm3901, %v3766, 0.0
        %v3912 = vadd.f32 %v3910, %v3911
        %v3913 = vsel %vm3901, %v3771, 0.0
        %v3914 = vadd.f32 %v3912, %v3913
        %v3915 = vsel %vm3901, %v3776, 0.0
        %v3916 = vadd.f32 %v3914, %v3915
        %v3917 = vsel %vm3901, %v3781, 0.0
        %v3918 = vadd.f32 %v3916, %v3917
        %v3919 = vsel %vm3901, %v3786, 0.0
        %v3920 = vadd.f32 %v3918, %v3919
        %v3921 = vsel %vm3901, %v3791, 0.0
        %v3922 = vadd.f32 %v3920, %v3921
        %v3923 = vsel %vm3901, %v3796, 0.0
        %v3924 = vadd.f32 %v3922, %v3923
        %v3925 = vsel %vm3901, %v3801, 0.0
        %v3926 = vadd.f32 %v3924, %v3925
        %v3927 = vsel %vm3901, %v3806, 0.0
        %v3928 = vadd.f32 %v3926, %v3927
        %v3929 = vsel %vm3901, %v3811, 0.0
        %v3930 = vadd.f32 %v3928, %v3929
        %v3931 = vsel %vm3901, %v3816, 0.0
        %v3932 = vadd.f32 %v3930, %v3931
        %v3933 = vsel %vm3901, %v3821, 0.0
        %v3934 = vadd.f32 %v3932, %v3933
        %v3935 = vsel %vm3901, %v3826, 0.0
        %v3936 = vadd.f32 %v3934, %v3935
        %v3937 = vsel %vm3901, %v3831, 0.0
        %v3938 = vadd.f32 %v3936, %v3937
        %v3939 = vsel %vm3901, %v3836, 0.0
        %v3940 = vadd.f32 %v3938, %v3939
        %v3941 = vsel %vm3901, %v3841, 0.0
        %v3942 = vadd.f32 %v3940, %v3941
        %v3943 = vsel %vm3901, %v3846, 0.0
        %v3944 = vadd.f32 %v3942, %v3943
        %v3945 = vsel %vm3901, %v3851, 0.0
        %v3946 = vadd.f32 %v3944, %v3945
        %v3947 = vsel %vm3901, %v3856, 0.0
        %v3948 = vadd.f32 %v3946, %v3947
        %v3949 = vsel %vm3901, %v3861, 0.0
        %v3950 = vadd.f32 %v3948, %v3949
        %v3951 = vsel %vm3901, %v3866, 0.0
        %v3952 = vadd.f32 %v3950, %v3951
        %v3953 = vsel %vm3901, %v3871, 0.0
        %v3954 = vadd.f32 %v3952, %v3953
        %v3955 = vsel %vm3901, %v3876, 0.0
        %v3956 = vadd.f32 %v3954, %v3955
        %v3957 = vsel %vm3901, %v3881, 0.0
        %v3958 = vadd.f32 %v3956, %v3957
        %v3959 = vsel %vm3901, %v3886, 0.0
        %v3960 = vadd.f32 %v3958, %v3959
        %v3961 = vsel %vm3901, %v3891, 0.0
        %v3962 = vadd.f32 %v3960, %v3961
        %v3963 = vsel %vm3901, %v3896, 0.0
        %v3964 = vadd.f32 %v3962, %v3963
        %v3965 = vrot.slane %v3964, 4
        %v3966 = vadd.f32 %v3964, %v3965
        %v3967 = vrot.slane %v3966, 2
        %v3968 = vadd.f32 %v3966, %v3967
        %v3969 = vrot.slane %v3968, 1
        %v3970 = vadd.f32 %v3968, %v3969
        %v3971 = vmul.f32 %v3741, %v3741
        %v3972 = vmul.f32 %v3746, %v3746
        %v3973 = vmul.f32 %v3751, %v3751
        %v3974 = vmul.f32 %v3756, %v3756
        %v3975 = vmul.f32 %v3761, %v3761
        %v3976 = vmul.f32 %v3766, %v3766
        %v3977 = vmul.f32 %v3771, %v3771
        %v3978 = vmul.f32 %v3776, %v3776
        %v3979 = vmul.f32 %v3781, %v3781
        %v3980 = vmul.f32 %v3786, %v3786
        %v3981 = vmul.f32 %v3791, %v3791
        %v3982 = vmul.f32 %v3796, %v3796
        %v3983 = vmul.f32 %v3801, %v3801
        %v3984 = vmul.f32 %v3806, %v3806
        %v3985 = vmul.f32 %v3811, %v3811
        %v3986 = vmul.f32 %v3816, %v3816
        %v3987 = vmul.f32 %v3821, %v3821
        %v3988 = vmul.f32 %v3826, %v3826
        %v3989 = vmul.f32 %v3831, %v3831
        %v3990 = vmul.f32 %v3836, %v3836
        %v3991 = vmul.f32 %v3841, %v3841
        %v3992 = vmul.f32 %v3846, %v3846
        %v3993 = vmul.f32 %v3851, %v3851
        %v3994 = vmul.f32 %v3856, %v3856
        %v3995 = vmul.f32 %v3861, %v3861
        %v3996 = vmul.f32 %v3866, %v3866
        %v3997 = vmul.f32 %v3871, %v3871
        %v3998 = vmul.f32 %v3876, %v3876
        %v3999 = vmul.f32 %v3881, %v3881
        %v4000 = vmul.f32 %v3886, %v3886
        %v4001 = vmul.f32 %v3891, %v3891
        %v4002 = vmul.f32 %v3896, %v3896
        %v4003 = vsel %vm3901, %v3971, 0.0
        %v4004 = vsel %vm3901, %v3972, 0.0
        %v4005 = vadd.f32 %v4003, %v4004
        %v4006 = vsel %vm3901, %v3973, 0.0
        %v4007 = vadd.f32 %v4005, %v4006
        %v4008 = vsel %vm3901, %v3974, 0.0
        %v4009 = vadd.f32 %v4007, %v4008
        %v4010 = vsel %vm3901, %v3975, 0.0
        %v4011 = vadd.f32 %v4009, %v4010
        %v4012 = vsel %vm3901, %v3976, 0.0
        %v4013 = vadd.f32 %v4011, %v4012
        %v4014 = vsel %vm3901, %v3977, 0.0
        %v4015 = vadd.f32 %v4013, %v4014
        %v4016 = vsel %vm3901, %v3978, 0.0
        %v4017 = vadd.f32 %v4015, %v4016
        %v4018 = vsel %vm3901, %v3979, 0.0
        %v4019 = vadd.f32 %v4017, %v4018
        %v4020 = vsel %vm3901, %v3980, 0.0
        %v4021 = vadd.f32 %v4019, %v4020
        %v4022 = vsel %vm3901, %v3981, 0.0
        %v4023 = vadd.f32 %v4021, %v4022
        %v4024 = vsel %vm3901, %v3982, 0.0
        %v4025 = vadd.f32 %v4023, %v4024
        %v4026 = vsel %vm3901, %v3983, 0.0
        %v4027 = vadd.f32 %v4025, %v4026
        %v4028 = vsel %vm3901, %v3984, 0.0
        %v4029 = vadd.f32 %v4027, %v4028
        %v4030 = vsel %vm3901, %v3985, 0.0
        %v4031 = vadd.f32 %v4029, %v4030
        %v4032 = vsel %vm3901, %v3986, 0.0
        %v4033 = vadd.f32 %v4031, %v4032
        %v4034 = vsel %vm3901, %v3987, 0.0
        %v4035 = vadd.f32 %v4033, %v4034
        %v4036 = vsel %vm3901, %v3988, 0.0
        %v4037 = vadd.f32 %v4035, %v4036
        %v4038 = vsel %vm3901, %v3989, 0.0
        %v4039 = vadd.f32 %v4037, %v4038
        %v4040 = vsel %vm3901, %v3990, 0.0
        %v4041 = vadd.f32 %v4039, %v4040
        %v4042 = vsel %vm3901, %v3991, 0.0
        %v4043 = vadd.f32 %v4041, %v4042
        %v4044 = vsel %vm3901, %v3992, 0.0
        %v4045 = vadd.f32 %v4043, %v4044
        %v4046 = vsel %vm3901, %v3993, 0.0
        %v4047 = vadd.f32 %v4045, %v4046
        %v4048 = vsel %vm3901, %v3994, 0.0
        %v4049 = vadd.f32 %v4047, %v4048
        %v4050 = vsel %vm3901, %v3995, 0.0
        %v4051 = vadd.f32 %v4049, %v4050
        %v4052 = vsel %vm3901, %v3996, 0.0
        %v4053 = vadd.f32 %v4051, %v4052
        %v4054 = vsel %vm3901, %v3997, 0.0
        %v4055 = vadd.f32 %v4053, %v4054
        %v4056 = vsel %vm3901, %v3998, 0.0
        %v4057 = vadd.f32 %v4055, %v4056
        %v4058 = vsel %vm3901, %v3999, 0.0
        %v4059 = vadd.f32 %v4057, %v4058
        %v4060 = vsel %vm3901, %v4000, 0.0
        %v4061 = vadd.f32 %v4059, %v4060
        %v4062 = vsel %vm3901, %v4001, 0.0
        %v4063 = vadd.f32 %v4061, %v4062
        %v4064 = vsel %vm3901, %v4002, 0.0
        %v4065 = vadd.f32 %v4063, %v4064
        %v4066 = vrot.slane %v4065, 4
        %v4067 = vadd.f32 %v4065, %v4066
        %v4068 = vrot.slane %v4067, 2
        %v4069 = vadd.f32 %v4067, %v4068
        %v4070 = vrot.slane %v4069, 1
        %v4071 = vadd.f32 %v4069, %v4070
        %v4072 = vmul.f32 %v3970, 0.00390625
        %v4073 = vmul.f32 %v4071, 0.00390625
        %v4074 = vmul.f32 %v4072, %v4072
        %v4075 = vsub.f32 %v4073, %v4074
        %v4076 = vsub.f32 %v3741, %v4072
        %v4077 = vsub.f32 %v3746, %v4072
        %v4078 = vsub.f32 %v3751, %v4072
        %v4079 = vsub.f32 %v3756, %v4072
        %v4080 = vsub.f32 %v3761, %v4072
        %v4081 = vsub.f32 %v3766, %v4072
        %v4082 = vsub.f32 %v3771, %v4072
        %v4083 = vsub.f32 %v3776, %v4072
        %v4084 = vsub.f32 %v3781, %v4072
        %v4085 = vsub.f32 %v3786, %v4072
        %v4086 = vsub.f32 %v3791, %v4072
        %v4087 = vsub.f32 %v3796, %v4072
        %v4088 = vsub.f32 %v3801, %v4072
        %v4089 = vsub.f32 %v3806, %v4072
        %v4090 = vsub.f32 %v3811, %v4072
        %v4091 = vsub.f32 %v3816, %v4072
        %v4092 = vsub.f32 %v3821, %v4072
        %v4093 = vsub.f32 %v3826, %v4072
        %v4094 = vsub.f32 %v3831, %v4072
        %v4095 = vsub.f32 %v3836, %v4072
        %v4096 = vsub.f32 %v3841, %v4072
        %v4097 = vsub.f32 %v3846, %v4072
        %v4098 = vsub.f32 %v3851, %v4072
        %v4099 = vsub.f32 %v3856, %v4072
        %v4100 = vsub.f32 %v3861, %v4072
        %v4101 = vsub.f32 %v3866, %v4072
        %v4102 = vsub.f32 %v3871, %v4072
        %v4103 = vsub.f32 %v3876, %v4072
        %v4104 = vsub.f32 %v3881, %v4072
        %v4105 = vsub.f32 %v3886, %v4072
        %v4106 = vsub.f32 %v3891, %v4072
        %v4107 = vsub.f32 %v3896, %v4072
        %v4108 = vadd.f32 %v4075, 1e-05
        %v4109 = vrsqrt.pop %v4108
        %v4110 = vmul.f32 %v4076, %v4109
        %v4111 = vmul.f32 %v4077, %v4109
        %v4112 = vmul.f32 %v4078, %v4109
        %v4113 = vmul.f32 %v4079, %v4109
        %v4114 = vmul.f32 %v4080, %v4109
        %v4115 = vmul.f32 %v4081, %v4109
        %v4116 = vmul.f32 %v4082, %v4109
        %v4117 = vmul.f32 %v4083, %v4109
        %v4118 = vmul.f32 %v4084, %v4109
        %v4119 = vmul.f32 %v4085, %v4109
        %v4120 = vmul.f32 %v4086, %v4109
        %v4121 = vmul.f32 %v4087, %v4109
        %v4122 = vmul.f32 %v4088, %v4109
        %v4123 = vmul.f32 %v4089, %v4109
        %v4124 = vmul.f32 %v4090, %v4109
        %v4125 = vmul.f32 %v4091, %v4109
        %v4126 = vmul.f32 %v4092, %v4109
        %v4127 = vmul.f32 %v4093, %v4109
        %v4128 = vmul.f32 %v4094, %v4109
        %v4129 = vmul.f32 %v4095, %v4109
        %v4130 = vmul.f32 %v4096, %v4109
        %v4131 = vmul.f32 %v4097, %v4109
        %v4132 = vmul.f32 %v4098, %v4109
        %v4133 = vmul.f32 %v4099, %v4109
        %v4134 = vmul.f32 %v4100, %v4109
        %v4135 = vmul.f32 %v4101, %v4109
        %v4136 = vmul.f32 %v4102, %v4109
        %v4137 = vmul.f32 %v4103, %v4109
        %v4138 = vmul.f32 %v4104, %v4109
        %v4139 = vmul.f32 %v4105, %v4109
        %v4140 = vmul.f32 %v4106, %v4109
        %v4141 = vmul.f32 %v4107, %v4109
        %v4143 = vlaneseq
        %v4144 = vshrl.u32 %v4143, 7
        %v4145 = vsub.s32 0, %v4144
        %v4146 = vrot.slane %v3899, %v4145
        %v4148 = vmul.f32 %v4110, %v4146
        %v4149 = vmul.f32 %v4111, %v4146
        %v4150 = vmul.f32 %v4112, %v4146
        %v4151 = vmul.f32 %v4113, %v4146
        %v4152 = vmul.f32 %v4114, %v4146
        %v4153 = vmul.f32 %v4115, %v4146
        %v4154 = vmul.f32 %v4116, %v4146
        %v4155 = vmul.f32 %v4117, %v4146
        %v4156 = vmul.f32 %v4118, %v4146
        %v4157 = vmul.f32 %v4119, %v4146
        %v4158 = vmul.f32 %v4120, %v4146
        %v4159 = vmul.f32 %v4121, %v4146
        %v4160 = vmul.f32 %v4122, %v4146
        %v4161 = vmul.f32 %v4123, %v4146
        %v4162 = vmul.f32 %v4124, %v4146
        %v4163 = vmul.f32 %v4125, %v4146
        %v4164 = vmul.f32 %v4126, %v4146
        %v4165 = vmul.f32 %v4127, %v4146
        %v4166 = vmul.f32 %v4128, %v4146
        %v4167 = vmul.f32 %v4129, %v4146
        %v4168 = vmul.f32 %v4130, %v4146
        %v4169 = vmul.f32 %v4131, %v4146
        %v4170 = vmul.f32 %v4132, %v4146
        %v4171 = vmul.f32 %v4133, %v4146
        %v4172 = vmul.f32 %v4134, %v4146
        %v4173 = vmul.f32 %v4135, %v4146
        %v4174 = vmul.f32 %v4136, %v4146
        %v4175 = vmul.f32 %v4137, %v4146
        %v4176 = vmul.f32 %v4138, %v4146
        %v4177 = vmul.f32 %v4139, %v4146
        %v4178 = vmul.f32 %v4140, %v4146
        %v4179 = vmul.f32 %v4141, %v4146
        %v4181 = vlaneseq
        %v4182 = vshrl.u32 %v4181, 7
        %v4183 = vsub.s32 0, %v4182
        %v4184 = vrot.slane %v3900, %v4183
        %v4186 = vadd.f32 %v4148, %v4184
        %v4187 = vadd.f32 %v4149, %v4184
        %v4188 = vadd.f32 %v4150, %v4184
        %v4189 = vadd.f32 %v4151, %v4184
        %v4190 = vadd.f32 %v4152, %v4184
        %v4191 = vadd.f32 %v4153, %v4184
        %v4192 = vadd.f32 %v4154, %v4184
        %v4193 = vadd.f32 %v4155, %v4184
        %v4194 = vadd.f32 %v4156, %v4184
        %v4195 = vadd.f32 %v4157, %v4184
        %v4196 = vadd.f32 %v4158, %v4184
        %v4197 = vadd.f32 %v4159, %v4184
        %v4198 = vadd.f32 %v4160, %v4184
        %v4199 = vadd.f32 %v4161, %v4184
        %v4200 = vadd.f32 %v4162, %v4184
        %v4201 = vadd.f32 %v4163, %v4184
        %v4202 = vadd.f32 %v4164, %v4184
        %v4203 = vadd.f32 %v4165, %v4184
        %v4204 = vadd.f32 %v4166, %v4184
        %v4205 = vadd.f32 %v4167, %v4184
        %v4206 = vadd.f32 %v4168, %v4184
        %v4207 = vadd.f32 %v4169, %v4184
        %v4208 = vadd.f32 %v4170, %v4184
        %v4209 = vadd.f32 %v4171, %v4184
        %v4210 = vadd.f32 %v4172, %v4184
        %v4211 = vadd.f32 %v4173, %v4184
        %v4212 = vadd.f32 %v4174, %v4184
        %v4213 = vadd.f32 %v4175, %v4184
        %v4214 = vadd.f32 %v4176, %v4184
        %v4215 = vadd.f32 %v4177, %v4184
        %v4216 = vadd.f32 %v4178, %v4184
        %v4217 = vadd.f32 %v4179, %v4184
        %v4218 = vld [vmem:[%s10] sm:$0xf]
        %v4220 = vsel %vm569, %v4218, 0
        %4222 = vmatprep.subr.mxu0 0.0
        %4223 = vmatpush1.msra.mxu0 0.0
        %4224 = vmatprep.subr.mxu0 0.0
        %4225 = vmatpush1.msra.mxu0 0.0
        %4226 = vmatprep.subr.mxu0 0.0
        %4227 = vmatpush1.msra.mxu0 0.0
        %4228 = vmatprep.subr.mxu0 0.0
        %4229 = vmatpush1.msra.mxu0 0.0
        %4230 = vmatprep.subr.mxu0 0.0
        %4231 = vmatpush1.msra.mxu0 0.0
        %4232 = vmatprep.subr.mxu0 0.0
        %4233 = vmatpush1.msra.mxu0 0.0
        %4234 = vmatprep.subr.mxu0 0.0
        %4235 = vmatpush1.msra.mxu0 0.0
        %4236 = vmatprep.subr.mxu0 0.0
        %4237 = vmatpush1.msra.mxu0 0.0
        %4238 = vmatprep.subr.mxu0 0.0
        %4239 = vmatpush1.msra.mxu0 0.0
        %4240 = vmatprep.subr.mxu0 0.0
        %4241 = vmatpush1.msra.mxu0 0.0
        %4242 = vmatprep.subr.mxu0 0.0
        %4243 = vmatpush1.msra.mxu0 0.0
        %4244 = vmatprep.subr.mxu0 0.0
        %4245 = vmatpush1.msra.mxu0 0.0
        %4246 = vmatprep.subr.mxu0 0.0
        %4247 = vmatpush1.msra.mxu0 0.0
        %4248 = vmatprep.subr.mxu0 0.0
        %4249 = vmatpush1.msra.mxu0 0.0
        %4250 = vmatprep.subr.mxu0 0.0
        %4251 = vmatpush1.msra.mxu0 0.0
        %4252 = vmatprep.subr.mxu0 0.0
        %4253 = vmatpush1.msra.mxu0 %v4220
        %4254 = vmatprep.subr.mxu0 0.0
        %4255 = vmatpush2.msra.mxu0 0.0
        %4256 = vmatprep.subr.mxu0 0.0
        %4257 = vmatpush2.msra.mxu0 0.0
        %4258 = vmatprep.subr.mxu0 0.0
        %4259 = vmatpush2.msra.mxu0 0.0
        %4260 = vmatprep.subr.mxu0 0.0
        %4261 = vmatpush2.msra.mxu0 0.0
        %4262 = vmatprep.subr.mxu0 0.0
        %4263 = vmatpush2.msra.mxu0 0.0
        %4264 = vmatprep.subr.mxu0 0.0
        %4265 = vmatpush2.msra.mxu0 0.0
        %4266 = vmatprep.subr.mxu0 0.0
        %4267 = vmatpush2.msra.mxu0 0.0
        %4268 = vmatprep.subr.mxu0 0.0
        %4269 = vmatpush2.msra.mxu0 0.0
        %4270 = vmatprep.subr.mxu0 0.0
        %4271 = vmatpush2.msra.mxu0 0.0
        %4272 = vmatprep.subr.mxu0 0.0
        %4273 = vmatpush2.msra.mxu0 0.0
        %4274 = vmatprep.subr.mxu0 0.0
        %4275 = vmatpush2.msra.mxu0 0.0
        %4276 = vmatprep.subr.mxu0 0.0
        %4277 = vmatpush2.msra.mxu0 0.0
        %4278 = vmatprep.subr.mxu0 0.0
        %4279 = vmatpush2.msra.mxu0 0.0
        %4280 = vmatprep.subr.mxu0 0.0
        %4281 = vmatpush2.msra.mxu0 0.0
        %4282 = vmatprep.subr.mxu0 0.0
        %4283 = vmatpush2.msra.mxu0 0.0
        %4284 = vmatprep.subr.mxu0 0.0
        %4285 = vmatpush2.msra.mxu0 0.0
        %4286 = vmatprep.mubr.f32.mxu0 0.0
        %4287 = vmatmul.mubr.f32.gmra.mxu0 %v474
        %v4288 = vpop.f32.mrf.mxu0
        %v4289 = vadd.f32 0.0, %v4288
        %v4290 = vpop.f32.mrf.mxu0
        %4291 = vmatprep.mubr.f32.mxu0 0.0
        %4292 = vmatmul.mubr.f32.gmra.mxu0 %v477
        %v4293 = vpop.f32.mrf.mxu0
        %v4294 = vadd.f32 0.0, %v4293
        %v4295 = vpop.f32.mrf.mxu0
        %4296 = vmatprep.mubr.f32.mxu0 0.0
        %4297 = vmatmul.mubr.f32.gmra.mxu0 %v480
        %v4298 = vpop.f32.mrf.mxu0
        %v4299 = vadd.f32 0.0, %v4298
        %v4300 = vpop.f32.mrf.mxu0
        %4301 = vmatprep.mubr.f32.mxu0 0.0
        %4302 = vmatmul.mubr.f32.gmra.mxu0 %v483
        %v4303 = vpop.f32.mrf.mxu0
        %v4304 = vadd.f32 0.0, %v4303
        %v4305 = vpop.f32.mrf.mxu0
        %4306 = vmatprep.mubr.f32.mxu0 0.0
        %4307 = vmatmul.mubr.f32.gmra.mxu0 %v486
        %v4308 = vpop.f32.mrf.mxu0
        %v4309 = vadd.f32 0.0, %v4308
        %v4310 = vpop.f32.mrf.mxu0
        %4311 = vmatprep.mubr.f32.mxu0 0.0
        %4312 = vmatmul.mubr.f32.gmra.mxu0 %v489
        %v4313 = vpop.f32.mrf.mxu0
        %v4314 = vadd.f32 0.0, %v4313
        %v4315 = vpop.f32.mrf.mxu0
        %4316 = vmatprep.mubr.f32.mxu0 0.0
        %4317 = vmatmul.mubr.f32.gmra.mxu0 %v492
        %v4318 = vpop.f32.mrf.mxu0
        %v4319 = vadd.f32 0.0, %v4318
        %v4320 = vpop.f32.mrf.mxu0
        %4321 = vmatprep.mubr.f32.mxu0 0.0
        %4322 = vmatmul.mubr.f32.gmra.mxu0 %v495
        %v4323 = vpop.f32.mrf.mxu0
        %v4324 = vadd.f32 0.0, %v4323
        %v4325 = vpop.f32.mrf.mxu0
        %4326 = vmatprep.mubr.f32.mxu0 0.0
        %4327 = vmatmul.mubr.f32.gmra.mxu0 %v498
        %v4328 = vpop.f32.mrf.mxu0
        %v4329 = vadd.f32 0.0, %v4328
        %v4330 = vpop.f32.mrf.mxu0
        %4331 = vmatprep.mubr.f32.mxu0 0.0
        %4332 = vmatmul.mubr.f32.gmra.mxu0 %v501
        %v4333 = vpop.f32.mrf.mxu0
        %v4334 = vadd.f32 0.0, %v4333
        %v4335 = vpop.f32.mrf.mxu0
        %4336 = vmatprep.mubr.f32.mxu0 0.0
        %4337 = vmatmul.mubr.f32.gmra.mxu0 %v504
        %v4338 = vpop.f32.mrf.mxu0
        %v4339 = vadd.f32 0.0, %v4338
        %v4340 = vpop.f32.mrf.mxu0
        %4341 = vmatprep.mubr.f32.mxu0 0.0
        %4342 = vmatmul.mubr.f32.gmra.mxu0 %v507
        %v4343 = vpop.f32.mrf.mxu0
        %v4344 = vadd.f32 0.0, %v4343
        %v4345 = vpop.f32.mrf.mxu0
        %4346 = vmatprep.mubr.f32.mxu0 0.0
        %4347 = vmatmul.mubr.f32.gmra.mxu0 %v510
        %v4348 = vpop.f32.mrf.mxu0
        %v4349 = vadd.f32 0.0, %v4348
        %v4350 = vpop.f32.mrf.mxu0
        %4351 = vmatprep.mubr.f32.mxu0 0.0
        %4352 = vmatmul.mubr.f32.gmra.mxu0 %v513
        %v4353 = vpop.f32.mrf.mxu0
        %v4354 = vadd.f32 0.0, %v4353
        %v4355 = vpop.f32.mrf.mxu0
        %4356 = vmatprep.mubr.f32.mxu0 0.0
        %4357 = vmatmul.mubr.f32.gmra.mxu0 %v516
        %v4358 = vpop.f32.mrf.mxu0
        %v4359 = vadd.f32 0.0, %v4358
        %v4360 = vpop.f32.mrf.mxu0
        %4361 = vmatprep.mubr.f32.mxu0 0.0
        %4362 = vmatmul.mubr.f32.gmra.mxu0 %v519
        %v4363 = vpop.f32.mrf.mxu0
        %v4364 = vadd.f32 0.0, %v4363
        %v4365 = vpop.f32.mrf.mxu0
        %4366 = vmatprep.mubr.f32.mxu0 0.0
        %4367 = vmatmul.mubr.f32.gmra.mxu0 %v522
        %v4368 = vpop.f32.mrf.mxu0
        %v4369 = vadd.f32 0.0, %v4368
        %v4370 = vpop.f32.mrf.mxu0
        %4371 = vmatprep.mubr.f32.mxu0 0.0
        %4372 = vmatmul.mubr.f32.gmra.mxu0 %v525
        %v4373 = vpop.f32.mrf.mxu0
        %v4374 = vadd.f32 0.0, %v4373
        %v4375 = vpop.f32.mrf.mxu0
        %4376 = vmatprep.mubr.f32.mxu0 0.0
        %4377 = vmatmul.mubr.f32.gmra.mxu0 %v528
        %v4378 = vpop.f32.mrf.mxu0
        %v4379 = vadd.f32 0.0, %v4378
        %v4380 = vpop.f32.mrf.mxu0
        %4381 = vmatprep.mubr.f32.mxu0 0.0
        %4382 = vmatmul.mubr.f32.gmra.mxu0 %v531
        %v4383 = vpop.f32.mrf.mxu0
        %v4384 = vadd.f32 0.0, %v4383
        %v4385 = vpop.f32.mrf.mxu0
        %4386 = vmatprep.mubr.f32.mxu0 0.0
        %4387 = vmatmul.mubr.f32.gmra.mxu0 %v534
        %v4388 = vpop.f32.mrf.mxu0
        %v4389 = vadd.f32 0.0, %v4388
        %v4390 = vpop.f32.mrf.mxu0
        %4391 = vmatprep.mubr.f32.mxu0 0.0
        %4392 = vmatmul.mubr.f32.gmra.mxu0 %v537
        %v4393 = vpop.f32.mrf.mxu0
        %v4394 = vadd.f32 0.0, %v4393
        %v4395 = vpop.f32.mrf.mxu0
        %4396 = vmatprep.mubr.f32.mxu0 0.0
        %4397 = vmatmul.mubr.f32.gmra.mxu0 %v540
        %v4398 = vpop.f32.mrf.mxu0
        %v4399 = vadd.f32 0.0, %v4398
        %v4400 = vpop.f32.mrf.mxu0
        %4401 = vmatprep.mubr.f32.mxu0 0.0
        %4402 = vmatmul.mubr.f32.gmra.mxu0 %v543
        %v4403 = vpop.f32.mrf.mxu0
        %v4404 = vadd.f32 0.0, %v4403
        %v4405 = vpop.f32.mrf.mxu0
        %4406 = vmatprep.mubr.f32.mxu0 0.0
        %4407 = vmatmul.mubr.f32.gmra.mxu0 %v546
        %v4408 = vpop.f32.mrf.mxu0
        %v4409 = vadd.f32 0.0, %v4408
        %v4410 = vpop.f32.mrf.mxu0
        %4411 = vmatprep.mubr.f32.mxu0 0.0
        %4412 = vmatmul.mubr.f32.gmra.mxu0 %v549
        %v4413 = vpop.f32.mrf.mxu0
        %v4414 = vadd.f32 0.0, %v4413
        %v4415 = vpop.f32.mrf.mxu0
        %4416 = vmatprep.mubr.f32.mxu0 0.0
        %4417 = vmatmul.mubr.f32.gmra.mxu0 %v552
        %v4418 = vpop.f32.mrf.mxu0
        %v4419 = vadd.f32 0.0, %v4418
        %v4420 = vpop.f32.mrf.mxu0
        %4421 = vmatprep.mubr.f32.mxu0 0.0
        %4422 = vmatmul.mubr.f32.gmra.mxu0 %v555
        %v4423 = vpop.f32.mrf.mxu0
        %v4424 = vadd.f32 0.0, %v4423
        %v4425 = vpop.f32.mrf.mxu0
        %4426 = vmatprep.mubr.f32.mxu0 0.0
        %4427 = vmatmul.mubr.f32.gmra.mxu0 %v558
        %v4428 = vpop.f32.mrf.mxu0
        %v4429 = vadd.f32 0.0, %v4428
        %v4430 = vpop.f32.mrf.mxu0
        %4431 = vmatprep.mubr.f32.mxu0 0.0
        %4432 = vmatmul.mubr.f32.gmra.mxu0 %v561
        %v4433 = vpop.f32.mrf.mxu0
        %v4434 = vadd.f32 0.0, %v4433
        %v4435 = vpop.f32.mrf.mxu0
        %4436 = vmatprep.mubr.f32.mxu0 0.0
        %4437 = vmatmul.mubr.f32.gmra.mxu0 %v564
        %v4438 = vpop.f32.mrf.mxu0
        %v4439 = vadd.f32 0.0, %v4438
        %v4440 = vpop.f32.mrf.mxu0
        %4441 = vmatprep.mubr.f32.mxu0 0.0
        %4442 = vmatmul.mubr.f32.gmra.mxu0 %v567
        %v4443 = vpop.f32.mrf.mxu0
        %v4444 = vadd.f32 0.0, %v4443
        %v4445 = vpop.f32.mrf.mxu0
        %4446 = vdwg.mxu0
        %v4447 = vld [vmem:[%s11] sm:$0x1]
        %v4448 = vld [vmem:[%s12] sm:$0x1]
        %v4449 = vsel %vm3901, %v4289, 0.0
        %v4450 = vsel %vm3901, %v4294, 0.0
        %v4451 = vadd.f32 %v4449, %v4450
        %v4452 = vsel %vm3901, %v4299, 0.0
        %v4453 = vadd.f32 %v4451, %v4452
        %v4454 = vsel %vm3901, %v4304, 0.0
        %v4455 = vadd.f32 %v4453, %v4454
        %v4456 = vsel %vm3901, %v4309, 0.0
        %v4457 = vadd.f32 %v4455, %v4456
        %v4458 = vsel %vm3901, %v4314, 0.0
        %v4459 = vadd.f32 %v4457, %v4458
        %v4460 = vsel %vm3901, %v4319, 0.0
        %v4461 = vadd.f32 %v4459, %v4460
        %v4462 = vsel %vm3901, %v4324, 0.0
        %v4463 = vadd.f32 %v4461, %v4462
        %v4464 = vsel %vm3901, %v4329, 0.0
        %v4465 = vadd.f32 %v4463, %v4464
        %v4466 = vsel %vm3901, %v4334, 0.0
        %v4467 = vadd.f32 %v4465, %v4466
        %v4468 = vsel %vm3901, %v4339, 0.0
        %v4469 = vadd.f32 %v4467, %v4468
        %v4470 = vsel %vm3901, %v4344, 0.0
        %v4471 = vadd.f32 %v4469, %v4470
        %v4472 = vsel %vm3901, %v4349, 0.0
        %v4473 = vadd.f32 %v4471, %v4472
        %v4474 = vsel %vm3901, %v4354, 0.0
        %v4475 = vadd.f32 %v4473, %v4474
        %v4476 = vsel %vm3901, %v4359, 0.0
        %v4477 = vadd.f32 %v4475, %v4476
        %v4478 = vsel %vm3901, %v4364, 0.0
        %v4479 = vadd.f32 %v4477, %v4478
        %v4480 = vsel %vm3901, %v4369, 0.0
        %v4481 = vadd.f32 %v4479, %v4480
        %v4482 = vsel %vm3901, %v4374, 0.0
        %v4483 = vadd.f32 %v4481, %v4482
        %v4484 = vsel %vm3901, %v4379, 0.0
        %v4485 = vadd.f32 %v4483, %v4484
        %v4486 = vsel %vm3901, %v4384, 0.0
        %v4487 = vadd.f32 %v4485, %v4486
        %v4488 = vsel %vm3901, %v4389, 0.0
        %v4489 = vadd.f32 %v4487, %v4488
        %v4490 = vsel %vm3901, %v4394, 0.0
        %v4491 = vadd.f32 %v4489, %v4490
        %v4492 = vsel %vm3901, %v4399, 0.0
        %v4493 = vadd.f32 %v4491, %v4492
        %v4494 = vsel %vm3901, %v4404, 0.0
        %v4495 = vadd.f32 %v4493, %v4494
        %v4496 = vsel %vm3901, %v4409, 0.0
        %v4497 = vadd.f32 %v4495, %v4496
        %v4498 = vsel %vm3901, %v4414, 0.0
        %v4499 = vadd.f32 %v4497, %v4498
        %v4500 = vsel %vm3901, %v4419, 0.0
        %v4501 = vadd.f32 %v4499, %v4500
        %v4502 = vsel %vm3901, %v4424, 0.0
        %v4503 = vadd.f32 %v4501, %v4502
        %v4504 = vsel %vm3901, %v4429, 0.0
        %v4505 = vadd.f32 %v4503, %v4504
        %v4506 = vsel %vm3901, %v4434, 0.0
        %v4507 = vadd.f32 %v4505, %v4506
        %v4508 = vsel %vm3901, %v4439, 0.0
        %v4509 = vadd.f32 %v4507, %v4508
        %v4510 = vsel %vm3901, %v4444, 0.0
        %v4511 = vadd.f32 %v4509, %v4510
        %v4512 = vrot.slane %v4511, 4
        %v4513 = vadd.f32 %v4511, %v4512
        %v4514 = vrot.slane %v4513, 2
        %v4515 = vadd.f32 %v4513, %v4514
        %v4516 = vrot.slane %v4515, 1
        %v4517 = vadd.f32 %v4515, %v4516
        %v4518 = vmul.f32 %v4289, %v4289
        %v4519 = vmul.f32 %v4294, %v4294
        %v4520 = vmul.f32 %v4299, %v4299
        %v4521 = vmul.f32 %v4304, %v4304
        %v4522 = vmul.f32 %v4309, %v4309
        %v4523 = vmul.f32 %v4314, %v4314
        %v4524 = vmul.f32 %v4319, %v4319
        %v4525 = vmul.f32 %v4324, %v4324
        %v4526 = vmul.f32 %v4329, %v4329
        %v4527 = vmul.f32 %v4334, %v4334
        %v4528 = vmul.f32 %v4339, %v4339
        %v4529 = vmul.f32 %v4344, %v4344
        %v4530 = vmul.f32 %v4349, %v4349
        %v4531 = vmul.f32 %v4354, %v4354
        %v4532 = vmul.f32 %v4359, %v4359
        %v4533 = vmul.f32 %v4364, %v4364
        %v4534 = vmul.f32 %v4369, %v4369
        %v4535 = vmul.f32 %v4374, %v4374
        %v4536 = vmul.f32 %v4379, %v4379
        %v4537 = vmul.f32 %v4384, %v4384
        %v4538 = vmul.f32 %v4389, %v4389
        %v4539 = vmul.f32 %v4394, %v4394
        %v4540 = vmul.f32 %v4399, %v4399
        %v4541 = vmul.f32 %v4404, %v4404
        %v4542 = vmul.f32 %v4409, %v4409
        %v4543 = vmul.f32 %v4414, %v4414
        %v4544 = vmul.f32 %v4419, %v4419
        %v4545 = vmul.f32 %v4424, %v4424
        %v4546 = vmul.f32 %v4429, %v4429
        %v4547 = vmul.f32 %v4434, %v4434
        %v4548 = vmul.f32 %v4439, %v4439
        %v4549 = vmul.f32 %v4444, %v4444
        %v4550 = vsel %vm3901, %v4518, 0.0
        %v4551 = vsel %vm3901, %v4519, 0.0
        %v4552 = vadd.f32 %v4550, %v4551
        %v4553 = vsel %vm3901, %v4520, 0.0
        %v4554 = vadd.f32 %v4552, %v4553
        %v4555 = vsel %vm3901, %v4521, 0.0
        %v4556 = vadd.f32 %v4554, %v4555
        %v4557 = vsel %vm3901, %v4522, 0.0
        %v4558 = vadd.f32 %v4556, %v4557
        %v4559 = vsel %vm3901, %v4523, 0.0
        %v4560 = vadd.f32 %v4558, %v4559
        %v4561 = vsel %vm3901, %v4524, 0.0
        %v4562 = vadd.f32 %v4560, %v4561
        %v4563 = vsel %vm3901, %v4525, 0.0
        %v4564 = vadd.f32 %v4562, %v4563
        %v4565 = vsel %vm3901, %v4526, 0.0
        %v4566 = vadd.f32 %v4564, %v4565
        %v4567 = vsel %vm3901, %v4527, 0.0
        %v4568 = vadd.f32 %v4566, %v4567
        %v4569 = vsel %vm3901, %v4528, 0.0
        %v4570 = vadd.f32 %v4568, %v4569
        %v4571 = vsel %vm3901, %v4529, 0.0
        %v4572 = vadd.f32 %v4570, %v4571
        %v4573 = vsel %vm3901, %v4530, 0.0
        %v4574 = vadd.f32 %v4572, %v4573
        %v4575 = vsel %vm3901, %v4531, 0.0
        %v4576 = vadd.f32 %v4574, %v4575
        %v4577 = vsel %vm3901, %v4532, 0.0
        %v4578 = vadd.f32 %v4576, %v4577
        %v4579 = vsel %vm3901, %v4533, 0.0
        %v4580 = vadd.f32 %v4578, %v4579
        %v4581 = vsel %vm3901, %v4534, 0.0
        %v4582 = vadd.f32 %v4580, %v4581
        %v4583 = vsel %vm3901, %v4535, 0.0
        %v4584 = vadd.f32 %v4582, %v4583
        %v4585 = vsel %vm3901, %v4536, 0.0
        %v4586 = vadd.f32 %v4584, %v4585
        %v4587 = vsel %vm3901, %v4537, 0.0
        %v4588 = vadd.f32 %v4586, %v4587
        %v4589 = vsel %vm3901, %v4538, 0.0
        %v4590 = vadd.f32 %v4588, %v4589
        %v4591 = vsel %vm3901, %v4539, 0.0
        %v4592 = vadd.f32 %v4590, %v4591
        %v4593 = vsel %vm3901, %v4540, 0.0
        %v4594 = vadd.f32 %v4592, %v4593
        %v4595 = vsel %vm3901, %v4541, 0.0
        %v4596 = vadd.f32 %v4594, %v4595
        %v4597 = vsel %vm3901, %v4542, 0.0
        %v4598 = vadd.f32 %v4596, %v4597
        %v4599 = vsel %vm3901, %v4543, 0.0
        %v4600 = vadd.f32 %v4598, %v4599
        %v4601 = vsel %vm3901, %v4544, 0.0
        %v4602 = vadd.f32 %v4600, %v4601
        %v4603 = vsel %vm3901, %v4545, 0.0
        %v4604 = vadd.f32 %v4602, %v4603
        %v4605 = vsel %vm3901, %v4546, 0.0
        %v4606 = vadd.f32 %v4604, %v4605
        %v4607 = vsel %vm3901, %v4547, 0.0
        %v4608 = vadd.f32 %v4606, %v4607
        %v4609 = vsel %vm3901, %v4548, 0.0
        %v4610 = vadd.f32 %v4608, %v4609
        %v4611 = vsel %vm3901, %v4549, 0.0
        %v4612 = vadd.f32 %v4610, %v4611
        %v4613 = vrot.slane %v4612, 4
        %v4614 = vadd.f32 %v4612, %v4613
        %v4615 = vrot.slane %v4614, 2
        %v4616 = vadd.f32 %v4614, %v4615
        %v4617 = vrot.slane %v4616, 1
        %v4618 = vadd.f32 %v4616, %v4617
        %v4619 = vmul.f32 %v4517, 0.00390625
        %v4620 = vmul.f32 %v4618, 0.00390625
        %v4621 = vmul.f32 %v4619, %v4619
        %v4622 = vsub.f32 %v4620, %v4621
        %v4623 = vsub.f32 %v4289, %v4619
        %v4624 = vsub.f32 %v4294, %v4619
        %v4625 = vsub.f32 %v4299, %v4619
        %v4626 = vsub.f32 %v4304, %v4619
        %v4627 = vsub.f32 %v4309, %v4619
        %v4628 = vsub.f32 %v4314, %v4619
        %v4629 = vsub.f32 %v4319, %v4619
        %v4630 = vsub.f32 %v4324, %v4619
        %v4631 = vsub.f32 %v4329, %v4619
        %v4632 = vsub.f32 %v4334, %v4619
        %v4633 = vsub.f32 %v4339, %v4619
        %v4634 = vsub.f32 %v4344, %v4619
        %v4635 = vsub.f32 %v4349, %v4619
        %v4636 = vsub.f32 %v4354, %v4619
        %v4637 = vsub.f32 %v4359, %v4619
        %v4638 = vsub.f32 %v4364, %v4619
        %v4639 = vsub.f32 %v4369, %v4619
        %v4640 = vsub.f32 %v4374, %v4619
        %v4641 = vsub.f32 %v4379, %v4619
        %v4642 = vsub.f32 %v4384, %v4619
        %v4643 = vsub.f32 %v4389, %v4619
        %v4644 = vsub.f32 %v4394, %v4619
        %v4645 = vsub.f32 %v4399, %v4619
        %v4646 = vsub.f32 %v4404, %v4619
        %v4647 = vsub.f32 %v4409, %v4619
        %v4648 = vsub.f32 %v4414, %v4619
        %v4649 = vsub.f32 %v4419, %v4619
        %v4650 = vsub.f32 %v4424, %v4619
        %v4651 = vsub.f32 %v4429, %v4619
        %v4652 = vsub.f32 %v4434, %v4619
        %v4653 = vsub.f32 %v4439, %v4619
        %v4654 = vsub.f32 %v4444, %v4619
        %v4655 = vadd.f32 %v4622, 1e-05
        %v4656 = vrsqrt.pop %v4655
        %v4657 = vmul.f32 %v4623, %v4656
        %v4658 = vmul.f32 %v4624, %v4656
        %v4659 = vmul.f32 %v4625, %v4656
        %v4660 = vmul.f32 %v4626, %v4656
        %v4661 = vmul.f32 %v4627, %v4656
        %v4662 = vmul.f32 %v4628, %v4656
        %v4663 = vmul.f32 %v4629, %v4656
        %v4664 = vmul.f32 %v4630, %v4656
        %v4665 = vmul.f32 %v4631, %v4656
        %v4666 = vmul.f32 %v4632, %v4656
        %v4667 = vmul.f32 %v4633, %v4656
        %v4668 = vmul.f32 %v4634, %v4656
        %v4669 = vmul.f32 %v4635, %v4656
        %v4670 = vmul.f32 %v4636, %v4656
        %v4671 = vmul.f32 %v4637, %v4656
        %v4672 = vmul.f32 %v4638, %v4656
        %v4673 = vmul.f32 %v4639, %v4656
        %v4674 = vmul.f32 %v4640, %v4656
        %v4675 = vmul.f32 %v4641, %v4656
        %v4676 = vmul.f32 %v4642, %v4656
        %v4677 = vmul.f32 %v4643, %v4656
        %v4678 = vmul.f32 %v4644, %v4656
        %v4679 = vmul.f32 %v4645, %v4656
        %v4680 = vmul.f32 %v4646, %v4656
        %v4681 = vmul.f32 %v4647, %v4656
        %v4682 = vmul.f32 %v4648, %v4656
        %v4683 = vmul.f32 %v4649, %v4656
        %v4684 = vmul.f32 %v4650, %v4656
        %v4685 = vmul.f32 %v4651, %v4656
        %v4686 = vmul.f32 %v4652, %v4656
        %v4687 = vmul.f32 %v4653, %v4656
        %v4688 = vmul.f32 %v4654, %v4656
        %v4690 = vlaneseq
        %v4691 = vshrl.u32 %v4690, 7
        %v4692 = vsub.s32 0, %v4691
        %v4693 = vrot.slane %v4447, %v4692
        %v4695 = vmul.f32 %v4657, %v4693
        %v4696 = vmul.f32 %v4658, %v4693
        %v4697 = vmul.f32 %v4659, %v4693
        %v4698 = vmul.f32 %v4660, %v4693
        %v4699 = vmul.f32 %v4661, %v4693
        %v4700 = vmul.f32 %v4662, %v4693
        %v4701 = vmul.f32 %v4663, %v4693
        %v4702 = vmul.f32 %v4664, %v4693
        %v4703 = vmul.f32 %v4665, %v4693
        %v4704 = vmul.f32 %v4666, %v4693
        %v4705 = vmul.f32 %v4667, %v4693
        %v4706 = vmul.f32 %v4668, %v4693
        %v4707 = vmul.f32 %v4669, %v4693
        %v4708 = vmul.f32 %v4670, %v4693
        %v4709 = vmul.f32 %v4671, %v4693
        %v4710 = vmul.f32 %v4672, %v4693
        %v4711 = vmul.f32 %v4673, %v4693
        %v4712 = vmul.f32 %v4674, %v4693
        %v4713 = vmul.f32 %v4675, %v4693
        %v4714 = vmul.f32 %v4676, %v4693
        %v4715 = vmul.f32 %v4677, %v4693
        %v4716 = vmul.f32 %v4678, %v4693
        %v4717 = vmul.f32 %v4679, %v4693
        %v4718 = vmul.f32 %v4680, %v4693
        %v4719 = vmul.f32 %v4681, %v4693
        %v4720 = vmul.f32 %v4682, %v4693
        %v4721 = vmul.f32 %v4683, %v4693
        %v4722 = vmul.f32 %v4684, %v4693
        %v4723 = vmul.f32 %v4685, %v4693
        %v4724 = vmul.f32 %v4686, %v4693
        %v4725 = vmul.f32 %v4687, %v4693
        %v4726 = vmul.f32 %v4688, %v4693
        %v4728 = vlaneseq
        %v4729 = vshrl.u32 %v4728, 7
        %v4730 = vsub.s32 0, %v4729
        %v4731 = vrot.slane %v4448, %v4730
        %v4733 = vadd.f32 %v4695, %v4731
        %v4734 = vadd.f32 %v4696, %v4731
        %v4735 = vadd.f32 %v4697, %v4731
        %v4736 = vadd.f32 %v4698, %v4731
        %v4737 = vadd.f32 %v4699, %v4731
        %v4738 = vadd.f32 %v4700, %v4731
        %v4739 = vadd.f32 %v4701, %v4731
        %v4740 = vadd.f32 %v4702, %v4731
        %v4741 = vadd.f32 %v4703, %v4731
        %v4742 = vadd.f32 %v4704, %v4731
        %v4743 = vadd.f32 %v4705, %v4731
        %v4744 = vadd.f32 %v4706, %v4731
        %v4745 = vadd.f32 %v4707, %v4731
        %v4746 = vadd.f32 %v4708, %v4731
        %v4747 = vadd.f32 %v4709, %v4731
        %v4748 = vadd.f32 %v4710, %v4731
        %v4749 = vadd.f32 %v4711, %v4731
        %v4750 = vadd.f32 %v4712, %v4731
        %v4751 = vadd.f32 %v4713, %v4731
        %v4752 = vadd.f32 %v4714, %v4731
        %v4753 = vadd.f32 %v4715, %v4731
        %v4754 = vadd.f32 %v4716, %v4731
        %v4755 = vadd.f32 %v4717, %v4731
        %v4756 = vadd.f32 %v4718, %v4731
        %v4757 = vadd.f32 %v4719, %v4731
        %v4758 = vadd.f32 %v4720, %v4731
        %v4759 = vadd.f32 %v4721, %v4731
        %v4760 = vadd.f32 %v4722, %v4731
        %v4761 = vadd.f32 %v4723, %v4731
        %v4762 = vadd.f32 %v4724, %v4731
        %v4763 = vadd.f32 %v4725, %v4731
        %v4764 = vadd.f32 %v4726, %v4731
        %v4765 = vadd.f32 %v4186, %v4733
        %v4766 = vadd.f32 %v4187, %v4734
        %v4767 = vadd.f32 %v4188, %v4735
        %v4768 = vadd.f32 %v4189, %v4736
        %v4769 = vadd.f32 %v4190, %v4737
        %v4770 = vadd.f32 %v4191, %v4738
        %v4771 = vadd.f32 %v4192, %v4739
        %v4772 = vadd.f32 %v4193, %v4740
        %v4773 = vadd.f32 %v4194, %v4741
        %v4774 = vadd.f32 %v4195, %v4742
        %v4775 = vadd.f32 %v4196, %v4743
        %v4776 = vadd.f32 %v4197, %v4744
        %v4777 = vadd.f32 %v4198, %v4745
        %v4778 = vadd.f32 %v4199, %v4746
        %v4779 = vadd.f32 %v4200, %v4747
        %v4780 = vadd.f32 %v4201, %v4748
        %v4781 = vadd.f32 %v4202, %v4749
        %v4782 = vadd.f32 %v4203, %v4750
        %v4783 = vadd.f32 %v4204, %v4751
        %v4784 = vadd.f32 %v4205, %v4752
        %v4785 = vadd.f32 %v4206, %v4753
        %v4786 = vadd.f32 %v4207, %v4754
        %v4787 = vadd.f32 %v4208, %v4755
        %v4788 = vadd.f32 %v4209, %v4756
        %v4789 = vadd.f32 %v4210, %v4757
        %v4790 = vadd.f32 %v4211, %v4758
        %v4791 = vadd.f32 %v4212, %v4759
        %v4792 = vadd.f32 %v4213, %v4760
        %v4793 = vadd.f32 %v4214, %v4761
        %v4794 = vadd.f32 %v4215, %v4762
        %v4795 = vadd.f32 %v4216, %v4763
        %v4796 = vadd.f32 %v4217, %v4764
        %v4797 = vmax.f32 %v4765, 0.0
        %v4798 = vmax.f32 %v4766, 0.0
        %v4799 = vmax.f32 %v4767, 0.0
        %v4800 = vmax.f32 %v4768, 0.0
        %v4801 = vmax.f32 %v4769, 0.0
        %v4802 = vmax.f32 %v4770, 0.0
        %v4803 = vmax.f32 %v4771, 0.0
        %v4804 = vmax.f32 %v4772, 0.0
        %v4805 = vmax.f32 %v4773, 0.0
        %v4806 = vmax.f32 %v4774, 0.0
        %v4807 = vmax.f32 %v4775, 0.0
        %v4808 = vmax.f32 %v4776, 0.0
        %v4809 = vmax.f32 %v4777, 0.0
        %v4810 = vmax.f32 %v4778, 0.0
        %v4811 = vmax.f32 %v4779, 0.0
        %v4812 = vmax.f32 %v4780, 0.0
        %v4813 = vmax.f32 %v4781, 0.0
        %v4814 = vmax.f32 %v4782, 0.0
        %v4815 = vmax.f32 %v4783, 0.0
        %v4816 = vmax.f32 %v4784, 0.0
        %v4817 = vmax.f32 %v4785, 0.0
        %v4818 = vmax.f32 %v4786, 0.0
        %v4819 = vmax.f32 %v4787, 0.0
        %v4820 = vmax.f32 %v4788, 0.0
        %v4821 = vmax.f32 %v4789, 0.0
        %v4822 = vmax.f32 %v4790, 0.0
        %v4823 = vmax.f32 %v4791, 0.0
        %v4824 = vmax.f32 %v4792, 0.0
        %v4825 = vmax.f32 %v4793, 0.0
        %v4826 = vmax.f32 %v4794, 0.0
        %v4827 = vmax.f32 %v4795, 0.0
        %v4828 = vmax.f32 %v4796, 0.0
        %4829 = vst.msk [vmem:[%s433] sm:$0xff] %vm3901, %v4797
        %4830 = vst.msk [vmem:[%s433 + $0x8] sm:$0xff] %vm3901, %v4798
        %4831 = vst.msk [vmem:[%s433 + $0x10] sm:$0xff] %vm3901, %v4799
        %4832 = vst.msk [vmem:[%s433 + $0x18] sm:$0xff] %vm3901, %v4800
        %4833 = vst.msk [vmem:[%s433 + $0x20] sm:$0xff] %vm3901, %v4801
        %4834 = vst.msk [vmem:[%s433 + $0x28] sm:$0xff] %vm3901, %v4802
        %4835 = vst.msk [vmem:[%s433 + $0x30] sm:$0xff] %vm3901, %v4803
        %4836 = vst.msk [vmem:[%s433 + $0x38] sm:$0xff] %vm3901, %v4804
        %4837 = vst.msk [vmem:[%s433 + $0x40] sm:$0xff] %vm3901, %v4805
        %4838 = vst.msk [vmem:[%s433 + $0x48] sm:$0xff] %vm3901, %v4806
        %4839 = vst.msk [vmem:[%s433 + $0x50] sm:$0xff] %vm3901, %v4807
        %4840 = vst.msk [vmem:[%s433 + $0x58] sm:$0xff] %vm3901, %v4808
        %4841 = vst.msk [vmem:[%s433 + $0x60] sm:$0xff] %vm3901, %v4809
        %4842 = vst.msk [vmem:[%s433 + $0x68] sm:$0xff] %vm3901, %v4810
        %4843 = vst.msk [vmem:[%s433 + $0x70] sm:$0xff] %vm3901, %v4811
        %4844 = vst.msk [vmem:[%s433 + $0x78] sm:$0xff] %vm3901, %v4812
        %4845 = vst.msk [vmem:[%s433 + $0x80] sm:$0xff] %vm3901, %v4813
        %4846 = vst.msk [vmem:[%s433 + $0x88] sm:$0xff] %vm3901, %v4814
        %4847 = vst.msk [vmem:[%s433 + $0x90] sm:$0xff] %vm3901, %v4815
        %4848 = vst.msk [vmem:[%s433 + $0x98] sm:$0xff] %vm3901, %v4816
        %4849 = vst.msk [vmem:[%s433 + $0xa0] sm:$0xff] %vm3901, %v4817
        %4850 = vst.msk [vmem:[%s433 + $0xa8] sm:$0xff] %vm3901, %v4818
        %4851 = vst.msk [vmem:[%s433 + $0xb0] sm:$0xff] %vm3901, %v4819
        %4852 = vst.msk [vmem:[%s433 + $0xb8] sm:$0xff] %vm3901, %v4820
        %4853 = vst.msk [vmem:[%s433 + $0xc0] sm:$0xff] %vm3901, %v4821
        %4854 = vst.msk [vmem:[%s433 + $0xc8] sm:$0xff] %vm3901, %v4822
        %4855 = vst.msk [vmem:[%s433 + $0xd0] sm:$0xff] %vm3901, %v4823
        %4856 = vst.msk [vmem:[%s433 + $0xd8] sm:$0xff] %vm3901, %v4824
        %4857 = vst.msk [vmem:[%s433 + $0xe0] sm:$0xff] %vm3901, %v4825
        %4858 = vst.msk [vmem:[%s433 + $0xe8] sm:$0xff] %vm3901, %v4826
        %4859 = vst.msk [vmem:[%s433 + $0xf0] sm:$0xff] %vm3901, %v4827
        %4860 = vst.msk [vmem:[%s433 + $0xf8] sm:$0xff] %vm3901, %v4828
        %s4861 = sand.u32 %s313, 1
        %s4862 = scalar_lea.sflag [#allocation5], %s4861
        %s4863 = sand.u32 %s313, 1
        %s4864 = smul.addr %s4863, 256
        %s4865 = scalar_lea.vmem [#allocation4], %s4864
        // Predicated region
        $region73: #{tpu_custom_call.1} parent=71 // pred_check
          %p4866 = pneg %p323
        $region74: #{tpu_custom_call.1} parent=71 // pred_check_branch
          %4868 = sbr.rel (%p4866) target = $region76
        $region75: #{tpu_custom_call.1} parent=71 // pred_region
          %s4870 = ssub.s32 4096, 4096
          %4871 = vsyncadd %s4862, %s4870
          %s4872 = smul.addr %s27, 32
          %s4873 = smul.addr %s4872, 128
          %s4874 = scalar_lea.hbm %s13, %s4873
          %s4875 = sshll.u32 %s4865, 4
          %s4876 = int_to_ptr.vmem [resolvable:$true] %s4875
          %4881 = dma.vmem_to_hbm [thread:$0]  %s4876, 4096, %s4874, %s4862, 128, 128, 8
        $region76: #{tpu_custom_call.1} parent=71 // pred_fallthru
          _
      $region72: #{tpu_custom_call.1} parent=5 // pred_fallthru
        _
      %p4882 = scmp.le.s32.totalorder 2, %s22
      // Predicated region
      $region77: #{tpu_custom_call.1} parent=5 // pred_check
        %p4883 = pneg %p4882
      $region78: #{tpu_custom_call.1} parent=5 // pred_check_branch
        %4885 = sbr.rel (%p4883) target = $region80
      $region79: #{tpu_custom_call.1} parent=5 // pred_region
        %s4886 = ssub.s32 %s22, 2
        // Predicated region
        $region81: #{tpu_custom_call.1} parent=79 // pred_check
          %p4887 = pneg %p329
        $region82: #{tpu_custom_call.1} parent=79 // pred_check_branch
          %4889 = sbr.rel (%p4887) target = $region84
        $region83: #{tpu_custom_call.1} parent=79 // pred_region
          %s4890 = sand.u32 %s314, 1
          %s4891 = scalar_lea.sflag [#allocation5], %s4890
          %s4892 = sand.u32 %s314, 1
          %s4893 = smul.addr %s4892, 256
          %s4894 = scalar_lea.vmem [#allocation4], %s4893
          %4895 = dma.done %s4891, 4096
        $region84: #{tpu_custom_call.1} parent=79 // pred_fallthru
          _
      $region80: #{tpu_custom_call.1} parent=5 // pred_fallthru
        _
    $region6: #{tpu_custom_call.1} parent=1 // loop_footer
      %s26 = sadd.s32 1, %s22
    $region7: #{tpu_custom_call.1} parent=1 // loop_footer_branch
      %21 = sbr.rel target = $region3
    $region8: #{tpu_custom_call.1} parent=1 // loop_exit
      _
    %4896 = vsyncpa [#allocation5], 1
    %s4897 = scalar_lea.sflag [#allocation5], 1
    %4898 = vsyncpa %s4897, 1

</llo_original>
